<compile_context>
chip_gen: v6e
topology: v6e:2x2x1
jax: 0.10.0
libtpu: 0.0.40
codegen_flags: <defaults>
</compile_context>

<pallas_src>
import functools

import jax
import jax.numpy as jnp
from jax.experimental import pallas as pl
from jax.experimental.pallas import tpu as pltpu

C1P = 128    # conv1 out channels padded 6  -> 128 (lane-dense MXU output)
C2P = 128    # conv2 out channels padded 16 -> 128
F1P = 128    # fc1 out features padded 120  -> 128
F2P = 128    # logits padded num_classes    -> 128
K1P = 32     # conv1 im2col taps padded 25  -> 32 (contraction lanes)
K2P = 40     # conv2 contraction: 5 kw-groups x 8 channel lanes (6 real)


# ---------------------------------------------------------------------------
# Fused LeNet5 kernel (one batch tile per grid step; everything stays in VMEM)
# ---------------------------------------------------------------------------
def _lenet5_kernel(x_ref, w1_ref, b1_ref, w2_ref, b2_ref,
                   fc1w_ref, fc1b_ref, fc2w_ref, fc2b_ref,
                   out_ref, p1_scr, *, bm):
    f32, bf16 = jnp.float32, jnp.bfloat16

    # ---- conv1: single (bm*576, 32) @ (32, 128) bf16 matmul ----------------
    acc1 = jnp.dot(x_ref[...], w1_ref[...], preferred_element_type=f32)
    acc1 = acc1 + b1_ref[...]                                  # (bm*576, 128)

    # ---- pool1 (2x2 max) + relu --------------------------------------------
    # Rows are ordered (b, h, s) with s = parity*12 + w//2 (wrapper reorder),
    # so both pooling reductions are leading-dim / contiguous-slab maxes.
    y = acc1.reshape(bm, 12, 2, 24, C1P)                       # (b, h2, hp, s, c)
    yh = jnp.maximum(y[:, :, 0], y[:, :, 1])                   # (bm, 12, 24, 128)
    yw = jnp.maximum(yh[:, :, :12, :], yh[:, :, 12:, :])       # (bm, 12, 12, 128)
    yw = jnp.maximum(yw, 0.0)                                  # relu(pool(conv1))

    # ---- pack conv2's 5 kw taps into the contraction lanes -----------------
    # p1_scr[b, h, wo, kw*8 + c] = yw[b, h, wo + kw, c]   (c < 8; 6..7 are zero)
    for kw in range(5):
        p1_scr[:, :, :, kw * 8:(kw + 1) * 8] = yw[:, :, kw:kw + 8, 0:8]

    # ---- conv2: 5 kh taps of (bm*64, 40) @ (40, 128), bf16 x bf16 -> f32 ----
    acc2 = jnp.zeros((bm * 64, C2P), f32)
    for kh in range(5):
        lhs = p1_scr[:, kh:kh + 8, :, :].reshape(bm * 64, K2P).astype(bf16)
        acc2 = acc2 + jnp.dot(lhs, w2_ref[kh], preferred_element_type=f32)
    acc2 = acc2 + b2_ref[...]                                  # (bm*64, 128)

    # ---- pool2 (2x2 max) + relu, packed lane-dense for fc1 ------------------
    y2 = acc2.reshape(bm, 4, 2, 8, C2P)                        # (b, h2, hp, wo, c)
    y2h = jnp.maximum(y2[:, :, 0], y2[:, :, 1])                # (bm, 4, 8, 128)
    cols = [jnp.maximum(y2h[:, h, 2 * q, :], y2h[:, h, 2 * q + 1, :])
            for h in range(4) for q in range(4)]               # 16 x (bm, 128)
    p2 = jnp.maximum(jnp.concatenate(cols, axis=-1), 0.0)      # (bm, 2048)
    p2 = p2.astype(bf16)

    # ---- fc1 (+relu): one (bm, 2048) @ (2048, 128) dot ----------------------
    a1 = jnp.dot(p2, fc1w_ref[...], preferred_element_type=f32) + fc1b_ref[...]
    a1 = jnp.maximum(a1, 0.0)

    # ---- fc2 -----------------------------------------------------------------
    logits = jnp.dot(a1.astype(bf16), fc2w_ref[...], preferred_element_type=f32)
    out_ref[...] = logits + fc2b_ref[...]


# ---------------------------------------------------------------------------
# Parameter preparation (constant-folded layout glue, runs once under jit)
# ---------------------------------------------------------------------------
def _prep_params(params, num_classes):
    f32, bf16 = jnp.float32, jnp.bfloat16

    # conv1 (6,1,5,5) -> (32, 128): row = kh*5 + kw, col = cout.  bf16.
    w1t = jnp.transpose(params["conv1_w"][:, 0], (1, 2, 0)).reshape(25, 6)
    w1k = jnp.zeros((K1P, C1P), f32).at[:25, :6].set(w1t).astype(bf16)
    b1 = jnp.zeros((1, C1P), f32).at[0, :6].set(params["conv1_b"])

    # conv2 (16,6,5,5) -> (5, 40, 128): [kh, kw*8 + cin, cout].  bf16.
    w2t = jnp.transpose(params["conv2_w"], (2, 3, 1, 0))            # (kh,kw,ci,co)
    w2k = jnp.zeros((5, 5, 8, C2P), f32).at[:, :, :6, :16].set(w2t)
    w2k = w2k.reshape(5, K2P, C2P).astype(bf16)
    b2 = jnp.zeros((1, C2P), f32).at[0, :16].set(params["conv2_b"])

    # fc1 (120, 256), torch flatten order c*16 + h*4 + w
    #   -> (2048, 128): row = (h*4 + w)*128 + c (NHWC-padded flatten).  bf16.
    fw1 = params["fc1_w"].reshape(120, 16, 4, 4)                    # (f, c, h, w)
    fw1 = jnp.transpose(fw1, (2, 3, 1, 0))                          # (h, w, c, f)
    fc1k = jnp.zeros((4, 4, C2P, F1P), f32).at[:, :, :16, :120].set(fw1)
    fc1k = fc1k.reshape(4 * 4 * C2P, F1P).astype(bf16)
    fb1 = jnp.zeros((1, F1P), f32).at[0, :120].set(params["fc1_b"])

    # fc2 (num_classes, 120) -> (128, 128).  bf16.
    fc2k = (jnp.zeros((F1P, F2P), f32)
            .at[:120, :num_classes].set(params["fc2_w"].T).astype(bf16))
    fb2 = jnp.zeros((1, F2P), f32).at[0, :num_classes].set(params["fc2_b"])

    return (w1k, b1, w2k, b2, fc1k, fb1, fc2k, fb2)


def _prep_input(x_nchw):
    """(N,1,28,28) -> (N*576, 32) bf16 full im2col for conv1.

    Row order is (b, out_h, s) with s = parity*12 + out_w//2, i.e. even output
    columns first then odd ones, so the in-kernel 2x2 pools only need
    leading-dim / contiguous-slab maxes.  Lane dim = kh*5 + kw (25 real, pad 32).
    """
    n = x_nchw.shape[0]
    x = x_nchw[:, 0].astype(jnp.float32)                            # (N, 28, 28)
    taps = [x[:, kh:kh + 24, kw:kw + 24] for kh in range(5) for kw in range(5)]
    xim = jnp.stack(taps, axis=-1)                                  # (N,24,24,25)
    # reorder output-width axis: w = 2q + p  ->  s = p*12 + q
    xim = xim.reshape(n, 24, 12, 2, 25).transpose(0, 1, 3, 2, 4)
    xim = xim.reshape(n, 24, 24, 25)
    xim = jnp.pad(xim, ((0, 0), (0, 0), (0, 0), (0, K1P - 25)))
    return xim.reshape(n * 576, K1P).astype(jnp.bfloat16)


def _full_spec(shape):
    zeros = (0,) * len(shape)
    return pl.BlockSpec(shape, lambda m: zeros)


# ---------------------------------------------------------------------------
# Forward
# ---------------------------------------------------------------------------
def lenet5_forward(x_nchw, params, num_classes=10, block_batch=32,
                   vmem_limit_bytes=48 * 1024 * 1024):
    # block_batch=32 / 48 MiB is safe on v5e/v6e/v7x; on v5e/v6e use
    # block_batch=64..128 with vmem_limit_bytes ~96 MiB for higher MXU usage.
    assert num_classes <= F2P
    n = x_nchw.shape[0]
    bm = min(block_batch, n)
    npad = ((n + bm - 1) // bm) * bm

    x_im = _prep_input(x_nchw)                                      # (n*576, 32)
    if npad != n:
        x_im = jnp.pad(x_im, ((0, (npad - n) * 576), (0, 0)))
    wargs = _prep_params(params, num_classes)

    kern = functools.partial(_lenet5_kernel, bm=bm)
    out = pl.pallas_call(
        kern,
        out_shape=jax.ShapeDtypeStruct((npad, F2P), jnp.float32),
        grid=(npad // bm,),
        in_specs=[
            pl.BlockSpec((bm * 576, K1P), lambda m: (m, 0)),   # conv1 im2col
            _full_spec((K1P, C1P)),                            # conv1 weights
            _full_spec((1, C1P)),                              # conv1 bias
            _full_spec((5, K2P, C2P)),                         # conv2 weights
            _full_spec((1, C2P)),                              # conv2 bias
            _full_spec((4 * 4 * C2P, F1P)),                    # fc1 weights
            _full_spec((1, F1P)),                              # fc1 bias
            _full_spec((F1P, F2P)),                            # fc2 weights
            _full_spec((1, F2P)),                              # fc2 bias
        ],
        out_specs=pl.BlockSpec((bm, F2P), lambda m: (m, 0)),
        scratch_shapes=[
            pltpu.VMEM((bm, 12, 8, K2P), jnp.float32),   # kw-packed pooled conv1
        ],
        compiler_params=pltpu.CompilerParams(
            dimension_semantics=("parallel",),
            vmem_limit_bytes=vmem_limit_bytes,
        ),
    )(x_im, *wargs)
    return out[:n, :num_classes]


# ---------------------------------------------------------------------------
# Pure-JAX reference (matches the PyTorch forward exactly, f32)
# ---------------------------------------------------------------------------
def _pool2x2_nchw(y):
    nb, c, h, w = y.shape
    return y.reshape(nb, c, h // 2, 2, w // 2, 2).max(axis=(3, 5))


def lenet5_reference(x_nchw, params):
    dn = ("NCHW", "OIHW", "NCHW")
    y = jax.lax.conv_general_dilated(x_nchw, params["conv1_w"], (1, 1), "VALID",
                                     dimension_numbers=dn)
    y = y + params["conv1_b"][None, :, None, None]
    y = jnp.maximum(_pool2x2_nchw(y), 0.0)
    y = jax.lax.conv_general_dilated(y, params["conv2_w"], (1, 1), "VALID",
                                     dimension_numbers=dn)
    y = y + params["conv2_b"][None, :, None, None]
    y = jnp.maximum(_pool2x2_nchw(y), 0.0)
    y = y.reshape(y.shape[0], -1)                    # NCHW flatten == torch view
    y = jnp.maximum(y @ params["fc1_w"].T + params["fc1_b"], 0.0)
    return y @ params["fc2_w"].T + params["fc2_b"]


def init_params(key, num_classes=10):
    k = jax.random.split(key, 4)
    scale = 0.1
    return {
        "conv1_w": scale * jax.random.normal(k[0], (6, 1, 5, 5), jnp.float32),
        "conv1_b": jnp.zeros((6,), jnp.float32),
        "conv2_w": scale * jax.random.normal(k[1], (16, 6, 5, 5), jnp.float32),
        "conv2_b": jnp.zeros((16,), jnp.float32),
        "fc1_w": scale * jax.random.normal(k[2], (120, 4 * 4 * 16), jnp.float32),
        "fc1_b": jnp.zeros((120,), jnp.float32),
        "fc2_w": scale * jax.random.normal(k[3], (num_classes, 120), jnp.float32),
        "fc2_b": jnp.zeros((num_classes,), jnp.float32),
    }


if __name__ == "__main__":
    num_classes = 10
    key = jax.random.PRNGKey(0)
    pkey, xkey = jax.random.split(key)
    params = init_params(pkey, num_classes)

    # LeNet5's 4*4*16 flatten implies a 28x28 single-channel input.
    x = jax.random.normal(xkey, (2, 1, 28, 28), jnp.float32)

    fwd = jax.jit(lambda inp: lenet5_forward(inp, params, num_classes))
    out = fwd(x)
    jax.block_until_ready(out)

    assert out.shape == (2, num_classes), out.shape
    assert out.dtype == jnp.float32

    ref = lenet5_reference(x, params)
    assert bool(jnp.allclose(out, ref, rtol=5e-2, atol=2.5e-1)), (
        "mismatch vs reference: max abs err = "
        f"{float(jnp.max(jnp.abs(out - ref)))}")

    print("KERNEL_OK")
</pallas_src>

<mosaic_0001>
module attributes {stable_mosaic.version = 11 : i64} {
  func.func @_lenet5_kernel(%arg0: i32, %arg1: memref<1152x32xbf16, #tpu.memory_space<vmem>>, %arg2: memref<32x128xbf16, #tpu.memory_space<vmem>>, %arg3: memref<1x128xf32, #tpu.memory_space<vmem>>, %arg4: memref<5x40x128xbf16, #tpu.memory_space<vmem>>, %arg5: memref<1x128xf32, #tpu.memory_space<vmem>>, %arg6: memref<2048x128xbf16, #tpu.memory_space<vmem>>, %arg7: memref<1x128xf32, #tpu.memory_space<vmem>>, %arg8: memref<128x128xbf16, #tpu.memory_space<vmem>>, %arg9: memref<1x128xf32, #tpu.memory_space<vmem>>, %arg10: memref<2x128xf32, #tpu.memory_space<vmem>>, %arg11: memref<2x12x8x40xf32, #tpu.memory_space<vmem>>) attributes {dimension_semantics = [#tpu.dimension_semantics<parallel>], iteration_bounds = array<i64: 1>, scalar_prefetch = 0 : i64, scratch_operands = 1 : i64, tpu.core_type = #tpu.core_type<tc>, window_params = [{transform_indices = @transform_0, window_bounds = array<i64: 1152, 32>}, {pipeline_mode = #tpu.pipeline_mode<synchronous>, transform_indices = @transform_1, window_bounds = array<i64: 32, 128>}, {pipeline_mode = #tpu.pipeline_mode<synchronous>, transform_indices = @transform_2, window_bounds = array<i64: 1, 128>}, {pipeline_mode = #tpu.pipeline_mode<synchronous>, transform_indices = @transform_3, window_bounds = array<i64: 5, 40, 128>}, {pipeline_mode = #tpu.pipeline_mode<synchronous>, transform_indices = @transform_4, window_bounds = array<i64: 1, 128>}, {pipeline_mode = #tpu.pipeline_mode<synchronous>, transform_indices = @transform_5, window_bounds = array<i64: 2048, 128>}, {pipeline_mode = #tpu.pipeline_mode<synchronous>, transform_indices = @transform_6, window_bounds = array<i64: 1, 128>}, {pipeline_mode = #tpu.pipeline_mode<synchronous>, transform_indices = @transform_7, window_bounds = array<i64: 128, 128>}, {pipeline_mode = #tpu.pipeline_mode<synchronous>, transform_indices = @transform_8, window_bounds = array<i64: 1, 128>}, {transform_indices = @transform_9, window_bounds = array<i64: 2, 128>}]} {
    %c0 = arith.constant 0 : index
    %c0_0 = arith.constant 0 : index
    %0 = vector.load %arg1[%c0, %c0_0] : memref<1152x32xbf16, #tpu.memory_space<vmem>>, vector<1152x32xbf16>
    %c0_1 = arith.constant 0 : index
    %c0_2 = arith.constant 0 : index
    %1 = vector.load %arg2[%c0_1, %c0_2] : memref<32x128xbf16, #tpu.memory_space<vmem>>, vector<32x128xbf16>
    %cst = arith.constant dense<0.000000e+00> : vector<1152x128xf32>
    %2 = tpu.matmul %0, %1, %cst {dimension_numbers = #tpu.dot_dimension_numbers<[1], [0], [0], [1], [0, 0, 1, 1], [], []>} : vector<1152x32xbf16>, vector<32x128xbf16>, vector<1152x128xf32> -> vector<1152x128xf32>
    %c0_3 = arith.constant 0 : index
    %c0_4 = arith.constant 0 : index
    %3 = vector.load %arg3[%c0_3, %c0_4] : memref<1x128xf32, #tpu.memory_space<vmem>>, vector<1x128xf32>
    %4 = vector.broadcast %3 : vector<1x128xf32> to vector<1152x128xf32>
    %5 = arith.addf %2, %4 : vector<1152x128xf32>
    %6 = vector.shape_cast %5 : vector<1152x128xf32> to vector<2x12x2x24x128xf32>
    %7 = vector.extract_strided_slice %6 {offsets = [0, 0, 0, 0, 0], sizes = [2, 12, 1, 24, 128], strides = [1, 1, 1, 1, 1]} : vector<2x12x2x24x128xf32> to vector<2x12x1x24x128xf32>
    %8 = vector.shape_cast %7 : vector<2x12x1x24x128xf32> to vector<2x12x24x128xf32>
    %9 = vector.extract_strided_slice %6 {offsets = [0, 0, 1, 0, 0], sizes = [2, 12, 1, 24, 128], strides = [1, 1, 1, 1, 1]} : vector<2x12x2x24x128xf32> to vector<2x12x1x24x128xf32>
    %10 = vector.shape_cast %9 : vector<2x12x1x24x128xf32> to vector<2x12x24x128xf32>
    %11 = arith.maximumf %8, %10 : vector<2x12x24x128xf32>
    %12 = vector.extract_strided_slice %11 {offsets = [0, 0, 0, 0], sizes = [2, 12, 12, 128], strides = [1, 1, 1, 1]} : vector<2x12x24x128xf32> to vector<2x12x12x128xf32>
    %13 = vector.extract_strided_slice %11 {offsets = [0, 0, 12, 0], sizes = [2, 12, 12, 128], strides = [1, 1, 1, 1]} : vector<2x12x24x128xf32> to vector<2x12x12x128xf32>
    %14 = arith.maximumf %12, %13 : vector<2x12x12x128xf32>
    %cst_5 = arith.constant 0.000000e+00 : f32
    %15 = vector.broadcast %cst_5 : f32 to vector<2x12x12x128xf32>
    %16 = arith.maximumf %14, %15 : vector<2x12x12x128xf32>
    %17 = vector.extract_strided_slice %16 {offsets = [0, 0, 0, 0], sizes = [2, 12, 8, 8], strides = [1, 1, 1, 1]} : vector<2x12x12x128xf32> to vector<2x12x8x8xf32>
    %c0_6 = arith.constant 0 : index
    %c0_7 = arith.constant 0 : index
    %c0_8 = arith.constant 0 : index
    %c0_9 = arith.constant 0 : index
    %18 = vector.load %arg11[%c0_6, %c0_7, %c0_8, %c0_9] : memref<2x12x8x40xf32, #tpu.memory_space<vmem>>, vector<2x12x8x8xf32>
    tpu.vector_store %arg11[%c0_6, %c0_7, %c0_8, %c0_9], %17 {strides = array<i32>} : memref<2x12x8x40xf32, #tpu.memory_space<vmem>>, vector<2x12x8x8xf32>,
    %19 = vector.extract_strided_slice %16 {offsets = [0, 0, 1, 0], sizes = [2, 12, 8, 8], strides = [1, 1, 1, 1]} : vector<2x12x12x128xf32> to vector<2x12x8x8xf32>
    %c0_10 = arith.constant 0 : index
    %c0_11 = arith.constant 0 : index
    %c0_12 = arith.constant 0 : index
    %c8 = arith.constant 8 : index
    %20 = vector.load %arg11[%c0_10, %c0_11, %c0_12, %c8] : memref<2x12x8x40xf32, #tpu.memory_space<vmem>>, vector<2x12x8x8xf32>
    tpu.vector_store %arg11[%c0_10, %c0_11, %c0_12, %c8], %19 {strides = array<i32>} : memref<2x12x8x40xf32, #tpu.memory_space<vmem>>, vector<2x12x8x8xf32>,
    %21 = vector.extract_strided_slice %16 {offsets = [0, 0, 2, 0], sizes = [2, 12, 8, 8], strides = [1, 1, 1, 1]} : vector<2x12x12x128xf32> to vector<2x12x8x8xf32>
    %c0_13 = arith.constant 0 : index
    %c0_14 = arith.constant 0 : index
    %c0_15 = arith.constant 0 : index
    %c16 = arith.constant 16 : index
    %22 = vector.load %arg11[%c0_13, %c0_14, %c0_15, %c16] : memref<2x12x8x40xf32, #tpu.memory_space<vmem>>, vector<2x12x8x8xf32>
    tpu.vector_store %arg11[%c0_13, %c0_14, %c0_15, %c16], %21 {strides = array<i32>} : memref<2x12x8x40xf32, #tpu.memory_space<vmem>>, vector<2x12x8x8xf32>,
    %23 = vector.extract_strided_slice %16 {offsets = [0, 0, 3, 0], sizes = [2, 12, 8, 8], strides = [1, 1, 1, 1]} : vector<2x12x12x128xf32> to vector<2x12x8x8xf32>
    %c0_16 = arith.constant 0 : index
    %c0_17 = arith.constant 0 : index
    %c0_18 = arith.constant 0 : index
    %c24 = arith.constant 24 : index
    %24 = vector.load %arg11[%c0_16, %c0_17, %c0_18, %c24] : memref<2x12x8x40xf32, #tpu.memory_space<vmem>>, vector<2x12x8x8xf32>
    tpu.vector_store %arg11[%c0_16, %c0_17, %c0_18, %c24], %23 {strides = array<i32>} : memref<2x12x8x40xf32, #tpu.memory_space<vmem>>, vector<2x12x8x8xf32>,
    %25 = vector.extract_strided_slice %16 {offsets = [0, 0, 4, 0], sizes = [2, 12, 8, 8], strides = [1, 1, 1, 1]} : vector<2x12x12x128xf32> to vector<2x12x8x8xf32>
    %c0_19 = arith.constant 0 : index
    %c0_20 = arith.constant 0 : index
    %c0_21 = arith.constant 0 : index
    %c32 = arith.constant 32 : index
    %26 = vector.load %arg11[%c0_19, %c0_20, %c0_21, %c32] : memref<2x12x8x40xf32, #tpu.memory_space<vmem>>, vector<2x12x8x8xf32>
    tpu.vector_store %arg11[%c0_19, %c0_20, %c0_21, %c32], %25 {strides = array<i32>} : memref<2x12x8x40xf32, #tpu.memory_space<vmem>>, vector<2x12x8x8xf32>,
    %cst_22 = arith.constant 0.000000e+00 : f32
    %27 = vector.broadcast %cst_22 : f32 to vector<128x128xf32>
    %c0_23 = arith.constant 0 : index
    %c0_24 = arith.constant 0 : index
    %c0_25 = arith.constant 0 : index
    %c0_26 = arith.constant 0 : index
    %28 = vector.load %arg11[%c0_23, %c0_24, %c0_25, %c0_26] : memref<2x12x8x40xf32, #tpu.memory_space<vmem>>, vector<2x8x8x40xf32>
    %29 = vector.shape_cast %28 : vector<2x8x8x40xf32> to vector<128x40xf32>
    %30 = arith.truncf %29 : vector<128x40xf32> to vector<128x40xbf16>
    %c0_27 = arith.constant 0 : index
    %c0_28 = arith.constant 0 : index
    %c0_29 = arith.constant 0 : index
    %31 = vector.load %arg4[%c0_27, %c0_28, %c0_29] : memref<5x40x128xbf16, #tpu.memory_space<vmem>>, vector<1x40x128xbf16>
    %32 = vector.shape_cast %31 : vector<1x40x128xbf16> to vector<40x128xbf16>
    %cst_30 = arith.constant dense<0.000000e+00> : vector<128x128xf32>
    %33 = tpu.matmul %30, %32, %cst_30 {dimension_numbers = #tpu.dot_dimension_numbers<[1], [0], [0], [1], [0, 0, 1, 1], [], []>} : vector<128x40xbf16>, vector<40x128xbf16>, vector<128x128xf32> -> vector<128x128xf32>
    %34 = arith.addf %27, %33 : vector<128x128xf32>
    %c0_31 = arith.constant 0 : index
    %c1 = arith.constant 1 : index
    %c0_32 = arith.constant 0 : index
    %c0_33 = arith.constant 0 : index
    %35 = vector.load %arg11[%c0_31, %c1, %c0_32, %c0_33] : memref<2x12x8x40xf32, #tpu.memory_space<vmem>>, vector<2x8x8x40xf32>
    %36 = vector.shape_cast %35 : vector<2x8x8x40xf32> to vector<128x40xf32>
    %37 = arith.truncf %36 : vector<128x40xf32> to vector<128x40xbf16>
    %c1_34 = arith.constant 1 : index
    %c0_35 = arith.constant 0 : index
    %c0_36 = arith.constant 0 : index
    %38 = vector.load %arg4[%c1_34, %c0_35, %c0_36] : memref<5x40x128xbf16, #tpu.memory_space<vmem>>, vector<1x40x128xbf16>
    %39 = vector.shape_cast %38 : vector<1x40x128xbf16> to vector<40x128xbf16>
    %cst_37 = arith.constant dense<0.000000e+00> : vector<128x128xf32>
    %40 = tpu.matmul %37, %39, %cst_37 {dimension_numbers = #tpu.dot_dimension_numbers<[1], [0], [0], [1], [0, 0, 1, 1], [], []>} : vector<128x40xbf16>, vector<40x128xbf16>, vector<128x128xf32> -> vector<128x128xf32>
    %41 = arith.addf %34, %40 : vector<128x128xf32>
    %c0_38 = arith.constant 0 : index
    %c2 = arith.constant 2 : index
    %c0_39 = arith.constant 0 : index
    %c0_40 = arith.constant 0 : index
    %42 = vector.load %arg11[%c0_38, %c2, %c0_39, %c0_40] : memref<2x12x8x40xf32, #tpu.memory_space<vmem>>, vector<2x8x8x40xf32>
    %43 = vector.shape_cast %42 : vector<2x8x8x40xf32> to vector<128x40xf32>
    %44 = arith.truncf %43 : vector<128x40xf32> to vector<128x40xbf16>
    %c2_41 = arith.constant 2 : index
    %c0_42 = arith.constant 0 : index
    %c0_43 = arith.constant 0 : index
    %45 = vector.load %arg4[%c2_41, %c0_42, %c0_43] : memref<5x40x128xbf16, #tpu.memory_space<vmem>>, vector<1x40x128xbf16>
    %46 = vector.shape_cast %45 : vector<1x40x128xbf16> to vector<40x128xbf16>
    %cst_44 = arith.constant dense<0.000000e+00> : vector<128x128xf32>
    %47 = tpu.matmul %44, %46, %cst_44 {dimension_numbers = #tpu.dot_dimension_numbers<[1], [0], [0], [1], [0, 0, 1, 1], [], []>} : vector<128x40xbf16>, vector<40x128xbf16>, vector<128x128xf32> -> vector<128x128xf32>
    %48 = arith.addf %41, %47 : vector<128x128xf32>
    %c0_45 = arith.constant 0 : index
    %c3 = arith.constant 3 : index
    %c0_46 = arith.constant 0 : index
    %c0_47 = arith.constant 0 : index
    %49 = vector.load %arg11[%c0_45, %c3, %c0_46, %c0_47] : memref<2x12x8x40xf32, #tpu.memory_space<vmem>>, vector<2x8x8x40xf32>
    %50 = vector.shape_cast %49 : vector<2x8x8x40xf32> to vector<128x40xf32>
    %51 = arith.truncf %50 : vector<128x40xf32> to vector<128x40xbf16>
    %c3_48 = arith.constant 3 : index
    %c0_49 = arith.constant 0 : index
    %c0_50 = arith.constant 0 : index
    %52 = vector.load %arg4[%c3_48, %c0_49, %c0_50] : memref<5x40x128xbf16, #tpu.memory_space<vmem>>, vector<1x40x128xbf16>
    %53 = vector.shape_cast %52 : vector<1x40x128xbf16> to vector<40x128xbf16>
    %cst_51 = arith.constant dense<0.000000e+00> : vector<128x128xf32>
    %54 = tpu.matmul %51, %53, %cst_51 {dimension_numbers = #tpu.dot_dimension_numbers<[1], [0], [0], [1], [0, 0, 1, 1], [], []>} : vector<128x40xbf16>, vector<40x128xbf16>, vector<128x128xf32> -> vector<128x128xf32>
    %55 = arith.addf %48, %54 : vector<128x128xf32>
    %c0_52 = arith.constant 0 : index
    %c4 = arith.constant 4 : index
    %c0_53 = arith.constant 0 : index
    %c0_54 = arith.constant 0 : index
    %56 = vector.load %arg11[%c0_52, %c4, %c0_53, %c0_54] : memref<2x12x8x40xf32, #tpu.memory_space<vmem>>, vector<2x8x8x40xf32>
    %57 = vector.shape_cast %56 : vector<2x8x8x40xf32> to vector<128x40xf32>
    %58 = arith.truncf %57 : vector<128x40xf32> to vector<128x40xbf16>
    %c4_55 = arith.constant 4 : index
    %c0_56 = arith.constant 0 : index
    %c0_57 = arith.constant 0 : index
    %59 = vector.load %arg4[%c4_55, %c0_56, %c0_57] : memref<5x40x128xbf16, #tpu.memory_space<vmem>>, vector<1x40x128xbf16>
    %60 = vector.shape_cast %59 : vector<1x40x128xbf16> to vector<40x128xbf16>
    %cst_58 = arith.constant dense<0.000000e+00> : vector<128x128xf32>
    %61 = tpu.matmul %58, %60, %cst_58 {dimension_numbers = #tpu.dot_dimension_numbers<[1], [0], [0], [1], [0, 0, 1, 1], [], []>} : vector<128x40xbf16>, vector<40x128xbf16>, vector<128x128xf32> -> vector<128x128xf32>
    %62 = arith.addf %55, %61 : vector<128x128xf32>
    %c0_59 = arith.constant 0 : index
    %c0_60 = arith.constant 0 : index
    %63 = vector.load %arg5[%c0_59, %c0_60] : memref<1x128xf32, #tpu.memory_space<vmem>>, vector<1x128xf32>
    %64 = vector.broadcast %63 : vector<1x128xf32> to vector<128x128xf32>
    %65 = arith.addf %62, %64 : vector<128x128xf32>
    %66 = vector.shape_cast %65 : vector<128x128xf32> to vector<2x4x2x8x128xf32>
    %67 = vector.extract_strided_slice %66 {offsets = [0, 0, 0, 0, 0], sizes = [2, 4, 1, 8, 128], strides = [1, 1, 1, 1, 1]} : vector<2x4x2x8x128xf32> to vector<2x4x1x8x128xf32>
    %68 = vector.shape_cast %67 : vector<2x4x1x8x128xf32> to vector<2x4x8x128xf32>
    %69 = vector.extract_strided_slice %66 {offsets = [0, 0, 1, 0, 0], sizes = [2, 4, 1, 8, 128], strides = [1, 1, 1, 1, 1]} : vector<2x4x2x8x128xf32> to vector<2x4x1x8x128xf32>
    %70 = vector.shape_cast %69 : vector<2x4x1x8x128xf32> to vector<2x4x8x128xf32>
    %71 = arith.maximumf %68, %70 : vector<2x4x8x128xf32>
    %72 = vector.extract_strided_slice %71 {offsets = [0, 0, 0, 0], sizes = [2, 1, 1, 128], strides = [1, 1, 1, 1]} : vector<2x4x8x128xf32> to vector<2x1x1x128xf32>
    %73 = vector.shape_cast %72 : vector<2x1x1x128xf32> to vector<2x128xf32>
    %74 = vector.extract_strided_slice %71 {offsets = [0, 0, 1, 0], sizes = [2, 1, 1, 128], strides = [1, 1, 1, 1]} : vector<2x4x8x128xf32> to vector<2x1x1x128xf32>
    %75 = vector.shape_cast %74 : vector<2x1x1x128xf32> to vector<2x128xf32>
    %76 = arith.maximumf %73, %75 : vector<2x128xf32>
    %77 = vector.extract_strided_slice %71 {offsets = [0, 0, 2, 0], sizes = [2, 1, 1, 128], strides = [1, 1, 1, 1]} : vector<2x4x8x128xf32> to vector<2x1x1x128xf32>
    %78 = vector.shape_cast %77 : vector<2x1x1x128xf32> to vector<2x128xf32>
    %79 = vector.extract_strided_slice %71 {offsets = [0, 0, 3, 0], sizes = [2, 1, 1, 128], strides = [1, 1, 1, 1]} : vector<2x4x8x128xf32> to vector<2x1x1x128xf32>
    %80 = vector.shape_cast %79 : vector<2x1x1x128xf32> to vector<2x128xf32>
    %81 = arith.maximumf %78, %80 : vector<2x128xf32>
    %82 = vector.extract_strided_slice %71 {offsets = [0, 0, 4, 0], sizes = [2, 1, 1, 128], strides = [1, 1, 1, 1]} : vector<2x4x8x128xf32> to vector<2x1x1x128xf32>
    %83 = vector.shape_cast %82 : vector<2x1x1x128xf32> to vector<2x128xf32>
    %84 = vector.extract_strided_slice %71 {offsets = [0, 0, 5, 0], sizes = [2, 1, 1, 128], strides = [1, 1, 1, 1]} : vector<2x4x8x128xf32> to vector<2x1x1x128xf32>
    %85 = vector.shape_cast %84 : vector<2x1x1x128xf32> to vector<2x128xf32>
    %86 = arith.maximumf %83, %85 : vector<2x128xf32>
    %87 = vector.extract_strided_slice %71 {offsets = [0, 0, 6, 0], sizes = [2, 1, 1, 128], strides = [1, 1, 1, 1]} : vector<2x4x8x128xf32> to vector<2x1x1x128xf32>
    %88 = vector.shape_cast %87 : vector<2x1x1x128xf32> to vector<2x128xf32>
    %89 = vector.extract_strided_slice %71 {offsets = [0, 0, 7, 0], sizes = [2, 1, 1, 128], strides = [1, 1, 1, 1]} : vector<2x4x8x128xf32> to vector<2x1x1x128xf32>
    %90 = vector.shape_cast %89 : vector<2x1x1x128xf32> to vector<2x128xf32>
    %91 = arith.maximumf %88, %90 : vector<2x128xf32>
    %92 = vector.extract_strided_slice %71 {offsets = [0, 1, 0, 0], sizes = [2, 1, 1, 128], strides = [1, 1, 1, 1]} : vector<2x4x8x128xf32> to vector<2x1x1x128xf32>
    %93 = vector.shape_cast %92 : vector<2x1x1x128xf32> to vector<2x128xf32>
    %94 = vector.extract_strided_slice %71 {offsets = [0, 1, 1, 0], sizes = [2, 1, 1, 128], strides = [1, 1, 1, 1]} : vector<2x4x8x128xf32> to vector<2x1x1x128xf32>
    %95 = vector.shape_cast %94 : vector<2x1x1x128xf32> to vector<2x128xf32>
    %96 = arith.maximumf %93, %95 : vector<2x128xf32>
    %97 = vector.extract_strided_slice %71 {offsets = [0, 1, 2, 0], sizes = [2, 1, 1, 128], strides = [1, 1, 1, 1]} : vector<2x4x8x128xf32> to vector<2x1x1x128xf32>
    %98 = vector.shape_cast %97 : vector<2x1x1x128xf32> to vector<2x128xf32>
    %99 = vector.extract_strided_slice %71 {offsets = [0, 1, 3, 0], sizes = [2, 1, 1, 128], strides = [1, 1, 1, 1]} : vector<2x4x8x128xf32> to vector<2x1x1x128xf32>
    %100 = vector.shape_cast %99 : vector<2x1x1x128xf32> to vector<2x128xf32>
    %101 = arith.maximumf %98, %100 : vector<2x128xf32>
    %102 = vector.extract_strided_slice %71 {offsets = [0, 1, 4, 0], sizes = [2, 1, 1, 128], strides = [1, 1, 1, 1]} : vector<2x4x8x128xf32> to vector<2x1x1x128xf32>
    %103 = vector.shape_cast %102 : vector<2x1x1x128xf32> to vector<2x128xf32>
    %104 = vector.extract_strided_slice %71 {offsets = [0, 1, 5, 0], sizes = [2, 1, 1, 128], strides = [1, 1, 1, 1]} : vector<2x4x8x128xf32> to vector<2x1x1x128xf32>
    %105 = vector.shape_cast %104 : vector<2x1x1x128xf32> to vector<2x128xf32>
    %106 = arith.maximumf %103, %105 : vector<2x128xf32>
    %107 = vector.extract_strided_slice %71 {offsets = [0, 1, 6, 0], sizes = [2, 1, 1, 128], strides = [1, 1, 1, 1]} : vector<2x4x8x128xf32> to vector<2x1x1x128xf32>
    %108 = vector.shape_cast %107 : vector<2x1x1x128xf32> to vector<2x128xf32>
    %109 = vector.extract_strided_slice %71 {offsets = [0, 1, 7, 0], sizes = [2, 1, 1, 128], strides = [1, 1, 1, 1]} : vector<2x4x8x128xf32> to vector<2x1x1x128xf32>
    %110 = vector.shape_cast %109 : vector<2x1x1x128xf32> to vector<2x128xf32>
    %111 = arith.maximumf %108, %110 : vector<2x128xf32>
    %112 = vector.extract_strided_slice %71 {offsets = [0, 2, 0, 0], sizes = [2, 1, 1, 128], strides = [1, 1, 1, 1]} : vector<2x4x8x128xf32> to vector<2x1x1x128xf32>
    %113 = vector.shape_cast %112 : vector<2x1x1x128xf32> to vector<2x128xf32>
    %114 = vector.extract_strided_slice %71 {offsets = [0, 2, 1, 0], sizes = [2, 1, 1, 128], strides = [1, 1, 1, 1]} : vector<2x4x8x128xf32> to vector<2x1x1x128xf32>
    %115 = vector.shape_cast %114 : vector<2x1x1x128xf32> to vector<2x128xf32>
    %116 = arith.maximumf %113, %115 : vector<2x128xf32>
    %117 = vector.extract_strided_slice %71 {offsets = [0, 2, 2, 0], sizes = [2, 1, 1, 128], strides = [1, 1, 1, 1]} : vector<2x4x8x128xf32> to vector<2x1x1x128xf32>
    %118 = vector.shape_cast %117 : vector<2x1x1x128xf32> to vector<2x128xf32>
    %119 = vector.extract_strided_slice %71 {offsets = [0, 2, 3, 0], sizes = [2, 1, 1, 128], strides = [1, 1, 1, 1]} : vector<2x4x8x128xf32> to vector<2x1x1x128xf32>
    %120 = vector.shape_cast %119 : vector<2x1x1x128xf32> to vector<2x128xf32>
    %121 = arith.maximumf %118, %120 : vector<2x128xf32>
    %122 = vector.extract_strided_slice %71 {offsets = [0, 2, 4, 0], sizes = [2, 1, 1, 128], strides = [1, 1, 1, 1]} : vector<2x4x8x128xf32> to vector<2x1x1x128xf32>
    %123 = vector.shape_cast %122 : vector<2x1x1x128xf32> to vector<2x128xf32>
    %124 = vector.extract_strided_slice %71 {offsets = [0, 2, 5, 0], sizes = [2, 1, 1, 128], strides = [1, 1, 1, 1]} : vector<2x4x8x128xf32> to vector<2x1x1x128xf32>
    %125 = vector.shape_cast %124 : vector<2x1x1x128xf32> to vector<2x128xf32>
    %126 = arith.maximumf %123, %125 : vector<2x128xf32>
    %127 = vector.extract_strided_slice %71 {offsets = [0, 2, 6, 0], sizes = [2, 1, 1, 128], strides = [1, 1, 1, 1]} : vector<2x4x8x128xf32> to vector<2x1x1x128xf32>
    %128 = vector.shape_cast %127 : vector<2x1x1x128xf32> to vector<2x128xf32>
    %129 = vector.extract_strided_slice %71 {offsets = [0, 2, 7, 0], sizes = [2, 1, 1, 128], strides = [1, 1, 1, 1]} : vector<2x4x8x128xf32> to vector<2x1x1x128xf32>
    %130 = vector.shape_cast %129 : vector<2x1x1x128xf32> to vector<2x128xf32>
    %131 = arith.maximumf %128, %130 : vector<2x128xf32>
    %132 = vector.extract_strided_slice %71 {offsets = [0, 3, 0, 0], sizes = [2, 1, 1, 128], strides = [1, 1, 1, 1]} : vector<2x4x8x128xf32> to vector<2x1x1x128xf32>
    %133 = vector.shape_cast %132 : vector<2x1x1x128xf32> to vector<2x128xf32>
    %134 = vector.extract_strided_slice %71 {offsets = [0, 3, 1, 0], sizes = [2, 1, 1, 128], strides = [1, 1, 1, 1]} : vector<2x4x8x128xf32> to vector<2x1x1x128xf32>
    %135 = vector.shape_cast %134 : vector<2x1x1x128xf32> to vector<2x128xf32>
    %136 = arith.maximumf %133, %135 : vector<2x128xf32>
    %137 = vector.extract_strided_slice %71 {offsets = [0, 3, 2, 0], sizes = [2, 1, 1, 128], strides = [1, 1, 1, 1]} : vector<2x4x8x128xf32> to vector<2x1x1x128xf32>
    %138 = vector.shape_cast %137 : vector<2x1x1x128xf32> to vector<2x128xf32>
    %139 = vector.extract_strided_slice %71 {offsets = [0, 3, 3, 0], sizes = [2, 1, 1, 128], strides = [1, 1, 1, 1]} : vector<2x4x8x128xf32> to vector<2x1x1x128xf32>
    %140 = vector.shape_cast %139 : vector<2x1x1x128xf32> to vector<2x128xf32>
    %141 = arith.maximumf %138, %140 : vector<2x128xf32>
    %142 = vector.extract_strided_slice %71 {offsets = [0, 3, 4, 0], sizes = [2, 1, 1, 128], strides = [1, 1, 1, 1]} : vector<2x4x8x128xf32> to vector<2x1x1x128xf32>
    %143 = vector.shape_cast %142 : vector<2x1x1x128xf32> to vector<2x128xf32>
    %144 = vector.extract_strided_slice %71 {offsets = [0, 3, 5, 0], sizes = [2, 1, 1, 128], strides = [1, 1, 1, 1]} : vector<2x4x8x128xf32> to vector<2x1x1x128xf32>
    %145 = vector.shape_cast %144 : vector<2x1x1x128xf32> to vector<2x128xf32>
    %146 = arith.maximumf %143, %145 : vector<2x128xf32>
    %147 = vector.extract_strided_slice %71 {offsets = [0, 3, 6, 0], sizes = [2, 1, 1, 128], strides = [1, 1, 1, 1]} : vector<2x4x8x128xf32> to vector<2x1x1x128xf32>
    %148 = vector.shape_cast %147 : vector<2x1x1x128xf32> to vector<2x128xf32>
    %149 = vector.extract_strided_slice %71 {offsets = [0, 3, 7, 0], sizes = [2, 1, 1, 128], strides = [1, 1, 1, 1]} : vector<2x4x8x128xf32> to vector<2x1x1x128xf32>
    %150 = vector.shape_cast %149 : vector<2x1x1x128xf32> to vector<2x128xf32>
    %151 = arith.maximumf %148, %150 : vector<2x128xf32>
    %152 = tpu.concatenate %76, %81, %86, %91, %96, %101, %106, %111, %116, %121, %126, %131, %136, %141, %146, %151 in 1 : vector<2x128xf32>, vector<2x128xf32>, vector<2x128xf32>, vector<2x128xf32>, vector<2x128xf32>, vector<2x128xf32>, vector<2x128xf32>, vector<2x128xf32>, vector<2x128xf32>, vector<2x128xf32>, vector<2x128xf32>, vector<2x128xf32>, vector<2x128xf32>, vector<2x128xf32>, vector<2x128xf32>, vector<2x128xf32> -> vector<2x2048xf32>
    %cst_61 = arith.constant 0.000000e+00 : f32
    %153 = vector.broadcast %cst_61 : f32 to vector<2x2048xf32>
    %154 = arith.maximumf %152, %153 : vector<2x2048xf32>
    %155 = arith.truncf %154 : vector<2x2048xf32> to vector<2x2048xbf16>
    %c0_62 = arith.constant 0 : index
    %c0_63 = arith.constant 0 : index
    %156 = vector.load %arg6[%c0_62, %c0_63] : memref<2048x128xbf16, #tpu.memory_space<vmem>>, vector<2048x128xbf16>
    %cst_64 = arith.constant dense<0.000000e+00> : vector<2x128xf32>
    %157 = tpu.matmul %155, %156, %cst_64 {dimension_numbers = #tpu.dot_dimension_numbers<[1], [0], [0], [1], [0, 0, 1, 1], [], []>} : vector<2x2048xbf16>, vector<2048x128xbf16>, vector<2x128xf32> -> vector<2x128xf32>
    %c0_65 = arith.constant 0 : index
    %c0_66 = arith.constant 0 : index
    %158 = vector.load %arg7[%c0_65, %c0_66] : memref<1x128xf32, #tpu.memory_space<vmem>>, vector<1x128xf32>
    %159 = vector.broadcast %158 : vector<1x128xf32> to vector<2x128xf32>
    %160 = arith.addf %157, %159 : vector<2x128xf32>
    %cst_67 = arith.constant 0.000000e+00 : f32
    %161 = vector.broadcast %cst_67 : f32 to vector<2x128xf32>
    %162 = arith.maximumf %160, %161 : vector<2x128xf32>
    %163 = arith.truncf %162 : vector<2x128xf32> to vector<2x128xbf16>
    %c0_68 = arith.constant 0 : index
    %c0_69 = arith.constant 0 : index
    %164 = vector.load %arg8[%c0_68, %c0_69] : memref<128x128xbf16, #tpu.memory_space<vmem>>, vector<128x128xbf16>
    %cst_70 = arith.constant dense<0.000000e+00> : vector<2x128xf32>
    %165 = tpu.matmul %163, %164, %cst_70 {dimension_numbers = #tpu.dot_dimension_numbers<[1], [0], [0], [1], [0, 0, 1, 1], [], []>} : vector<2x128xbf16>, vector<128x128xbf16>, vector<2x128xf32> -> vector<2x128xf32>
    %c0_71 = arith.constant 0 : index
    %c0_72 = arith.constant 0 : index
    %166 = vector.load %arg9[%c0_71, %c0_72] : memref<1x128xf32, #tpu.memory_space<vmem>>, vector<1x128xf32>
    %167 = vector.broadcast %166 : vector<1x128xf32> to vector<2x128xf32>
    %168 = arith.addf %165, %167 : vector<2x128xf32>
    %c0_73 = arith.constant 0 : index
    %c0_74 = arith.constant 0 : index
    %169 = vector.load %arg10[%c0_73, %c0_74] : memref<2x128xf32, #tpu.memory_space<vmem>>, vector<2x128xf32>
    tpu.vector_store %arg10[%c0_73, %c0_74], %168 {strides = array<i32>} : memref<2x128xf32, #tpu.memory_space<vmem>>, vector<2x128xf32>,
    return
  }
  func.func @transform_0(%arg0: i32) -> (i32, i32) {
    %c0_i32 = arith.constant 0 : i32
    %c0_i32_0 = arith.constant 0 : i32
    return %arg0, %c0_i32 : i32, i32
  }
  func.func @transform_1(%arg0: i32) -> (i32, i32) {
    %c0_i32 = arith.constant 0 : i32
    %c0_i32_0 = arith.constant 0 : i32
    %c0_i32_1 = arith.constant 0 : i32
    return %c0_i32, %c0_i32_0 : i32, i32
  }
  func.func @transform_2(%arg0: i32) -> (i32, i32) {
    %c0_i32 = arith.constant 0 : i32
    %c0_i32_0 = arith.constant 0 : i32
    %c0_i32_1 = arith.constant 0 : i32
    return %c0_i32, %c0_i32_0 : i32, i32
  }
  func.func @transform_3(%arg0: i32) -> (i32, i32, i32) {
    %c0_i32 = arith.constant 0 : i32
    %c0_i32_0 = arith.constant 0 : i32
    %c0_i32_1 = arith.constant 0 : i32
    %c0_i32_2 = arith.constant 0 : i32
    return %c0_i32, %c0_i32_0, %c0_i32_1 : i32, i32, i32
  }
  func.func @transform_4(%arg0: i32) -> (i32, i32) {
    %c0_i32 = arith.constant 0 : i32
    %c0_i32_0 = arith.constant 0 : i32
    %c0_i32_1 = arith.constant 0 : i32
    return %c0_i32, %c0_i32_0 : i32, i32
  }
  func.func @transform_5(%arg0: i32) -> (i32, i32) {
    %c0_i32 = arith.constant 0 : i32
    %c0_i32_0 = arith.constant 0 : i32
    %c0_i32_1 = arith.constant 0 : i32
    return %c0_i32, %c0_i32_0 : i32, i32
  }
  func.func @transform_6(%arg0: i32) -> (i32, i32) {
    %c0_i32 = arith.constant 0 : i32
    %c0_i32_0 = arith.constant 0 : i32
    %c0_i32_1 = arith.constant 0 : i32
    return %c0_i32, %c0_i32_0 : i32, i32
  }
  func.func @transform_7(%arg0: i32) -> (i32, i32) {
    %c0_i32 = arith.constant 0 : i32
    %c0_i32_0 = arith.constant 0 : i32
    %c0_i32_1 = arith.constant 0 : i32
    return %c0_i32, %c0_i32_0 : i32, i32
  }
  func.func @transform_8(%arg0: i32) -> (i32, i32) {
    %c0_i32 = arith.constant 0 : i32
    %c0_i32_0 = arith.constant 0 : i32
    %c0_i32_1 = arith.constant 0 : i32
    return %c0_i32, %c0_i32_0 : i32, i32
  }
  func.func @transform_9(%arg0: i32) -> (i32, i32) {
    %c0_i32 = arith.constant 0 : i32
    %c0_i32_0 = arith.constant 0 : i32
    return %arg0, %c0_i32 : i32, i32
  }
}

</mosaic_0001>

<llo_original>
// kernel: _lambda_.1
$region0: #{_lambda_.1}
  #allocation0 [shape = 'u32[]', space=smem, size = 0x4, offset = 0x4, fixed_abs, tag = 'smem constant byte address 0x4 - core index']
  #allocation1 [shape = 'u32[144,128]{1,0:T(1,128)}', space=vmem, size = 0x12000, scoped, tag = 'internal scratch']
  #allocation2 [shape = 'f32[2,12,8,40]{3,2,1,0:T(8,128)}', space=vmem, size = 0x18000, scoped, tag = 'scratch operand']
  %s0 = inlined_call_operand.vmem [shape: bf16[1152,32], index: 0, kind: input, shape index: {}]
  %s1 = inlined_call_operand.vmem [shape: bf16[32,128], index: 1, kind: input, shape index: {}]
  %s2 = inlined_call_operand.vmem [shape: f32[1,128], index: 2, kind: input, shape index: {}]
  %s3 = inlined_call_operand.vmem [shape: bf16[5,40,128], index: 3, kind: input, shape index: {}]
  %s4 = inlined_call_operand.vmem [shape: f32[1,128], index: 4, kind: input, shape index: {}]
  %s5 = inlined_call_operand.vmem [shape: bf16[2048,128], index: 5, kind: input, shape index: {}]
  %s6 = inlined_call_operand.vmem [shape: f32[1,128], index: 6, kind: input, shape index: {}]
  %s7 = inlined_call_operand.vmem [shape: bf16[128,128], index: 7, kind: input, shape index: {}]
  %s8 = inlined_call_operand.vmem [shape: f32[1,128], index: 8, kind: input, shape index: {}]
  %s9 = inlined_call_operand.hbm [shape: f32[2,128], index: 9, kind: output, shape index: {}]
  %s10 = sld [smem:[#allocation0]]
  $region46: #{_lambda_.1} parent=0
    _
  %s12 = ssub.s32 1, %s10
  %s13 = scalar_select 0, %s12, %s10
  $region1: #{_lambda_.1} parent=0
    #allocation3 [shape = 'u8[1024]{0}', space=vmem, size = 0x400, scoped, tag = 'output window, operand 0, single buffered']
    #allocation4 [shape = 's32[1]{0}', space=sflag, size = 0x4, scoped, tag = 'scoped memory for _lambda_.1']
    %14 = vsyncpa [#allocation4], 0
    // Predicated region
    $region2: #{_lambda_.1} parent=1 // pred_check
      _
    $region3: #{_lambda_.1} parent=1 // pred_check_branch
      %16 = sbr.rel (0) target = $region5
    $region4: #{_lambda_.1} parent=1 // pred_region
      _
    $region5: #{_lambda_.1} parent=1 // pred_fallthru
      _
    // Predicated region
    $region6: #{_lambda_.1} parent=1 // pred_check
      _
    $region7: #{_lambda_.1} parent=1 // pred_check_branch
      %18 = sbr.rel (0) target = $region9
    $region8: #{_lambda_.1} parent=1 // pred_region
      _
    $region9: #{_lambda_.1} parent=1 // pred_fallthru
      _
    // Predicated region
    $region10: #{_lambda_.1} parent=1 // pred_check
      _
    $region11: #{_lambda_.1} parent=1 // pred_check_branch
      %20 = sbr.rel (0) target = $region13
    $region12: #{_lambda_.1} parent=1 // pred_region
      _
    $region13: #{_lambda_.1} parent=1 // pred_fallthru
      _
    // Predicated region
    $region14: #{_lambda_.1} parent=1 // pred_check
      _
    $region15: #{_lambda_.1} parent=1 // pred_check_branch
      %22 = sbr.rel (0) target = $region17
    $region16: #{_lambda_.1} parent=1 // pred_region
      _
    $region17: #{_lambda_.1} parent=1 // pred_fallthru
      _
    // Predicated region
    $region18: #{_lambda_.1} parent=1 // pred_check
      _
    $region19: #{_lambda_.1} parent=1 // pred_check_branch
      %24 = sbr.rel (0) target = $region21
    $region20: #{_lambda_.1} parent=1 // pred_region
      _
    $region21: #{_lambda_.1} parent=1 // pred_fallthru
      _
    // Predicated region
    $region22: #{_lambda_.1} parent=1 // pred_check
      _
    $region23: #{_lambda_.1} parent=1 // pred_check_branch
      %26 = sbr.rel (0) target = $region25
    $region24: #{_lambda_.1} parent=1 // pred_region
      _
    $region25: #{_lambda_.1} parent=1 // pred_fallthru
      _
    // Predicated region
    $region26: #{_lambda_.1} parent=1 // pred_check
      _
    $region27: #{_lambda_.1} parent=1 // pred_check_branch
      %28 = sbr.rel (0) target = $region29
    $region28: #{_lambda_.1} parent=1 // pred_region
      _
    $region29: #{_lambda_.1} parent=1 // pred_fallthru
      _
    // Predicated region
    $region30: #{_lambda_.1} parent=1 // pred_check
      _
    $region31: #{_lambda_.1} parent=1 // pred_check_branch
      %30 = sbr.rel (0) target = $region33
    $region32: #{_lambda_.1} parent=1 // pred_region
      _
    $region33: #{_lambda_.1} parent=1 // pred_fallthru
      _
    // Predicated region
    $region34: #{_lambda_.1} parent=1 // pred_check
      _
    $region35: #{_lambda_.1} parent=1 // pred_check_branch
      %32 = sbr.rel (0) target = $region37
    $region36: #{_lambda_.1} parent=1 // pred_region
      _
    $region37: #{_lambda_.1} parent=1 // pred_fallthru
      _
    %v34 = vld [vmem:[%s0] sm:$0xf]
    %v35 = vld [vmem:[%s0 + $0x4] sm:$0xf]
    %v36 = vld [vmem:[%s0 + $0x8] sm:$0xf]
    %v37 = vld [vmem:[%s0 + $0xc] sm:$0xf]
    %v38 = vld [vmem:[%s0 + $0x10] sm:$0xf]
    %v39 = vld [vmem:[%s0 + $0x14] sm:$0xf]
    %v40 = vld [vmem:[%s0 + $0x18] sm:$0xf]
    %v41 = vld [vmem:[%s0 + $0x1c] sm:$0xf]
    %v42 = vld [vmem:[%s0 + $0x20] sm:$0xf]
    %v43 = vld [vmem:[%s0 + $0x24] sm:$0xf]
    %v44 = vld [vmem:[%s0 + $0x28] sm:$0xf]
    %v45 = vld [vmem:[%s0 + $0x2c] sm:$0xf]
    %v46 = vld [vmem:[%s0 + $0x30] sm:$0xf]
    %v47 = vld [vmem:[%s0 + $0x34] sm:$0xf]
    %v48 = vld [vmem:[%s0 + $0x38] sm:$0xf]
    %v49 = vld [vmem:[%s0 + $0x3c] sm:$0xf]
    %v50 = vld [vmem:[%s0 + $0x40] sm:$0xf]
    %v51 = vld [vmem:[%s0 + $0x44] sm:$0xf]
    %v52 = vld [vmem:[%s0 + $0x48] sm:$0xf]
    %v53 = vld [vmem:[%s0 + $0x4c] sm:$0xf]
    %v54 = vld [vmem:[%s0 + $0x50] sm:$0xf]
    %v55 = vld [vmem:[%s0 + $0x54] sm:$0xf]
    %v56 = vld [vmem:[%s0 + $0x58] sm:$0xf]
    %v57 = vld [vmem:[%s0 + $0x5c] sm:$0xf]
    %v58 = vld [vmem:[%s0 + $0x60] sm:$0xf]
    %v59 = vld [vmem:[%s0 + $0x64] sm:$0xf]
    %v60 = vld [vmem:[%s0 + $0x68] sm:$0xf]
    %v61 = vld [vmem:[%s0 + $0x6c] sm:$0xf]
    %v62 = vld [vmem:[%s0 + $0x70] sm:$0xf]
    %v63 = vld [vmem:[%s0 + $0x74] sm:$0xf]
    %v64 = vld [vmem:[%s0 + $0x78] sm:$0xf]
    %v65 = vld [vmem:[%s0 + $0x7c] sm:$0xf]
    %v66 = vld [vmem:[%s0 + $0x80] sm:$0xf]
    %v67 = vld [vmem:[%s0 + $0x84] sm:$0xf]
    %v68 = vld [vmem:[%s0 + $0x88] sm:$0xf]
    %v69 = vld [vmem:[%s0 + $0x8c] sm:$0xf]
    %v70 = vld [vmem:[%s0 + $0x90] sm:$0xf]
    %v71 = vld [vmem:[%s0 + $0x94] sm:$0xf]
    %v72 = vld [vmem:[%s0 + $0x98] sm:$0xf]
    %v73 = vld [vmem:[%s0 + $0x9c] sm:$0xf]
    %v74 = vld [vmem:[%s0 + $0xa0] sm:$0xf]
    %v75 = vld [vmem:[%s0 + $0xa4] sm:$0xf]
    %v76 = vld [vmem:[%s0 + $0xa8] sm:$0xf]
    %v77 = vld [vmem:[%s0 + $0xac] sm:$0xf]
    %v78 = vld [vmem:[%s0 + $0xb0] sm:$0xf]
    %v79 = vld [vmem:[%s0 + $0xb4] sm:$0xf]
    %v80 = vld [vmem:[%s0 + $0xb8] sm:$0xf]
    %v81 = vld [vmem:[%s0 + $0xbc] sm:$0xf]
    %v82 = vld [vmem:[%s0 + $0xc0] sm:$0xf]
    %v83 = vld [vmem:[%s0 + $0xc4] sm:$0xf]
    %v84 = vld [vmem:[%s0 + $0xc8] sm:$0xf]
    %v85 = vld [vmem:[%s0 + $0xcc] sm:$0xf]
    %v86 = vld [vmem:[%s0 + $0xd0] sm:$0xf]
    %v87 = vld [vmem:[%s0 + $0xd4] sm:$0xf]
    %v88 = vld [vmem:[%s0 + $0xd8] sm:$0xf]
    %v89 = vld [vmem:[%s0 + $0xdc] sm:$0xf]
    %v90 = vld [vmem:[%s0 + $0xe0] sm:$0xf]
    %v91 = vld [vmem:[%s0 + $0xe4] sm:$0xf]
    %v92 = vld [vmem:[%s0 + $0xe8] sm:$0xf]
    %v93 = vld [vmem:[%s0 + $0xec] sm:$0xf]
    %v94 = vld [vmem:[%s0 + $0xf0] sm:$0xf]
    %v95 = vld [vmem:[%s0 + $0xf4] sm:$0xf]
    %v96 = vld [vmem:[%s0 + $0xf8] sm:$0xf]
    %v97 = vld [vmem:[%s0 + $0xfc] sm:$0xf]
    %v98 = vld [vmem:[%s0 + $0x100] sm:$0xf]
    %v99 = vld [vmem:[%s0 + $0x104] sm:$0xf]
    %v100 = vld [vmem:[%s0 + $0x108] sm:$0xf]
    %v101 = vld [vmem:[%s0 + $0x10c] sm:$0xf]
    %v102 = vld [vmem:[%s0 + $0x110] sm:$0xf]
    %v103 = vld [vmem:[%s0 + $0x114] sm:$0xf]
    %v104 = vld [vmem:[%s0 + $0x118] sm:$0xf]
    %v105 = vld [vmem:[%s0 + $0x11c] sm:$0xf]
    %v106 = vld [vmem:[%s0 + $0x120] sm:$0xf]
    %v107 = vld [vmem:[%s0 + $0x124] sm:$0xf]
    %v108 = vld [vmem:[%s0 + $0x128] sm:$0xf]
    %v109 = vld [vmem:[%s0 + $0x12c] sm:$0xf]
    %v110 = vld [vmem:[%s0 + $0x130] sm:$0xf]
    %v111 = vld [vmem:[%s0 + $0x134] sm:$0xf]
    %v112 = vld [vmem:[%s0 + $0x138] sm:$0xf]
    %v113 = vld [vmem:[%s0 + $0x13c] sm:$0xf]
    %v114 = vld [vmem:[%s0 + $0x140] sm:$0xf]
    %v115 = vld [vmem:[%s0 + $0x144] sm:$0xf]
    %v116 = vld [vmem:[%s0 + $0x148] sm:$0xf]
    %v117 = vld [vmem:[%s0 + $0x14c] sm:$0xf]
    %v118 = vld [vmem:[%s0 + $0x150] sm:$0xf]
    %v119 = vld [vmem:[%s0 + $0x154] sm:$0xf]
    %v120 = vld [vmem:[%s0 + $0x158] sm:$0xf]
    %v121 = vld [vmem:[%s0 + $0x15c] sm:$0xf]
    %v122 = vld [vmem:[%s0 + $0x160] sm:$0xf]
    %v123 = vld [vmem:[%s0 + $0x164] sm:$0xf]
    %v124 = vld [vmem:[%s0 + $0x168] sm:$0xf]
    %v125 = vld [vmem:[%s0 + $0x16c] sm:$0xf]
    %v126 = vld [vmem:[%s0 + $0x170] sm:$0xf]
    %v127 = vld [vmem:[%s0 + $0x174] sm:$0xf]
    %v128 = vld [vmem:[%s0 + $0x178] sm:$0xf]
    %v129 = vld [vmem:[%s0 + $0x17c] sm:$0xf]
    %v130 = vld [vmem:[%s0 + $0x180] sm:$0xf]
    %v131 = vld [vmem:[%s0 + $0x184] sm:$0xf]
    %v132 = vld [vmem:[%s0 + $0x188] sm:$0xf]
    %v133 = vld [vmem:[%s0 + $0x18c] sm:$0xf]
    %v134 = vld [vmem:[%s0 + $0x190] sm:$0xf]
    %v135 = vld [vmem:[%s0 + $0x194] sm:$0xf]
    %v136 = vld [vmem:[%s0 + $0x198] sm:$0xf]
    %v137 = vld [vmem:[%s0 + $0x19c] sm:$0xf]
    %v138 = vld [vmem:[%s0 + $0x1a0] sm:$0xf]
    %v139 = vld [vmem:[%s0 + $0x1a4] sm:$0xf]
    %v140 = vld [vmem:[%s0 + $0x1a8] sm:$0xf]
    %v141 = vld [vmem:[%s0 + $0x1ac] sm:$0xf]
    %v142 = vld [vmem:[%s0 + $0x1b0] sm:$0xf]
    %v143 = vld [vmem:[%s0 + $0x1b4] sm:$0xf]
    %v144 = vld [vmem:[%s0 + $0x1b8] sm:$0xf]
    %v145 = vld [vmem:[%s0 + $0x1bc] sm:$0xf]
    %v146 = vld [vmem:[%s0 + $0x1c0] sm:$0xf]
    %v147 = vld [vmem:[%s0 + $0x1c4] sm:$0xf]
    %v148 = vld [vmem:[%s0 + $0x1c8] sm:$0xf]
    %v149 = vld [vmem:[%s0 + $0x1cc] sm:$0xf]
    %v150 = vld [vmem:[%s0 + $0x1d0] sm:$0xf]
    %v151 = vld [vmem:[%s0 + $0x1d4] sm:$0xf]
    %v152 = vld [vmem:[%s0 + $0x1d8] sm:$0xf]
    %v153 = vld [vmem:[%s0 + $0x1dc] sm:$0xf]
    %v154 = vld [vmem:[%s0 + $0x1e0] sm:$0xf]
    %v155 = vld [vmem:[%s0 + $0x1e4] sm:$0xf]
    %v156 = vld [vmem:[%s0 + $0x1e8] sm:$0xf]
    %v157 = vld [vmem:[%s0 + $0x1ec] sm:$0xf]
    %v158 = vld [vmem:[%s0 + $0x1f0] sm:$0xf]
    %v159 = vld [vmem:[%s0 + $0x1f4] sm:$0xf]
    %v160 = vld [vmem:[%s0 + $0x1f8] sm:$0xf]
    %v161 = vld [vmem:[%s0 + $0x1fc] sm:$0xf]
    %v162 = vld [vmem:[%s0 + $0x200] sm:$0xf]
    %v163 = vld [vmem:[%s0 + $0x204] sm:$0xf]
    %v164 = vld [vmem:[%s0 + $0x208] sm:$0xf]
    %v165 = vld [vmem:[%s0 + $0x20c] sm:$0xf]
    %v166 = vld [vmem:[%s0 + $0x210] sm:$0xf]
    %v167 = vld [vmem:[%s0 + $0x214] sm:$0xf]
    %v168 = vld [vmem:[%s0 + $0x218] sm:$0xf]
    %v169 = vld [vmem:[%s0 + $0x21c] sm:$0xf]
    %v170 = vld [vmem:[%s0 + $0x220] sm:$0xf]
    %v171 = vld [vmem:[%s0 + $0x224] sm:$0xf]
    %v172 = vld [vmem:[%s0 + $0x228] sm:$0xf]
    %v173 = vld [vmem:[%s0 + $0x22c] sm:$0xf]
    %v174 = vld [vmem:[%s0 + $0x230] sm:$0xf]
    %v175 = vld [vmem:[%s0 + $0x234] sm:$0xf]
    %v176 = vld [vmem:[%s0 + $0x238] sm:$0xf]
    %v177 = vld [vmem:[%s0 + $0x23c] sm:$0xf]
    %v178 = vld [vmem:[%s1] sm:$0xf]
    %v179 = vld [vmem:[%s1 + $0x4] sm:$0xf]
    %v180 = vld [vmem:[%s1 + $0x8] sm:$0xf]
    %v181 = vld [vmem:[%s1 + $0xc] sm:$0xf]
    %v182 = vld [vmem:[%s2] sm:$0x1]
    %v184 = vlaneseq
    %v185 = vshrl.u32 %v184, 7
    %v186 = vsub.s32 0, %v185
    %v187 = vrot.slane %v182, %v186
    %v333 = vunpack.c.l.b16 %v34
    %v334 = vunpack.c.l.b16 %v35
    %v335 = vunpack.c.l.b16 %v36
    %v336 = vunpack.c.l.b16 %v37
    %v337 = vunpack.c.l.b16 %v38
    %v338 = vunpack.c.l.b16 %v39
    %v339 = vunpack.c.l.b16 %v40
    %v340 = vunpack.c.l.b16 %v41
    %v341 = vunpack.c.l.b16 %v42
    %v342 = vunpack.c.l.b16 %v43
    %v343 = vunpack.c.l.b16 %v44
    %v344 = vunpack.c.l.b16 %v45
    %v345 = vunpack.c.l.b16 %v46
    %v346 = vunpack.c.l.b16 %v47
    %v347 = vunpack.c.l.b16 %v48
    %v348 = vunpack.c.l.b16 %v49
    %v349 = vunpack.c.l.b16 %v50
    %v350 = vunpack.c.l.b16 %v51
    %v351 = vunpack.c.l.b16 %v52
    %v352 = vunpack.c.l.b16 %v53
    %v353 = vunpack.c.l.b16 %v54
    %v354 = vunpack.c.l.b16 %v55
    %v355 = vunpack.c.l.b16 %v56
    %v356 = vunpack.c.l.b16 %v57
    %v357 = vunpack.c.l.b16 %v58
    %v358 = vunpack.c.l.b16 %v59
    %v359 = vunpack.c.l.b16 %v60
    %v360 = vunpack.c.l.b16 %v61
    %v361 = vunpack.c.l.b16 %v62
    %v362 = vunpack.c.l.b16 %v63
    %v363 = vunpack.c.l.b16 %v64
    %v364 = vunpack.c.l.b16 %v65
    %v365 = vunpack.c.l.b16 %v66
    %v366 = vunpack.c.l.b16 %v67
    %v367 = vunpack.c.l.b16 %v68
    %v368 = vunpack.c.l.b16 %v69
    %v369 = vunpack.c.l.b16 %v70
    %v370 = vunpack.c.l.b16 %v71
    %v371 = vunpack.c.l.b16 %v72
    %v372 = vunpack.c.l.b16 %v73
    %v373 = vunpack.c.l.b16 %v74
    %v374 = vunpack.c.l.b16 %v75
    %v375 = vunpack.c.l.b16 %v76
    %v376 = vunpack.c.l.b16 %v77
    %v377 = vunpack.c.l.b16 %v78
    %v378 = vunpack.c.l.b16 %v79
    %v379 = vunpack.c.l.b16 %v80
    %v380 = vunpack.c.l.b16 %v81
    %v381 = vunpack.c.l.b16 %v82
    %v382 = vunpack.c.l.b16 %v83
    %v383 = vunpack.c.l.b16 %v84
    %v384 = vunpack.c.l.b16 %v85
    %v385 = vunpack.c.l.b16 %v86
    %v386 = vunpack.c.l.b16 %v87
    %v387 = vunpack.c.l.b16 %v88
    %v388 = vunpack.c.l.b16 %v89
    %v389 = vunpack.c.l.b16 %v90
    %v390 = vunpack.c.l.b16 %v91
    %v391 = vunpack.c.l.b16 %v92
    %v392 = vunpack.c.l.b16 %v93
    %v393 = vunpack.c.l.b16 %v94
    %v394 = vunpack.c.l.b16 %v95
    %v395 = vunpack.c.l.b16 %v96
    %v396 = vunpack.c.l.b16 %v97
    %v397 = vunpack.c.l.b16 %v98
    %v398 = vunpack.c.l.b16 %v99
    %v399 = vunpack.c.l.b16 %v100
    %v400 = vunpack.c.l.b16 %v101
    %v401 = vunpack.c.l.b16 %v102
    %v402 = vunpack.c.l.b16 %v103
    %v403 = vunpack.c.l.b16 %v104
    %v404 = vunpack.c.l.b16 %v105
    %v405 = vunpack.c.l.b16 %v106
    %v406 = vunpack.c.l.b16 %v107
    %v407 = vunpack.c.l.b16 %v108
    %v408 = vunpack.c.l.b16 %v109
    %v409 = vunpack.c.l.b16 %v110
    %v410 = vunpack.c.l.b16 %v111
    %v411 = vunpack.c.l.b16 %v112
    %v412 = vunpack.c.l.b16 %v113
    %v413 = vunpack.c.l.b16 %v114
    %v414 = vunpack.c.l.b16 %v115
    %v415 = vunpack.c.l.b16 %v116
    %v416 = vunpack.c.l.b16 %v117
    %v417 = vunpack.c.l.b16 %v118
    %v418 = vunpack.c.l.b16 %v119
    %v419 = vunpack.c.l.b16 %v120
    %v420 = vunpack.c.l.b16 %v121
    %v421 = vunpack.c.l.b16 %v122
    %v422 = vunpack.c.l.b16 %v123
    %v423 = vunpack.c.l.b16 %v124
    %v424 = vunpack.c.l.b16 %v125
    %v425 = vunpack.c.l.b16 %v126
    %v426 = vunpack.c.l.b16 %v127
    %v427 = vunpack.c.l.b16 %v128
    %v428 = vunpack.c.l.b16 %v129
    %v429 = vunpack.c.l.b16 %v130
    %v430 = vunpack.c.l.b16 %v131
    %v431 = vunpack.c.l.b16 %v132
    %v432 = vunpack.c.l.b16 %v133
    %v433 = vunpack.c.l.b16 %v134
    %v434 = vunpack.c.l.b16 %v135
    %v435 = vunpack.c.l.b16 %v136
    %v436 = vunpack.c.l.b16 %v137
    %v437 = vunpack.c.l.b16 %v138
    %v438 = vunpack.c.l.b16 %v139
    %v439 = vunpack.c.l.b16 %v140
    %v440 = vunpack.c.l.b16 %v141
    %v441 = vunpack.c.l.b16 %v142
    %v442 = vunpack.c.l.b16 %v143
    %v443 = vunpack.c.l.b16 %v144
    %v444 = vunpack.c.l.b16 %v145
    %v445 = vunpack.c.l.b16 %v146
    %v446 = vunpack.c.l.b16 %v147
    %v447 = vunpack.c.l.b16 %v148
    %v448 = vunpack.c.l.b16 %v149
    %v449 = vunpack.c.l.b16 %v150
    %v450 = vunpack.c.l.b16 %v151
    %v451 = vunpack.c.l.b16 %v152
    %v452 = vunpack.c.l.b16 %v153
    %v453 = vunpack.c.l.b16 %v154
    %v454 = vunpack.c.l.b16 %v155
    %v455 = vunpack.c.l.b16 %v156
    %v456 = vunpack.c.l.b16 %v157
    %v457 = vunpack.c.l.b16 %v158
    %v458 = vunpack.c.l.b16 %v159
    %v459 = vunpack.c.l.b16 %v160
    %v460 = vunpack.c.l.b16 %v161
    %v461 = vunpack.c.l.b16 %v162
    %v462 = vunpack.c.l.b16 %v163
    %v463 = vunpack.c.l.b16 %v164
    %v464 = vunpack.c.l.b16 %v165
    %v465 = vunpack.c.l.b16 %v166
    %v466 = vunpack.c.l.b16 %v167
    %v467 = vunpack.c.l.b16 %v168
    %v468 = vunpack.c.l.b16 %v169
    %v469 = vunpack.c.l.b16 %v170
    %v470 = vunpack.c.l.b16 %v171
    %v471 = vunpack.c.l.b16 %v172
    %v472 = vunpack.c.l.b16 %v173
    %v473 = vunpack.c.l.b16 %v174
    %v474 = vunpack.c.l.b16 %v175
    %v475 = vunpack.c.l.b16 %v176
    %v476 = vunpack.c.l.b16 %v177
    %v477 = vpack.c.b16 %v334, %v333
    %v478 = vpack.c.b16 %v336, %v335
    %v479 = vpack.c.b16 %v338, %v337
    %v480 = vpack.c.b16 %v340, %v339
    %v481 = vpack.c.b16 %v342, %v341
    %v482 = vpack.c.b16 %v344, %v343
    %v483 = vpack.c.b16 %v346, %v345
    %v484 = vpack.c.b16 %v348, %v347
    %v485 = vpack.c.b16 %v350, %v349
    %v486 = vpack.c.b16 %v352, %v351
    %v487 = vpack.c.b16 %v354, %v353
    %v488 = vpack.c.b16 %v356, %v355
    %v489 = vpack.c.b16 %v358, %v357
    %v490 = vpack.c.b16 %v360, %v359
    %v491 = vpack.c.b16 %v362, %v361
    %v492 = vpack.c.b16 %v364, %v363
    %v493 = vpack.c.b16 %v366, %v365
    %v494 = vpack.c.b16 %v368, %v367
    %v495 = vpack.c.b16 %v370, %v369
    %v496 = vpack.c.b16 %v372, %v371
    %v497 = vpack.c.b16 %v374, %v373
    %v498 = vpack.c.b16 %v376, %v375
    %v499 = vpack.c.b16 %v378, %v377
    %v500 = vpack.c.b16 %v380, %v379
    %v501 = vpack.c.b16 %v382, %v381
    %v502 = vpack.c.b16 %v384, %v383
    %v503 = vpack.c.b16 %v386, %v385
    %v504 = vpack.c.b16 %v388, %v387
    %v505 = vpack.c.b16 %v390, %v389
    %v506 = vpack.c.b16 %v392, %v391
    %v507 = vpack.c.b16 %v394, %v393
    %v508 = vpack.c.b16 %v396, %v395
    %v509 = vpack.c.b16 %v398, %v397
    %v510 = vpack.c.b16 %v400, %v399
    %v511 = vpack.c.b16 %v402, %v401
    %v512 = vpack.c.b16 %v404, %v403
    %v513 = vpack.c.b16 %v406, %v405
    %v514 = vpack.c.b16 %v408, %v407
    %v515 = vpack.c.b16 %v410, %v409
    %v516 = vpack.c.b16 %v412, %v411
    %v517 = vpack.c.b16 %v414, %v413
    %v518 = vpack.c.b16 %v416, %v415
    %v519 = vpack.c.b16 %v418, %v417
    %v520 = vpack.c.b16 %v420, %v419
    %v521 = vpack.c.b16 %v422, %v421
    %v522 = vpack.c.b16 %v424, %v423
    %v523 = vpack.c.b16 %v426, %v425
    %v524 = vpack.c.b16 %v428, %v427
    %v525 = vpack.c.b16 %v430, %v429
    %v526 = vpack.c.b16 %v432, %v431
    %v527 = vpack.c.b16 %v434, %v433
    %v528 = vpack.c.b16 %v436, %v435
    %v529 = vpack.c.b16 %v438, %v437
    %v530 = vpack.c.b16 %v440, %v439
    %v531 = vpack.c.b16 %v442, %v441
    %v532 = vpack.c.b16 %v444, %v443
    %v533 = vpack.c.b16 %v446, %v445
    %v534 = vpack.c.b16 %v448, %v447
    %v535 = vpack.c.b16 %v450, %v449
    %v536 = vpack.c.b16 %v452, %v451
    %v537 = vpack.c.b16 %v454, %v453
    %v538 = vpack.c.b16 %v456, %v455
    %v539 = vpack.c.b16 %v458, %v457
    %v540 = vpack.c.b16 %v460, %v459
    %v541 = vpack.c.b16 %v462, %v461
    %v542 = vpack.c.b16 %v464, %v463
    %v543 = vpack.c.b16 %v466, %v465
    %v544 = vpack.c.b16 %v468, %v467
    %v545 = vpack.c.b16 %v470, %v469
    %v546 = vpack.c.b16 %v472, %v471
    %v547 = vpack.c.b16 %v474, %v473
    %v548 = vpack.c.b16 %v476, %v475
    %v553 = vunpack.c.l.b16 %v178
    %v554 = vunpack.c.l.b16 %v179
    %v555 = vunpack.c.l.b16 %v180
    %v556 = vunpack.c.l.b16 %v181
    %v557 = vpack.c.b16 %v554, %v553
    %v558 = vpack.c.b16 %v556, %v555
    %vm561 = vcmask 261120
    %v563 = vsel %vm561, %v477, 0
    %v566 = vsel %vm561, %v478, 0
    %v569 = vsel %vm561, %v479, 0
    %v572 = vsel %vm561, %v480, 0
    %v575 = vsel %vm561, %v481, 0
    %v578 = vsel %vm561, %v482, 0
    %v581 = vsel %vm561, %v483, 0
    %v584 = vsel %vm561, %v484, 0
    %v587 = vsel %vm561, %v485, 0
    %v590 = vsel %vm561, %v486, 0
    %v593 = vsel %vm561, %v487, 0
    %v596 = vsel %vm561, %v488, 0
    %v599 = vsel %vm561, %v489, 0
    %v602 = vsel %vm561, %v490, 0
    %v605 = vsel %vm561, %v491, 0
    %v608 = vsel %vm561, %v492, 0
    %v611 = vsel %vm561, %v493, 0
    %v614 = vsel %vm561, %v494, 0
    %v617 = vsel %vm561, %v495, 0
    %v620 = vsel %vm561, %v496, 0
    %v623 = vsel %vm561, %v497, 0
    %v626 = vsel %vm561, %v498, 0
    %v629 = vsel %vm561, %v499, 0
    %v632 = vsel %vm561, %v500, 0
    %v635 = vsel %vm561, %v501, 0
    %v638 = vsel %vm561, %v502, 0
    %v641 = vsel %vm561, %v503, 0
    %v644 = vsel %vm561, %v504, 0
    %v647 = vsel %vm561, %v505, 0
    %v650 = vsel %vm561, %v506, 0
    %v653 = vsel %vm561, %v507, 0
    %v656 = vsel %vm561, %v508, 0
    %v659 = vsel %vm561, %v509, 0
    %v662 = vsel %vm561, %v510, 0
    %v665 = vsel %vm561, %v511, 0
    %v668 = vsel %vm561, %v512, 0
    %v671 = vsel %vm561, %v513, 0
    %v674 = vsel %vm561, %v514, 0
    %v677 = vsel %vm561, %v515, 0
    %v680 = vsel %vm561, %v516, 0
    %v683 = vsel %vm561, %v517, 0
    %v686 = vsel %vm561, %v518, 0
    %v689 = vsel %vm561, %v519, 0
    %v692 = vsel %vm561, %v520, 0
    %v695 = vsel %vm561, %v521, 0
    %v698 = vsel %vm561, %v522, 0
    %v701 = vsel %vm561, %v523, 0
    %v704 = vsel %vm561, %v524, 0
    %v707 = vsel %vm561, %v525, 0
    %v710 = vsel %vm561, %v526, 0
    %v713 = vsel %vm561, %v527, 0
    %v716 = vsel %vm561, %v528, 0
    %v719 = vsel %vm561, %v529, 0
    %v722 = vsel %vm561, %v530, 0
    %v725 = vsel %vm561, %v531, 0
    %v728 = vsel %vm561, %v532, 0
    %v731 = vsel %vm561, %v533, 0
    %v734 = vsel %vm561, %v534, 0
    %v737 = vsel %vm561, %v535, 0
    %v740 = vsel %vm561, %v536, 0
    %v743 = vsel %vm561, %v537, 0
    %v746 = vsel %vm561, %v538, 0
    %v749 = vsel %vm561, %v539, 0
    %v752 = vsel %vm561, %v540, 0
    %v755 = vsel %vm561, %v541, 0
    %v758 = vsel %vm561, %v542, 0
    %v761 = vsel %vm561, %v543, 0
    %v764 = vsel %vm561, %v544, 0
    %v767 = vsel %vm561, %v545, 0
    %v770 = vsel %vm561, %v546, 0
    %v773 = vsel %vm561, %v547, 0
    %v776 = vsel %vm561, %v548, 0
    %778 = vmatprep.subr.bf16.mxu0 0
    %779 = vmatpush1.bf16.msra.mxu0 0
    %780 = vmatprep.subr.bf16.mxu0 0
    %781 = vmatpush1.bf16.msra.mxu0 0
    %782 = vmatprep.subr.bf16.mxu0 0
    %783 = vmatpush1.bf16.msra.mxu0 0
    %784 = vmatprep.subr.bf16.mxu0 0
    %785 = vmatpush1.bf16.msra.mxu0 0
    %786 = vmatprep.subr.bf16.mxu0 0
    %787 = vmatpush1.bf16.msra.mxu0 0
    %788 = vmatprep.subr.bf16.mxu0 0
    %789 = vmatpush1.bf16.msra.mxu0 0
    %790 = vmatprep.subr.bf16.mxu0 0
    %791 = vmatpush1.bf16.msra.mxu0 %v558
    %792 = vmatprep.subr.bf16.mxu0 0
    %793 = vmatpush1.bf16.msra.mxu0 %v557
    %794 = vmatprep.subr.bf16.mxu0 0
    %795 = vmatpush2.bf16.msra.mxu0 0
    %796 = vmatprep.subr.bf16.mxu0 0
    %797 = vmatpush2.bf16.msra.mxu0 0
    %798 = vmatprep.subr.bf16.mxu0 0
    %799 = vmatpush2.bf16.msra.mxu0 0
    %800 = vmatprep.subr.bf16.mxu0 0
    %801 = vmatpush2.bf16.msra.mxu0 0
    %802 = vmatprep.subr.bf16.mxu0 0
    %803 = vmatpush2.bf16.msra.mxu0 0
    %804 = vmatprep.subr.bf16.mxu0 0
    %805 = vmatpush2.bf16.msra.mxu0 0
    %806 = vmatprep.subr.bf16.mxu0 0
    %807 = vmatpush2.bf16.msra.mxu0 0
    %808 = vmatprep.subr.bf16.mxu0 0
    %809 = vmatpush2.bf16.msra.mxu0 0
    %810 = vmatprep.mubr.bf16.mxu0 0
    %811 = vmatmul.mubr.bf16.gmra.mxu0 %v563
    %v812 = vpop.f32.mrf.mxu0
    %v813 = vadd.f32 %v187, %v812
    %v814 = vpop.f32.mrf.mxu0
    %v815 = vpop.f32.mrf.mxu0
    %v816 = vadd.f32 %v187, %v815
    %v817 = vpop.f32.mrf.mxu0
    %818 = vmatprep.mubr.bf16.mxu0 0
    %819 = vmatmul.mubr.bf16.gmra.mxu0 %v566
    %v820 = vpop.f32.mrf.mxu0
    %v821 = vadd.f32 %v187, %v820
    %v822 = vpop.f32.mrf.mxu0
    %v823 = vpop.f32.mrf.mxu0
    %v824 = vadd.f32 %v187, %v823
    %v825 = vpop.f32.mrf.mxu0
    %826 = vmatprep.mubr.bf16.mxu0 0
    %827 = vmatmul.mubr.bf16.gmra.mxu0 %v569
    %v828 = vpop.f32.mrf.mxu0
    %v829 = vadd.f32 %v187, %v828
    %v830 = vpop.f32.mrf.mxu0
    %v831 = vpop.f32.mrf.mxu0
    %v832 = vadd.f32 %v187, %v831
    %v833 = vpop.f32.mrf.mxu0
    %834 = vmatprep.mubr.bf16.mxu0 0
    %835 = vmatmul.mubr.bf16.gmra.mxu0 %v572
    %v836 = vpop.f32.mrf.mxu0
    %v837 = vadd.f32 %v187, %v836
    %v838 = vpop.f32.mrf.mxu0
    %v839 = vpop.f32.mrf.mxu0
    %v840 = vadd.f32 %v187, %v839
    %v841 = vpop.f32.mrf.mxu0
    %842 = vmatprep.mubr.bf16.mxu0 0
    %843 = vmatmul.mubr.bf16.gmra.mxu0 %v575
    %v844 = vpop.f32.mrf.mxu0
    %v845 = vadd.f32 %v187, %v844
    %v846 = vpop.f32.mrf.mxu0
    %v847 = vpop.f32.mrf.mxu0
    %v848 = vadd.f32 %v187, %v847
    %v849 = vpop.f32.mrf.mxu0
    %850 = vmatprep.mubr.bf16.mxu0 0
    %851 = vmatmul.mubr.bf16.gmra.mxu0 %v578
    %v852 = vpop.f32.mrf.mxu0
    %v853 = vadd.f32 %v187, %v852
    %v854 = vpop.f32.mrf.mxu0
    %v855 = vpop.f32.mrf.mxu0
    %v856 = vadd.f32 %v187, %v855
    %v857 = vpop.f32.mrf.mxu0
    %858 = vmatprep.mubr.bf16.mxu0 0
    %859 = vmatmul.mubr.bf16.gmra.mxu0 %v581
    %v860 = vpop.f32.mrf.mxu0
    %v861 = vadd.f32 %v187, %v860
    %v862 = vpop.f32.mrf.mxu0
    %v863 = vpop.f32.mrf.mxu0
    %v864 = vadd.f32 %v187, %v863
    %v865 = vpop.f32.mrf.mxu0
    %866 = vmatprep.mubr.bf16.mxu0 0
    %867 = vmatmul.mubr.bf16.gmra.mxu0 %v584
    %v868 = vpop.f32.mrf.mxu0
    %v869 = vadd.f32 %v187, %v868
    %v870 = vpop.f32.mrf.mxu0
    %v871 = vpop.f32.mrf.mxu0
    %v872 = vadd.f32 %v187, %v871
    %v873 = vpop.f32.mrf.mxu0
    %874 = vmatprep.mubr.bf16.mxu0 0
    %875 = vmatmul.mubr.bf16.gmra.mxu0 %v587
    %v876 = vpop.f32.mrf.mxu0
    %v877 = vadd.f32 %v187, %v876
    %v878 = vpop.f32.mrf.mxu0
    %v879 = vpop.f32.mrf.mxu0
    %v880 = vadd.f32 %v187, %v879
    %v881 = vpop.f32.mrf.mxu0
    %882 = vmatprep.mubr.bf16.mxu0 0
    %883 = vmatmul.mubr.bf16.gmra.mxu0 %v590
    %v884 = vpop.f32.mrf.mxu0
    %v885 = vadd.f32 %v187, %v884
    %v886 = vpop.f32.mrf.mxu0
    %v887 = vpop.f32.mrf.mxu0
    %v888 = vadd.f32 %v187, %v887
    %v889 = vpop.f32.mrf.mxu0
    %890 = vmatprep.mubr.bf16.mxu0 0
    %891 = vmatmul.mubr.bf16.gmra.mxu0 %v593
    %v892 = vpop.f32.mrf.mxu0
    %v893 = vadd.f32 %v187, %v892
    %v894 = vpop.f32.mrf.mxu0
    %v895 = vpop.f32.mrf.mxu0
    %v896 = vadd.f32 %v187, %v895
    %v897 = vpop.f32.mrf.mxu0
    %898 = vmatprep.mubr.bf16.mxu0 0
    %899 = vmatmul.mubr.bf16.gmra.mxu0 %v596
    %v900 = vpop.f32.mrf.mxu0
    %v901 = vadd.f32 %v187, %v900
    %v902 = vpop.f32.mrf.mxu0
    %v903 = vpop.f32.mrf.mxu0
    %v904 = vadd.f32 %v187, %v903
    %v905 = vpop.f32.mrf.mxu0
    %906 = vmatprep.mubr.bf16.mxu0 0
    %907 = vmatmul.mubr.bf16.gmra.mxu0 %v599
    %v908 = vpop.f32.mrf.mxu0
    %v909 = vadd.f32 %v187, %v908
    %v910 = vpop.f32.mrf.mxu0
    %v911 = vpop.f32.mrf.mxu0
    %v912 = vadd.f32 %v187, %v911
    %v913 = vpop.f32.mrf.mxu0
    %914 = vmatprep.mubr.bf16.mxu0 0
    %915 = vmatmul.mubr.bf16.gmra.mxu0 %v602
    %v916 = vpop.f32.mrf.mxu0
    %v917 = vadd.f32 %v187, %v916
    %v918 = vpop.f32.mrf.mxu0
    %v919 = vpop.f32.mrf.mxu0
    %v920 = vadd.f32 %v187, %v919
    %v921 = vpop.f32.mrf.mxu0
    %922 = vmatprep.mubr.bf16.mxu0 0
    %923 = vmatmul.mubr.bf16.gmra.mxu0 %v605
    %v924 = vpop.f32.mrf.mxu0
    %v925 = vadd.f32 %v187, %v924
    %v926 = vpop.f32.mrf.mxu0
    %v927 = vpop.f32.mrf.mxu0
    %v928 = vadd.f32 %v187, %v927
    %v929 = vpop.f32.mrf.mxu0
    %930 = vmatprep.mubr.bf16.mxu0 0
    %931 = vmatmul.mubr.bf16.gmra.mxu0 %v608
    %v932 = vpop.f32.mrf.mxu0
    %v933 = vadd.f32 %v187, %v932
    %v934 = vpop.f32.mrf.mxu0
    %v935 = vpop.f32.mrf.mxu0
    %v936 = vadd.f32 %v187, %v935
    %v937 = vpop.f32.mrf.mxu0
    %938 = vmatprep.mubr.bf16.mxu0 0
    %939 = vmatmul.mubr.bf16.gmra.mxu0 %v611
    %v940 = vpop.f32.mrf.mxu0
    %v941 = vadd.f32 %v187, %v940
    %v942 = vpop.f32.mrf.mxu0
    %v943 = vpop.f32.mrf.mxu0
    %v944 = vadd.f32 %v187, %v943
    %v945 = vpop.f32.mrf.mxu0
    %946 = vmatprep.mubr.bf16.mxu0 0
    %947 = vmatmul.mubr.bf16.gmra.mxu0 %v614
    %v948 = vpop.f32.mrf.mxu0
    %v949 = vadd.f32 %v187, %v948
    %v950 = vpop.f32.mrf.mxu0
    %v951 = vpop.f32.mrf.mxu0
    %v952 = vadd.f32 %v187, %v951
    %v953 = vpop.f32.mrf.mxu0
    %954 = vmatprep.mubr.bf16.mxu0 0
    %955 = vmatmul.mubr.bf16.gmra.mxu0 %v617
    %v956 = vpop.f32.mrf.mxu0
    %v957 = vadd.f32 %v187, %v956
    %v958 = vpop.f32.mrf.mxu0
    %v959 = vpop.f32.mrf.mxu0
    %v960 = vadd.f32 %v187, %v959
    %v961 = vpop.f32.mrf.mxu0
    %962 = vmatprep.mubr.bf16.mxu0 0
    %963 = vmatmul.mubr.bf16.gmra.mxu0 %v620
    %v964 = vpop.f32.mrf.mxu0
    %v965 = vadd.f32 %v187, %v964
    %v966 = vpop.f32.mrf.mxu0
    %v967 = vpop.f32.mrf.mxu0
    %v968 = vadd.f32 %v187, %v967
    %v969 = vpop.f32.mrf.mxu0
    %970 = vmatprep.mubr.bf16.mxu0 0
    %971 = vmatmul.mubr.bf16.gmra.mxu0 %v623
    %v972 = vpop.f32.mrf.mxu0
    %v973 = vadd.f32 %v187, %v972
    %v974 = vpop.f32.mrf.mxu0
    %v975 = vpop.f32.mrf.mxu0
    %v976 = vadd.f32 %v187, %v975
    %v977 = vpop.f32.mrf.mxu0
    %978 = vmatprep.mubr.bf16.mxu0 0
    %979 = vmatmul.mubr.bf16.gmra.mxu0 %v626
    %v980 = vpop.f32.mrf.mxu0
    %v981 = vadd.f32 %v187, %v980
    %v982 = vpop.f32.mrf.mxu0
    %v983 = vpop.f32.mrf.mxu0
    %v984 = vadd.f32 %v187, %v983
    %v985 = vpop.f32.mrf.mxu0
    %986 = vmatprep.mubr.bf16.mxu0 0
    %987 = vmatmul.mubr.bf16.gmra.mxu0 %v629
    %v988 = vpop.f32.mrf.mxu0
    %v989 = vadd.f32 %v187, %v988
    %v990 = vpop.f32.mrf.mxu0
    %v991 = vpop.f32.mrf.mxu0
    %v992 = vadd.f32 %v187, %v991
    %v993 = vpop.f32.mrf.mxu0
    %994 = vmatprep.mubr.bf16.mxu0 0
    %995 = vmatmul.mubr.bf16.gmra.mxu0 %v632
    %v996 = vpop.f32.mrf.mxu0
    %v997 = vadd.f32 %v187, %v996
    %v998 = vpop.f32.mrf.mxu0
    %v999 = vpop.f32.mrf.mxu0
    %v1000 = vadd.f32 %v187, %v999
    %v1001 = vpop.f32.mrf.mxu0
    %1002 = vmatprep.mubr.bf16.mxu0 0
    %1003 = vmatmul.mubr.bf16.gmra.mxu0 %v635
    %v1004 = vpop.f32.mrf.mxu0
    %v1005 = vadd.f32 %v187, %v1004
    %v1006 = vpop.f32.mrf.mxu0
    %v1007 = vpop.f32.mrf.mxu0
    %v1008 = vadd.f32 %v187, %v1007
    %v1009 = vpop.f32.mrf.mxu0
    %1010 = vmatprep.mubr.bf16.mxu0 0
    %1011 = vmatmul.mubr.bf16.gmra.mxu0 %v638
    %v1012 = vpop.f32.mrf.mxu0
    %v1013 = vadd.f32 %v187, %v1012
    %v1014 = vpop.f32.mrf.mxu0
    %v1015 = vpop.f32.mrf.mxu0
    %v1016 = vadd.f32 %v187, %v1015
    %v1017 = vpop.f32.mrf.mxu0
    %1018 = vmatprep.mubr.bf16.mxu0 0
    %1019 = vmatmul.mubr.bf16.gmra.mxu0 %v641
    %v1020 = vpop.f32.mrf.mxu0
    %v1021 = vadd.f32 %v187, %v1020
    %v1022 = vpop.f32.mrf.mxu0
    %v1023 = vpop.f32.mrf.mxu0
    %v1024 = vadd.f32 %v187, %v1023
    %v1025 = vpop.f32.mrf.mxu0
    %1026 = vmatprep.mubr.bf16.mxu0 0
    %1027 = vmatmul.mubr.bf16.gmra.mxu0 %v644
    %v1028 = vpop.f32.mrf.mxu0
    %v1029 = vadd.f32 %v187, %v1028
    %v1030 = vpop.f32.mrf.mxu0
    %v1031 = vpop.f32.mrf.mxu0
    %v1032 = vadd.f32 %v187, %v1031
    %v1033 = vpop.f32.mrf.mxu0
    %1034 = vmatprep.mubr.bf16.mxu0 0
    %1035 = vmatmul.mubr.bf16.gmra.mxu0 %v647
    %v1036 = vpop.f32.mrf.mxu0
    %v1037 = vadd.f32 %v187, %v1036
    %v1038 = vpop.f32.mrf.mxu0
    %v1039 = vpop.f32.mrf.mxu0
    %v1040 = vadd.f32 %v187, %v1039
    %v1041 = vpop.f32.mrf.mxu0
    %1042 = vmatprep.mubr.bf16.mxu0 0
    %1043 = vmatmul.mubr.bf16.gmra.mxu0 %v650
    %v1044 = vpop.f32.mrf.mxu0
    %v1045 = vadd.f32 %v187, %v1044
    %v1046 = vpop.f32.mrf.mxu0
    %v1047 = vpop.f32.mrf.mxu0
    %v1048 = vadd.f32 %v187, %v1047
    %v1049 = vpop.f32.mrf.mxu0
    %1050 = vmatprep.mubr.bf16.mxu0 0
    %1051 = vmatmul.mubr.bf16.gmra.mxu0 %v653
    %v1052 = vpop.f32.mrf.mxu0
    %v1053 = vadd.f32 %v187, %v1052
    %v1054 = vpop.f32.mrf.mxu0
    %v1055 = vpop.f32.mrf.mxu0
    %v1056 = vadd.f32 %v187, %v1055
    %v1057 = vpop.f32.mrf.mxu0
    %1058 = vmatprep.mubr.bf16.mxu0 0
    %1059 = vmatmul.mubr.bf16.gmra.mxu0 %v656
    %v1060 = vpop.f32.mrf.mxu0
    %v1061 = vadd.f32 %v187, %v1060
    %v1062 = vpop.f32.mrf.mxu0
    %v1063 = vpop.f32.mrf.mxu0
    %v1064 = vadd.f32 %v187, %v1063
    %v1065 = vpop.f32.mrf.mxu0
    %1066 = vmatprep.mubr.bf16.mxu0 0
    %1067 = vmatmul.mubr.bf16.gmra.mxu0 %v659
    %v1068 = vpop.f32.mrf.mxu0
    %v1069 = vadd.f32 %v187, %v1068
    %v1070 = vpop.f32.mrf.mxu0
    %v1071 = vpop.f32.mrf.mxu0
    %v1072 = vadd.f32 %v187, %v1071
    %v1073 = vpop.f32.mrf.mxu0
    %1074 = vmatprep.mubr.bf16.mxu0 0
    %1075 = vmatmul.mubr.bf16.gmra.mxu0 %v662
    %v1076 = vpop.f32.mrf.mxu0
    %v1077 = vadd.f32 %v187, %v1076
    %v1078 = vpop.f32.mrf.mxu0
    %v1079 = vpop.f32.mrf.mxu0
    %v1080 = vadd.f32 %v187, %v1079
    %v1081 = vpop.f32.mrf.mxu0
    %1082 = vmatprep.mubr.bf16.mxu0 0
    %1083 = vmatmul.mubr.bf16.gmra.mxu0 %v665
    %v1084 = vpop.f32.mrf.mxu0
    %v1085 = vadd.f32 %v187, %v1084
    %v1086 = vpop.f32.mrf.mxu0
    %v1087 = vpop.f32.mrf.mxu0
    %v1088 = vadd.f32 %v187, %v1087
    %v1089 = vpop.f32.mrf.mxu0
    %1090 = vmatprep.mubr.bf16.mxu0 0
    %1091 = vmatmul.mubr.bf16.gmra.mxu0 %v668
    %v1092 = vpop.f32.mrf.mxu0
    %v1093 = vadd.f32 %v187, %v1092
    %v1094 = vpop.f32.mrf.mxu0
    %v1095 = vpop.f32.mrf.mxu0
    %v1096 = vadd.f32 %v187, %v1095
    %v1097 = vpop.f32.mrf.mxu0
    %1098 = vmatprep.mubr.bf16.mxu0 0
    %1099 = vmatmul.mubr.bf16.gmra.mxu0 %v671
    %v1100 = vpop.f32.mrf.mxu0
    %v1101 = vadd.f32 %v187, %v1100
    %v1102 = vpop.f32.mrf.mxu0
    %v1103 = vpop.f32.mrf.mxu0
    %v1104 = vadd.f32 %v187, %v1103
    %v1105 = vpop.f32.mrf.mxu0
    %1106 = vmatprep.mubr.bf16.mxu0 0
    %1107 = vmatmul.mubr.bf16.gmra.mxu0 %v674
    %v1108 = vpop.f32.mrf.mxu0
    %v1109 = vadd.f32 %v187, %v1108
    %v1110 = vpop.f32.mrf.mxu0
    %v1111 = vpop.f32.mrf.mxu0
    %v1112 = vadd.f32 %v187, %v1111
    %v1113 = vpop.f32.mrf.mxu0
    %1114 = vmatprep.mubr.bf16.mxu0 0
    %1115 = vmatmul.mubr.bf16.gmra.mxu0 %v677
    %v1116 = vpop.f32.mrf.mxu0
    %v1117 = vadd.f32 %v187, %v1116
    %v1118 = vpop.f32.mrf.mxu0
    %v1119 = vpop.f32.mrf.mxu0
    %v1120 = vadd.f32 %v187, %v1119
    %v1121 = vpop.f32.mrf.mxu0
    %1122 = vmatprep.mubr.bf16.mxu0 0
    %1123 = vmatmul.mubr.bf16.gmra.mxu0 %v680
    %v1124 = vpop.f32.mrf.mxu0
    %v1125 = vadd.f32 %v187, %v1124
    %v1126 = vpop.f32.mrf.mxu0
    %v1127 = vpop.f32.mrf.mxu0
    %v1128 = vadd.f32 %v187, %v1127
    %v1129 = vpop.f32.mrf.mxu0
    %1130 = vmatprep.mubr.bf16.mxu0 0
    %1131 = vmatmul.mubr.bf16.gmra.mxu0 %v683
    %v1132 = vpop.f32.mrf.mxu0
    %v1133 = vadd.f32 %v187, %v1132
    %v1134 = vpop.f32.mrf.mxu0
    %v1135 = vpop.f32.mrf.mxu0
    %v1136 = vadd.f32 %v187, %v1135
    %v1137 = vpop.f32.mrf.mxu0
    %1138 = vmatprep.mubr.bf16.mxu0 0
    %1139 = vmatmul.mubr.bf16.gmra.mxu0 %v686
    %v1140 = vpop.f32.mrf.mxu0
    %v1141 = vadd.f32 %v187, %v1140
    %v1142 = vpop.f32.mrf.mxu0
    %v1143 = vpop.f32.mrf.mxu0
    %v1144 = vadd.f32 %v187, %v1143
    %v1145 = vpop.f32.mrf.mxu0
    %1146 = vmatprep.mubr.bf16.mxu0 0
    %1147 = vmatmul.mubr.bf16.gmra.mxu0 %v689
    %v1148 = vpop.f32.mrf.mxu0
    %v1149 = vadd.f32 %v187, %v1148
    %v1150 = vpop.f32.mrf.mxu0
    %v1151 = vpop.f32.mrf.mxu0
    %v1152 = vadd.f32 %v187, %v1151
    %v1153 = vpop.f32.mrf.mxu0
    %1154 = vmatprep.mubr.bf16.mxu0 0
    %1155 = vmatmul.mubr.bf16.gmra.mxu0 %v692
    %v1156 = vpop.f32.mrf.mxu0
    %v1157 = vadd.f32 %v187, %v1156
    %v1158 = vpop.f32.mrf.mxu0
    %v1159 = vpop.f32.mrf.mxu0
    %v1160 = vadd.f32 %v187, %v1159
    %v1161 = vpop.f32.mrf.mxu0
    %1162 = vmatprep.mubr.bf16.mxu0 0
    %1163 = vmatmul.mubr.bf16.gmra.mxu0 %v695
    %v1164 = vpop.f32.mrf.mxu0
    %v1165 = vadd.f32 %v187, %v1164
    %v1166 = vpop.f32.mrf.mxu0
    %v1167 = vpop.f32.mrf.mxu0
    %v1168 = vadd.f32 %v187, %v1167
    %v1169 = vpop.f32.mrf.mxu0
    %1170 = vmatprep.mubr.bf16.mxu0 0
    %1171 = vmatmul.mubr.bf16.gmra.mxu0 %v698
    %v1172 = vpop.f32.mrf.mxu0
    %v1173 = vadd.f32 %v187, %v1172
    %v1174 = vpop.f32.mrf.mxu0
    %v1175 = vpop.f32.mrf.mxu0
    %v1176 = vadd.f32 %v187, %v1175
    %v1177 = vpop.f32.mrf.mxu0
    %1178 = vmatprep.mubr.bf16.mxu0 0
    %1179 = vmatmul.mubr.bf16.gmra.mxu0 %v701
    %v1180 = vpop.f32.mrf.mxu0
    %v1181 = vadd.f32 %v187, %v1180
    %v1182 = vpop.f32.mrf.mxu0
    %v1183 = vpop.f32.mrf.mxu0
    %v1184 = vadd.f32 %v187, %v1183
    %v1185 = vpop.f32.mrf.mxu0
    %1186 = vmatprep.mubr.bf16.mxu0 0
    %1187 = vmatmul.mubr.bf16.gmra.mxu0 %v704
    %v1188 = vpop.f32.mrf.mxu0
    %v1189 = vadd.f32 %v187, %v1188
    %v1190 = vpop.f32.mrf.mxu0
    %v1191 = vpop.f32.mrf.mxu0
    %v1192 = vadd.f32 %v187, %v1191
    %v1193 = vpop.f32.mrf.mxu0
    %1194 = vmatprep.mubr.bf16.mxu0 0
    %1195 = vmatmul.mubr.bf16.gmra.mxu0 %v707
    %v1196 = vpop.f32.mrf.mxu0
    %v1197 = vadd.f32 %v187, %v1196
    %v1198 = vpop.f32.mrf.mxu0
    %v1199 = vpop.f32.mrf.mxu0
    %v1200 = vadd.f32 %v187, %v1199
    %v1201 = vpop.f32.mrf.mxu0
    %1202 = vmatprep.mubr.bf16.mxu0 0
    %1203 = vmatmul.mubr.bf16.gmra.mxu0 %v710
    %v1204 = vpop.f32.mrf.mxu0
    %v1205 = vadd.f32 %v187, %v1204
    %v1206 = vpop.f32.mrf.mxu0
    %v1207 = vpop.f32.mrf.mxu0
    %v1208 = vadd.f32 %v187, %v1207
    %v1209 = vpop.f32.mrf.mxu0
    %1210 = vmatprep.mubr.bf16.mxu0 0
    %1211 = vmatmul.mubr.bf16.gmra.mxu0 %v713
    %v1212 = vpop.f32.mrf.mxu0
    %v1213 = vadd.f32 %v187, %v1212
    %v1214 = vpop.f32.mrf.mxu0
    %v1215 = vpop.f32.mrf.mxu0
    %v1216 = vadd.f32 %v187, %v1215
    %v1217 = vpop.f32.mrf.mxu0
    %1218 = vmatprep.mubr.bf16.mxu0 0
    %1219 = vmatmul.mubr.bf16.gmra.mxu0 %v716
    %v1220 = vpop.f32.mrf.mxu0
    %v1221 = vadd.f32 %v187, %v1220
    %v1222 = vpop.f32.mrf.mxu0
    %v1223 = vpop.f32.mrf.mxu0
    %v1224 = vadd.f32 %v187, %v1223
    %v1225 = vpop.f32.mrf.mxu0
    %1226 = vmatprep.mubr.bf16.mxu0 0
    %1227 = vmatmul.mubr.bf16.gmra.mxu0 %v719
    %v1228 = vpop.f32.mrf.mxu0
    %v1229 = vadd.f32 %v187, %v1228
    %v1230 = vpop.f32.mrf.mxu0
    %v1231 = vpop.f32.mrf.mxu0
    %v1232 = vadd.f32 %v187, %v1231
    %v1233 = vpop.f32.mrf.mxu0
    %1234 = vmatprep.mubr.bf16.mxu0 0
    %1235 = vmatmul.mubr.bf16.gmra.mxu0 %v722
    %v1236 = vpop.f32.mrf.mxu0
    %v1237 = vadd.f32 %v187, %v1236
    %v1238 = vpop.f32.mrf.mxu0
    %v1239 = vpop.f32.mrf.mxu0
    %v1240 = vadd.f32 %v187, %v1239
    %v1241 = vpop.f32.mrf.mxu0
    %1242 = vmatprep.mubr.bf16.mxu0 0
    %1243 = vmatmul.mubr.bf16.gmra.mxu0 %v725
    %v1244 = vpop.f32.mrf.mxu0
    %v1245 = vadd.f32 %v187, %v1244
    %v1246 = vpop.f32.mrf.mxu0
    %v1247 = vpop.f32.mrf.mxu0
    %v1248 = vadd.f32 %v187, %v1247
    %v1249 = vpop.f32.mrf.mxu0
    %1250 = vmatprep.mubr.bf16.mxu0 0
    %1251 = vmatmul.mubr.bf16.gmra.mxu0 %v728
    %v1252 = vpop.f32.mrf.mxu0
    %v1253 = vadd.f32 %v187, %v1252
    %v1254 = vpop.f32.mrf.mxu0
    %v1255 = vpop.f32.mrf.mxu0
    %v1256 = vadd.f32 %v187, %v1255
    %v1257 = vpop.f32.mrf.mxu0
    %1258 = vmatprep.mubr.bf16.mxu0 0
    %1259 = vmatmul.mubr.bf16.gmra.mxu0 %v731
    %v1260 = vpop.f32.mrf.mxu0
    %v1261 = vadd.f32 %v187, %v1260
    %v1262 = vpop.f32.mrf.mxu0
    %v1263 = vpop.f32.mrf.mxu0
    %v1264 = vadd.f32 %v187, %v1263
    %v1265 = vpop.f32.mrf.mxu0
    %1266 = vmatprep.mubr.bf16.mxu0 0
    %1267 = vmatmul.mubr.bf16.gmra.mxu0 %v734
    %v1268 = vpop.f32.mrf.mxu0
    %v1269 = vadd.f32 %v187, %v1268
    %v1270 = vpop.f32.mrf.mxu0
    %v1271 = vpop.f32.mrf.mxu0
    %v1272 = vadd.f32 %v187, %v1271
    %v1273 = vpop.f32.mrf.mxu0
    %1274 = vmatprep.mubr.bf16.mxu0 0
    %1275 = vmatmul.mubr.bf16.gmra.mxu0 %v737
    %v1276 = vpop.f32.mrf.mxu0
    %v1277 = vadd.f32 %v187, %v1276
    %v1278 = vpop.f32.mrf.mxu0
    %v1279 = vpop.f32.mrf.mxu0
    %v1280 = vadd.f32 %v187, %v1279
    %v1281 = vpop.f32.mrf.mxu0
    %1282 = vmatprep.mubr.bf16.mxu0 0
    %1283 = vmatmul.mubr.bf16.gmra.mxu0 %v740
    %v1284 = vpop.f32.mrf.mxu0
    %v1285 = vadd.f32 %v187, %v1284
    %v1286 = vpop.f32.mrf.mxu0
    %v1287 = vpop.f32.mrf.mxu0
    %v1288 = vadd.f32 %v187, %v1287
    %v1289 = vpop.f32.mrf.mxu0
    %1290 = vmatprep.mubr.bf16.mxu0 0
    %1291 = vmatmul.mubr.bf16.gmra.mxu0 %v743
    %v1292 = vpop.f32.mrf.mxu0
    %v1293 = vadd.f32 %v187, %v1292
    %v1294 = vpop.f32.mrf.mxu0
    %v1295 = vpop.f32.mrf.mxu0
    %v1296 = vadd.f32 %v187, %v1295
    %v1297 = vpop.f32.mrf.mxu0
    %1298 = vmatprep.mubr.bf16.mxu0 0
    %1299 = vmatmul.mubr.bf16.gmra.mxu0 %v746
    %v1300 = vpop.f32.mrf.mxu0
    %v1301 = vadd.f32 %v187, %v1300
    %v1302 = vpop.f32.mrf.mxu0
    %v1303 = vpop.f32.mrf.mxu0
    %v1304 = vadd.f32 %v187, %v1303
    %v1305 = vpop.f32.mrf.mxu0
    %1306 = vmatprep.mubr.bf16.mxu0 0
    %1307 = vmatmul.mubr.bf16.gmra.mxu0 %v749
    %v1308 = vpop.f32.mrf.mxu0
    %v1309 = vadd.f32 %v187, %v1308
    %v1310 = vpop.f32.mrf.mxu0
    %v1311 = vpop.f32.mrf.mxu0
    %v1312 = vadd.f32 %v187, %v1311
    %v1313 = vpop.f32.mrf.mxu0
    %1314 = vmatprep.mubr.bf16.mxu0 0
    %1315 = vmatmul.mubr.bf16.gmra.mxu0 %v752
    %v1316 = vpop.f32.mrf.mxu0
    %v1317 = vadd.f32 %v187, %v1316
    %v1318 = vpop.f32.mrf.mxu0
    %v1319 = vpop.f32.mrf.mxu0
    %v1320 = vadd.f32 %v187, %v1319
    %v1321 = vpop.f32.mrf.mxu0
    %1322 = vmatprep.mubr.bf16.mxu0 0
    %1323 = vmatmul.mubr.bf16.gmra.mxu0 %v755
    %v1324 = vpop.f32.mrf.mxu0
    %v1325 = vadd.f32 %v187, %v1324
    %v1326 = vpop.f32.mrf.mxu0
    %v1327 = vpop.f32.mrf.mxu0
    %v1328 = vadd.f32 %v187, %v1327
    %v1329 = vpop.f32.mrf.mxu0
    %1330 = vmatprep.mubr.bf16.mxu0 0
    %1331 = vmatmul.mubr.bf16.gmra.mxu0 %v758
    %v1332 = vpop.f32.mrf.mxu0
    %v1333 = vadd.f32 %v187, %v1332
    %v1334 = vpop.f32.mrf.mxu0
    %v1335 = vpop.f32.mrf.mxu0
    %v1336 = vadd.f32 %v187, %v1335
    %v1337 = vpop.f32.mrf.mxu0
    %1338 = vmatprep.mubr.bf16.mxu0 0
    %1339 = vmatmul.mubr.bf16.gmra.mxu0 %v761
    %v1340 = vpop.f32.mrf.mxu0
    %v1341 = vadd.f32 %v187, %v1340
    %v1342 = vpop.f32.mrf.mxu0
    %v1343 = vpop.f32.mrf.mxu0
    %v1344 = vadd.f32 %v187, %v1343
    %v1345 = vpop.f32.mrf.mxu0
    %1346 = vmatprep.mubr.bf16.mxu0 0
    %1347 = vmatmul.mubr.bf16.gmra.mxu0 %v764
    %v1348 = vpop.f32.mrf.mxu0
    %v1349 = vadd.f32 %v187, %v1348
    %v1350 = vpop.f32.mrf.mxu0
    %v1351 = vpop.f32.mrf.mxu0
    %v1352 = vadd.f32 %v187, %v1351
    %v1353 = vpop.f32.mrf.mxu0
    %1354 = vmatprep.mubr.bf16.mxu0 0
    %1355 = vmatmul.mubr.bf16.gmra.mxu0 %v767
    %v1356 = vpop.f32.mrf.mxu0
    %v1357 = vadd.f32 %v187, %v1356
    %v1358 = vpop.f32.mrf.mxu0
    %v1359 = vpop.f32.mrf.mxu0
    %v1360 = vadd.f32 %v187, %v1359
    %v1361 = vpop.f32.mrf.mxu0
    %1362 = vmatprep.mubr.bf16.mxu0 0
    %1363 = vmatmul.mubr.bf16.gmra.mxu0 %v770
    %v1364 = vpop.f32.mrf.mxu0
    %v1365 = vadd.f32 %v187, %v1364
    %v1366 = vpop.f32.mrf.mxu0
    %v1367 = vpop.f32.mrf.mxu0
    %v1368 = vadd.f32 %v187, %v1367
    %v1369 = vpop.f32.mrf.mxu0
    %1370 = vmatprep.mubr.bf16.mxu0 0
    %1371 = vmatmul.mubr.bf16.gmra.mxu0 %v773
    %v1372 = vpop.f32.mrf.mxu0
    %v1373 = vadd.f32 %v187, %v1372
    %v1374 = vpop.f32.mrf.mxu0
    %v1375 = vpop.f32.mrf.mxu0
    %v1376 = vadd.f32 %v187, %v1375
    %v1377 = vpop.f32.mrf.mxu0
    %1378 = vmatprep.mubr.bf16.mxu0 0
    %1379 = vmatmul.mubr.bf16.gmra.mxu0 %v776
    %v1380 = vpop.f32.mrf.mxu0
    %v1381 = vadd.f32 %v187, %v1380
    %v1382 = vpop.f32.mrf.mxu0
    %v1383 = vpop.f32.mrf.mxu0
    %v1384 = vadd.f32 %v187, %v1383
    %v1385 = vpop.f32.mrf.mxu0
    %1386 = vdwg.mxu0
    %v1387 = vmax.f32 %v813, %v824
    %v1388 = vmax.f32 %v816, %v829
    %v1389 = vmax.f32 %v821, %v832
    %v1390 = vmax.f32 %v837, %v848
    %v1391 = vmax.f32 %v840, %v853
    %v1392 = vmax.f32 %v845, %v856
    %v1393 = vmax.f32 %v861, %v872
    %v1394 = vmax.f32 %v864, %v877
    %v1395 = vmax.f32 %v869, %v880
    %v1396 = vmax.f32 %v885, %v896
    %v1397 = vmax.f32 %v888, %v901
    %v1398 = vmax.f32 %v893, %v904
    %v1399 = vmax.f32 %v909, %v920
    %v1400 = vmax.f32 %v912, %v925
    %v1401 = vmax.f32 %v917, %v928
    %v1402 = vmax.f32 %v933, %v944
    %v1403 = vmax.f32 %v936, %v949
    %v1404 = vmax.f32 %v941, %v952
    %v1405 = vmax.f32 %v957, %v968
    %v1406 = vmax.f32 %v960, %v973
    %v1407 = vmax.f32 %v965, %v976
    %v1408 = vmax.f32 %v981, %v992
    %v1409 = vmax.f32 %v984, %v997
    %v1410 = vmax.f32 %v989, %v1000
    %v1411 = vmax.f32 %v1005, %v1016
    %v1412 = vmax.f32 %v1008, %v1021
    %v1413 = vmax.f32 %v1013, %v1024
    %v1414 = vmax.f32 %v1029, %v1040
    %v1415 = vmax.f32 %v1032, %v1045
    %v1416 = vmax.f32 %v1037, %v1048
    %v1417 = vmax.f32 %v1053, %v1064
    %v1418 = vmax.f32 %v1056, %v1069
    %v1419 = vmax.f32 %v1061, %v1072
    %v1420 = vmax.f32 %v1077, %v1088
    %v1421 = vmax.f32 %v1080, %v1093
    %v1422 = vmax.f32 %v1085, %v1096
    %v1423 = vmax.f32 %v1101, %v1112
    %v1424 = vmax.f32 %v1104, %v1117
    %v1425 = vmax.f32 %v1109, %v1120
    %v1426 = vmax.f32 %v1125, %v1136
    %v1427 = vmax.f32 %v1128, %v1141
    %v1428 = vmax.f32 %v1133, %v1144
    %v1429 = vmax.f32 %v1149, %v1160
    %v1430 = vmax.f32 %v1152, %v1165
    %v1431 = vmax.f32 %v1157, %v1168
    %v1432 = vmax.f32 %v1173, %v1184
    %v1433 = vmax.f32 %v1176, %v1189
    %v1434 = vmax.f32 %v1181, %v1192
    %v1435 = vmax.f32 %v1197, %v1208
    %v1436 = vmax.f32 %v1200, %v1213
    %v1437 = vmax.f32 %v1205, %v1216
    %v1438 = vmax.f32 %v1221, %v1232
    %v1439 = vmax.f32 %v1224, %v1237
    %v1440 = vmax.f32 %v1229, %v1240
    %v1441 = vmax.f32 %v1245, %v1256
    %v1442 = vmax.f32 %v1248, %v1261
    %v1443 = vmax.f32 %v1253, %v1264
    %v1444 = vmax.f32 %v1269, %v1280
    %v1445 = vmax.f32 %v1272, %v1285
    %v1446 = vmax.f32 %v1277, %v1288
    %v1447 = vmax.f32 %v1293, %v1304
    %v1448 = vmax.f32 %v1296, %v1309
    %v1449 = vmax.f32 %v1301, %v1312
    %v1450 = vmax.f32 %v1317, %v1328
    %v1451 = vmax.f32 %v1320, %v1333
    %v1452 = vmax.f32 %v1325, %v1336
    %v1453 = vmax.f32 %v1341, %v1352
    %v1454 = vmax.f32 %v1344, %v1357
    %v1455 = vmax.f32 %v1349, %v1360
    %v1456 = vmax.f32 %v1365, %v1376
    %v1457 = vmax.f32 %v1368, %v1381
    %v1458 = vmax.f32 %v1373, %v1384
    %vm1507 = vcmask 1043456
    %v1508 = vrot.slane %v1388, 4
    %v1509 = vrot.slane %v1389, 4
    %v1510 = vsel %vm1507, %v1508, %v1509
    %v1511 = vrot.slane %v1391, 4
    %v1512 = vrot.slane %v1392, 4
    %v1513 = vsel %vm1507, %v1511, %v1512
    %v1514 = vrot.slane %v1394, 4
    %v1515 = vrot.slane %v1395, 4
    %v1516 = vsel %vm1507, %v1514, %v1515
    %v1517 = vrot.slane %v1397, 4
    %v1518 = vrot.slane %v1398, 4
    %v1519 = vsel %vm1507, %v1517, %v1518
    %v1520 = vrot.slane %v1400, 4
    %v1521 = vrot.slane %v1401, 4
    %v1522 = vsel %vm1507, %v1520, %v1521
    %v1523 = vrot.slane %v1403, 4
    %v1524 = vrot.slane %v1404, 4
    %v1525 = vsel %vm1507, %v1523, %v1524
    %v1526 = vrot.slane %v1406, 4
    %v1527 = vrot.slane %v1407, 4
    %v1528 = vsel %vm1507, %v1526, %v1527
    %v1529 = vrot.slane %v1409, 4
    %v1530 = vrot.slane %v1410, 4
    %v1531 = vsel %vm1507, %v1529, %v1530
    %v1532 = vrot.slane %v1412, 4
    %v1533 = vrot.slane %v1413, 4
    %v1534 = vsel %vm1507, %v1532, %v1533
    %v1535 = vrot.slane %v1415, 4
    %v1536 = vrot.slane %v1416, 4
    %v1537 = vsel %vm1507, %v1535, %v1536
    %v1538 = vrot.slane %v1418, 4
    %v1539 = vrot.slane %v1419, 4
    %v1540 = vsel %vm1507, %v1538, %v1539
    %v1541 = vrot.slane %v1421, 4
    %v1542 = vrot.slane %v1422, 4
    %v1543 = vsel %vm1507, %v1541, %v1542
    %v1544 = vrot.slane %v1424, 4
    %v1545 = vrot.slane %v1425, 4
    %v1546 = vsel %vm1507, %v1544, %v1545
    %v1547 = vrot.slane %v1427, 4
    %v1548 = vrot.slane %v1428, 4
    %v1549 = vsel %vm1507, %v1547, %v1548
    %v1550 = vrot.slane %v1430, 4
    %v1551 = vrot.slane %v1431, 4
    %v1552 = vsel %vm1507, %v1550, %v1551
    %v1553 = vrot.slane %v1433, 4
    %v1554 = vrot.slane %v1434, 4
    %v1555 = vsel %vm1507, %v1553, %v1554
    %v1556 = vrot.slane %v1436, 4
    %v1557 = vrot.slane %v1437, 4
    %v1558 = vsel %vm1507, %v1556, %v1557
    %v1559 = vrot.slane %v1439, 4
    %v1560 = vrot.slane %v1440, 4
    %v1561 = vsel %vm1507, %v1559, %v1560
    %v1562 = vrot.slane %v1442, 4
    %v1563 = vrot.slane %v1443, 4
    %v1564 = vsel %vm1507, %v1562, %v1563
    %v1565 = vrot.slane %v1445, 4
    %v1566 = vrot.slane %v1446, 4
    %v1567 = vsel %vm1507, %v1565, %v1566
    %v1568 = vrot.slane %v1448, 4
    %v1569 = vrot.slane %v1449, 4
    %v1570 = vsel %vm1507, %v1568, %v1569
    %v1571 = vrot.slane %v1451, 4
    %v1572 = vrot.slane %v1452, 4
    %v1573 = vsel %vm1507, %v1571, %v1572
    %v1574 = vrot.slane %v1454, 4
    %v1575 = vrot.slane %v1455, 4
    %v1576 = vsel %vm1507, %v1574, %v1575
    %v1577 = vrot.slane %v1457, 4
    %v1578 = vrot.slane %v1458, 4
    %v1579 = vsel %vm1507, %v1577, %v1578
    %v1628 = vmax.f32 %v1387, %v1510
    %v1629 = vmax.f32 %v1388, %v1509
    %v1630 = vmax.f32 %v1390, %v1513
    %v1631 = vmax.f32 %v1391, %v1512
    %v1632 = vmax.f32 %v1393, %v1516
    %v1633 = vmax.f32 %v1394, %v1515
    %v1634 = vmax.f32 %v1396, %v1519
    %v1635 = vmax.f32 %v1397, %v1518
    %v1636 = vmax.f32 %v1399, %v1522
    %v1637 = vmax.f32 %v1400, %v1521
    %v1638 = vmax.f32 %v1402, %v1525
    %v1639 = vmax.f32 %v1403, %v1524
    %v1640 = vmax.f32 %v1405, %v1528
    %v1641 = vmax.f32 %v1406, %v1527
    %v1642 = vmax.f32 %v1408, %v1531
    %v1643 = vmax.f32 %v1409, %v1530
    %v1644 = vmax.f32 %v1411, %v1534
    %v1645 = vmax.f32 %v1412, %v1533
    %v1646 = vmax.f32 %v1414, %v1537
    %v1647 = vmax.f32 %v1415, %v1536
    %v1648 = vmax.f32 %v1417, %v1540
    %v1649 = vmax.f32 %v1418, %v1539
    %v1650 = vmax.f32 %v1420, %v1543
    %v1651 = vmax.f32 %v1421, %v1542
    %v1652 = vmax.f32 %v1423, %v1546
    %v1653 = vmax.f32 %v1424, %v1545
    %v1654 = vmax.f32 %v1426, %v1549
    %v1655 = vmax.f32 %v1427, %v1548
    %v1656 = vmax.f32 %v1429, %v1552
    %v1657 = vmax.f32 %v1430, %v1551
    %v1658 = vmax.f32 %v1432, %v1555
    %v1659 = vmax.f32 %v1433, %v1554
    %v1660 = vmax.f32 %v1435, %v1558
    %v1661 = vmax.f32 %v1436, %v1557
    %v1662 = vmax.f32 %v1438, %v1561
    %v1663 = vmax.f32 %v1439, %v1560
    %v1664 = vmax.f32 %v1441, %v1564
    %v1665 = vmax.f32 %v1442, %v1563
    %v1666 = vmax.f32 %v1444, %v1567
    %v1667 = vmax.f32 %v1445, %v1566
    %v1668 = vmax.f32 %v1447, %v1570
    %v1669 = vmax.f32 %v1448, %v1569
    %v1670 = vmax.f32 %v1450, %v1573
    %v1671 = vmax.f32 %v1451, %v1572
    %v1672 = vmax.f32 %v1453, %v1576
    %v1673 = vmax.f32 %v1454, %v1575
    %v1674 = vmax.f32 %v1456, %v1579
    %v1675 = vmax.f32 %v1457, %v1578
    %v1676 = vmax.f32 %v1628, 0.0
    %v1677 = vmax.f32 %v1629, 0.0
    %v1678 = vmax.f32 %v1630, 0.0
    %v1679 = vmax.f32 %v1631, 0.0
    %v1680 = vmax.f32 %v1632, 0.0
    %v1681 = vmax.f32 %v1633, 0.0
    %v1682 = vmax.f32 %v1634, 0.0
    %v1683 = vmax.f32 %v1635, 0.0
    %v1684 = vmax.f32 %v1636, 0.0
    %v1685 = vmax.f32 %v1637, 0.0
    %v1686 = vmax.f32 %v1638, 0.0
    %v1687 = vmax.f32 %v1639, 0.0
    %v1688 = vmax.f32 %v1640, 0.0
    %v1689 = vmax.f32 %v1641, 0.0
    %v1690 = vmax.f32 %v1642, 0.0
    %v1691 = vmax.f32 %v1643, 0.0
    %v1692 = vmax.f32 %v1644, 0.0
    %v1693 = vmax.f32 %v1645, 0.0
    %v1694 = vmax.f32 %v1646, 0.0
    %v1695 = vmax.f32 %v1647, 0.0
    %v1696 = vmax.f32 %v1648, 0.0
    %v1697 = vmax.f32 %v1649, 0.0
    %v1698 = vmax.f32 %v1650, 0.0
    %v1699 = vmax.f32 %v1651, 0.0
    %v1700 = vmax.f32 %v1652, 0.0
    %v1701 = vmax.f32 %v1653, 0.0
    %v1702 = vmax.f32 %v1654, 0.0
    %v1703 = vmax.f32 %v1655, 0.0
    %v1704 = vmax.f32 %v1656, 0.0
    %v1705 = vmax.f32 %v1657, 0.0
    %v1706 = vmax.f32 %v1658, 0.0
    %v1707 = vmax.f32 %v1659, 0.0
    %v1708 = vmax.f32 %v1660, 0.0
    %v1709 = vmax.f32 %v1661, 0.0
    %v1710 = vmax.f32 %v1662, 0.0
    %v1711 = vmax.f32 %v1663, 0.0
    %v1712 = vmax.f32 %v1664, 0.0
    %v1713 = vmax.f32 %v1665, 0.0
    %v1714 = vmax.f32 %v1666, 0.0
    %v1715 = vmax.f32 %v1667, 0.0
    %v1716 = vmax.f32 %v1668, 0.0
    %v1717 = vmax.f32 %v1669, 0.0
    %v1718 = vmax.f32 %v1670, 0.0
    %v1719 = vmax.f32 %v1671, 0.0
    %v1720 = vmax.f32 %v1672, 0.0
    %v1721 = vmax.f32 %v1673, 0.0
    %v1722 = vmax.f32 %v1674, 0.0
    %v1723 = vmax.f32 %v1675, 0.0
    %vm1724 = vcmask 64512
    %1725 = vst.msk [vmem:[#allocation2] sm:$0xff] %vm1724, %v1676
    %1726 = vst.msk [vmem:[#allocation2 + $0x8] sm:$0xff] %vm1724, %v1678
    %1727 = vst.msk [vmem:[#allocation2 + $0x10] sm:$0xff] %vm1724, %v1680
    %1728 = vst.msk [vmem:[#allocation2 + $0x18] sm:$0xff] %vm1724, %v1682
    %1729 = vst.msk [vmem:[#allocation2 + $0x20] sm:$0xff] %vm1724, %v1684
    %1730 = vst.msk [vmem:[#allocation2 + $0x28] sm:$0xff] %vm1724, %v1686
    %1731 = vst.msk [vmem:[#allocation2 + $0x30] sm:$0xff] %vm1724, %v1688
    %1732 = vst.msk [vmem:[#allocation2 + $0x38] sm:$0xff] %vm1724, %v1690
    %1733 = vst.msk [vmem:[#allocation2 + $0x40] sm:$0xff] %vm1724, %v1692
    %1734 = vst.msk [vmem:[#allocation2 + $0x48] sm:$0xff] %vm1724, %v1694
    %1735 = vst.msk [vmem:[#allocation2 + $0x50] sm:$0xff] %vm1724, %v1696
    %1736 = vst.msk [vmem:[#allocation2 + $0x58] sm:$0xff] %vm1724, %v1698
    %1737 = vst.msk [vmem:[#allocation2 + $0x60] sm:$0xff] %vm1724, %v1700
    %1738 = vst.msk [vmem:[#allocation2 + $0x68] sm:$0xff] %vm1724, %v1702
    %1739 = vst.msk [vmem:[#allocation2 + $0x70] sm:$0xff] %vm1724, %v1704
    %1740 = vst.msk [vmem:[#allocation2 + $0x78] sm:$0xff] %vm1724, %v1706
    %1741 = vst.msk [vmem:[#allocation2 + $0x80] sm:$0xff] %vm1724, %v1708
    %1742 = vst.msk [vmem:[#allocation2 + $0x88] sm:$0xff] %vm1724, %v1710
    %1743 = vst.msk [vmem:[#allocation2 + $0x90] sm:$0xff] %vm1724, %v1712
    %1744 = vst.msk [vmem:[#allocation2 + $0x98] sm:$0xff] %vm1724, %v1714
    %1745 = vst.msk [vmem:[#allocation2 + $0xa0] sm:$0xff] %vm1724, %v1716
    %1746 = vst.msk [vmem:[#allocation2 + $0xa8] sm:$0xff] %vm1724, %v1718
    %1747 = vst.msk [vmem:[#allocation2 + $0xb0] sm:$0xff] %vm1724, %v1720
    %1748 = vst.msk [vmem:[#allocation2 + $0xb8] sm:$0xff] %vm1724, %v1722
    %1797 = vrot.lane.b32.xlu0 %v1676, 8
    %v1798 = vpop.permute.xlu0 %1797
    %1799 = vrot.lane.b32.xlu0 %v1677, 8
    %v1800 = vpop.permute.xlu0 %1799
    %1801 = vrot.lane.b32.xlu0 %v1678, 8
    %v1802 = vpop.permute.xlu0 %1801
    %1803 = vrot.lane.b32.xlu0 %v1679, 8
    %v1804 = vpop.permute.xlu0 %1803
    %1805 = vrot.lane.b32.xlu0 %v1680, 8
    %v1806 = vpop.permute.xlu0 %1805
    %1807 = vrot.lane.b32.xlu0 %v1681, 8
    %v1808 = vpop.permute.xlu0 %1807
    %1809 = vrot.lane.b32.xlu0 %v1682, 8
    %v1810 = vpop.permute.xlu0 %1809
    %1811 = vrot.lane.b32.xlu0 %v1683, 8
    %v1812 = vpop.permute.xlu0 %1811
    %1813 = vrot.lane.b32.xlu0 %v1684, 8
    %v1814 = vpop.permute.xlu0 %1813
    %1815 = vrot.lane.b32.xlu0 %v1685, 8
    %v1816 = vpop.permute.xlu0 %1815
    %1817 = vrot.lane.b32.xlu0 %v1686, 8
    %v1818 = vpop.permute.xlu0 %1817
    %1819 = vrot.lane.b32.xlu0 %v1687, 8
    %v1820 = vpop.permute.xlu0 %1819
    %1821 = vrot.lane.b32.xlu0 %v1688, 8
    %v1822 = vpop.permute.xlu0 %1821
    %1823 = vrot.lane.b32.xlu0 %v1689, 8
    %v1824 = vpop.permute.xlu0 %1823
    %1825 = vrot.lane.b32.xlu0 %v1690, 8
    %v1826 = vpop.permute.xlu0 %1825
    %1827 = vrot.lane.b32.xlu0 %v1691, 8
    %v1828 = vpop.permute.xlu0 %1827
    %1829 = vrot.lane.b32.xlu0 %v1692, 8
    %v1830 = vpop.permute.xlu0 %1829
    %1831 = vrot.lane.b32.xlu0 %v1693, 8
    %v1832 = vpop.permute.xlu0 %1831
    %1833 = vrot.lane.b32.xlu0 %v1694, 8
    %v1834 = vpop.permute.xlu0 %1833
    %1835 = vrot.lane.b32.xlu0 %v1695, 8
    %v1836 = vpop.permute.xlu0 %1835
    %1837 = vrot.lane.b32.xlu0 %v1696, 8
    %v1838 = vpop.permute.xlu0 %1837
    %1839 = vrot.lane.b32.xlu0 %v1697, 8
    %v1840 = vpop.permute.xlu0 %1839
    %1841 = vrot.lane.b32.xlu0 %v1698, 8
    %v1842 = vpop.permute.xlu0 %1841
    %1843 = vrot.lane.b32.xlu0 %v1699, 8
    %v1844 = vpop.permute.xlu0 %1843
    %1845 = vrot.lane.b32.xlu0 %v1700, 8
    %v1846 = vpop.permute.xlu0 %1845
    %1847 = vrot.lane.b32.xlu0 %v1701, 8
    %v1848 = vpop.permute.xlu0 %1847
    %1849 = vrot.lane.b32.xlu0 %v1702, 8
    %v1850 = vpop.permute.xlu0 %1849
    %1851 = vrot.lane.b32.xlu0 %v1703, 8
    %v1852 = vpop.permute.xlu0 %1851
    %1853 = vrot.lane.b32.xlu0 %v1704, 8
    %v1854 = vpop.permute.xlu0 %1853
    %1855 = vrot.lane.b32.xlu0 %v1705, 8
    %v1856 = vpop.permute.xlu0 %1855
    %1857 = vrot.lane.b32.xlu0 %v1706, 8
    %v1858 = vpop.permute.xlu0 %1857
    %1859 = vrot.lane.b32.xlu0 %v1707, 8
    %v1860 = vpop.permute.xlu0 %1859
    %1861 = vrot.lane.b32.xlu0 %v1708, 8
    %v1862 = vpop.permute.xlu0 %1861
    %1863 = vrot.lane.b32.xlu0 %v1709, 8
    %v1864 = vpop.permute.xlu0 %1863
    %1865 = vrot.lane.b32.xlu0 %v1710, 8
    %v1866 = vpop.permute.xlu0 %1865
    %1867 = vrot.lane.b32.xlu0 %v1711, 8
    %v1868 = vpop.permute.xlu0 %1867
    %1869 = vrot.lane.b32.xlu0 %v1712, 8
    %v1870 = vpop.permute.xlu0 %1869
    %1871 = vrot.lane.b32.xlu0 %v1713, 8
    %v1872 = vpop.permute.xlu0 %1871
    %1873 = vrot.lane.b32.xlu0 %v1714, 8
    %v1874 = vpop.permute.xlu0 %1873
    %1875 = vrot.lane.b32.xlu0 %v1715, 8
    %v1876 = vpop.permute.xlu0 %1875
    %1877 = vrot.lane.b32.xlu0 %v1716, 8
    %v1878 = vpop.permute.xlu0 %1877
    %1879 = vrot.lane.b32.xlu0 %v1717, 8
    %v1880 = vpop.permute.xlu0 %1879
    %1881 = vrot.lane.b32.xlu0 %v1718, 8
    %v1882 = vpop.permute.xlu0 %1881
    %1883 = vrot.lane.b32.xlu0 %v1719, 8
    %v1884 = vpop.permute.xlu0 %1883
    %1885 = vrot.lane.b32.xlu0 %v1720, 8
    %v1886 = vpop.permute.xlu0 %1885
    %1887 = vrot.lane.b32.xlu0 %v1721, 8
    %v1888 = vpop.permute.xlu0 %1887
    %1889 = vrot.lane.b32.xlu0 %v1722, 8
    %v1890 = vpop.permute.xlu0 %1889
    %1891 = vrot.lane.b32.xlu0 %v1723, 8
    %v1892 = vpop.permute.xlu0 %1891
    %vm1941 = vcmask 130113
    %1942 = vst.msk [vmem:[#allocation2 - $0x1] sm:$0xfe] %vm1941, %v1798
    %vm1943 = vcmask 122944
    %1944 = vst.msk [vmem:[#allocation2 + $0x7] sm:$0x1] %vm1943, %v1800
    %1945 = vst.msk [vmem:[#allocation2 + $0x7] sm:$0xfe] %vm1941, %v1802
    %1946 = vst.msk [vmem:[#allocation2 + $0xf] sm:$0x1] %vm1943, %v1804
    %1947 = vst.msk [vmem:[#allocation2 + $0xf] sm:$0xfe] %vm1941, %v1806
    %1948 = vst.msk [vmem:[#allocation2 + $0x17] sm:$0x1] %vm1943, %v1808
    %1949 = vst.msk [vmem:[#allocation2 + $0x17] sm:$0xfe] %vm1941, %v1810
    %1950 = vst.msk [vmem:[#allocation2 + $0x1f] sm:$0x1] %vm1943, %v1812
    %1951 = vst.msk [vmem:[#allocation2 + $0x1f] sm:$0xfe] %vm1941, %v1814
    %1952 = vst.msk [vmem:[#allocation2 + $0x27] sm:$0x1] %vm1943, %v1816
    %1953 = vst.msk [vmem:[#allocation2 + $0x27] sm:$0xfe] %vm1941, %v1818
    %1954 = vst.msk [vmem:[#allocation2 + $0x2f] sm:$0x1] %vm1943, %v1820
    %1955 = vst.msk [vmem:[#allocation2 + $0x2f] sm:$0xfe] %vm1941, %v1822
    %1956 = vst.msk [vmem:[#allocation2 + $0x37] sm:$0x1] %vm1943, %v1824
    %1957 = vst.msk [vmem:[#allocation2 + $0x37] sm:$0xfe] %vm1941, %v1826
    %1958 = vst.msk [vmem:[#allocation2 + $0x3f] sm:$0x1] %vm1943, %v1828
    %1959 = vst.msk [vmem:[#allocation2 + $0x3f] sm:$0xfe] %vm1941, %v1830
    %1960 = vst.msk [vmem:[#allocation2 + $0x47] sm:$0x1] %vm1943, %v1832
    %1961 = vst.msk [vmem:[#allocation2 + $0x47] sm:$0xfe] %vm1941, %v1834
    %1962 = vst.msk [vmem:[#allocation2 + $0x4f] sm:$0x1] %vm1943, %v1836
    %1963 = vst.msk [vmem:[#allocation2 + $0x4f] sm:$0xfe] %vm1941, %v1838
    %1964 = vst.msk [vmem:[#allocation2 + $0x57] sm:$0x1] %vm1943, %v1840
    %1965 = vst.msk [vmem:[#allocation2 + $0x57] sm:$0xfe] %vm1941, %v1842
    %1966 = vst.msk [vmem:[#allocation2 + $0x5f] sm:$0x1] %vm1943, %v1844
    %1967 = vst.msk [vmem:[#allocation2 + $0x5f] sm:$0xfe] %vm1941, %v1846
    %1968 = vst.msk [vmem:[#allocation2 + $0x67] sm:$0x1] %vm1943, %v1848
    %1969 = vst.msk [vmem:[#allocation2 + $0x67] sm:$0xfe] %vm1941, %v1850
    %1970 = vst.msk [vmem:[#allocation2 + $0x6f] sm:$0x1] %vm1943, %v1852
    %1971 = vst.msk [vmem:[#allocation2 + $0x6f] sm:$0xfe] %vm1941, %v1854
    %1972 = vst.msk [vmem:[#allocation2 + $0x77] sm:$0x1] %vm1943, %v1856
    %1973 = vst.msk [vmem:[#allocation2 + $0x77] sm:$0xfe] %vm1941, %v1858
    %1974 = vst.msk [vmem:[#allocation2 + $0x7f] sm:$0x1] %vm1943, %v1860
    %1975 = vst.msk [vmem:[#allocation2 + $0x7f] sm:$0xfe] %vm1941, %v1862
    %1976 = vst.msk [vmem:[#allocation2 + $0x87] sm:$0x1] %vm1943, %v1864
    %1977 = vst.msk [vmem:[#allocation2 + $0x87] sm:$0xfe] %vm1941, %v1866
    %1978 = vst.msk [vmem:[#allocation2 + $0x8f] sm:$0x1] %vm1943, %v1868
    %1979 = vst.msk [vmem:[#allocation2 + $0x8f] sm:$0xfe] %vm1941, %v1870
    %1980 = vst.msk [vmem:[#allocation2 + $0x97] sm:$0x1] %vm1943, %v1872
    %1981 = vst.msk [vmem:[#allocation2 + $0x97] sm:$0xfe] %vm1941, %v1874
    %1982 = vst.msk [vmem:[#allocation2 + $0x9f] sm:$0x1] %vm1943, %v1876
    %1983 = vst.msk [vmem:[#allocation2 + $0x9f] sm:$0xfe] %vm1941, %v1878
    %1984 = vst.msk [vmem:[#allocation2 + $0xa7] sm:$0x1] %vm1943, %v1880
    %1985 = vst.msk [vmem:[#allocation2 + $0xa7] sm:$0xfe] %vm1941, %v1882
    %1986 = vst.msk [vmem:[#allocation2 + $0xaf] sm:$0x1] %vm1943, %v1884
    %1987 = vst.msk [vmem:[#allocation2 + $0xaf] sm:$0xfe] %vm1941, %v1886
    %1988 = vst.msk [vmem:[#allocation2 + $0xb7] sm:$0x1] %vm1943, %v1888
    %1989 = vst.msk [vmem:[#allocation2 + $0xb7] sm:$0xfe] %vm1941, %v1890
    %1990 = vst.msk [vmem:[#allocation2 + $0xbf] sm:$0x1] %vm1943, %v1892
    %1991 = vrot.lane.b32.xlu0 %v1676, 16
    %v1992 = vpop.permute.xlu0 %1991
    %1993 = vrot.lane.b32.xlu0 %v1677, 16
    %v1994 = vpop.permute.xlu0 %1993
    %1995 = vrot.lane.b32.xlu0 %v1678, 16
    %v1996 = vpop.permute.xlu0 %1995
    %1997 = vrot.lane.b32.xlu0 %v1679, 16
    %v1998 = vpop.permute.xlu0 %1997
    %1999 = vrot.lane.b32.xlu0 %v1680, 16
    %v2000 = vpop.permute.xlu0 %1999
    %2001 = vrot.lane.b32.xlu0 %v1681, 16
    %v2002 = vpop.permute.xlu0 %2001
    %2003 = vrot.lane.b32.xlu0 %v1682, 16
    %v2004 = vpop.permute.xlu0 %2003
    %2005 = vrot.lane.b32.xlu0 %v1683, 16
    %v2006 = vpop.permute.xlu0 %2005
    %2007 = vrot.lane.b32.xlu0 %v1684, 16
    %v2008 = vpop.permute.xlu0 %2007
    %2009 = vrot.lane.b32.xlu0 %v1685, 16
    %v2010 = vpop.permute.xlu0 %2009
    %2011 = vrot.lane.b32.xlu0 %v1686, 16
    %v2012 = vpop.permute.xlu0 %2011
    %2013 = vrot.lane.b32.xlu0 %v1687, 16
    %v2014 = vpop.permute.xlu0 %2013
    %2015 = vrot.lane.b32.xlu0 %v1688, 16
    %v2016 = vpop.permute.xlu0 %2015
    %2017 = vrot.lane.b32.xlu0 %v1689, 16
    %v2018 = vpop.permute.xlu0 %2017
    %2019 = vrot.lane.b32.xlu0 %v1690, 16
    %v2020 = vpop.permute.xlu0 %2019
    %2021 = vrot.lane.b32.xlu0 %v1691, 16
    %v2022 = vpop.permute.xlu0 %2021
    %2023 = vrot.lane.b32.xlu0 %v1692, 16
    %v2024 = vpop.permute.xlu0 %2023
    %2025 = vrot.lane.b32.xlu0 %v1693, 16
    %v2026 = vpop.permute.xlu0 %2025
    %2027 = vrot.lane.b32.xlu0 %v1694, 16
    %v2028 = vpop.permute.xlu0 %2027
    %2029 = vrot.lane.b32.xlu0 %v1695, 16
    %v2030 = vpop.permute.xlu0 %2029
    %2031 = vrot.lane.b32.xlu0 %v1696, 16
    %v2032 = vpop.permute.xlu0 %2031
    %2033 = vrot.lane.b32.xlu0 %v1697, 16
    %v2034 = vpop.permute.xlu0 %2033
    %2035 = vrot.lane.b32.xlu0 %v1698, 16
    %v2036 = vpop.permute.xlu0 %2035
    %2037 = vrot.lane.b32.xlu0 %v1699, 16
    %v2038 = vpop.permute.xlu0 %2037
    %2039 = vrot.lane.b32.xlu0 %v1700, 16
    %v2040 = vpop.permute.xlu0 %2039
    %2041 = vrot.lane.b32.xlu0 %v1701, 16
    %v2042 = vpop.permute.xlu0 %2041
    %2043 = vrot.lane.b32.xlu0 %v1702, 16
    %v2044 = vpop.permute.xlu0 %2043
    %2045 = vrot.lane.b32.xlu0 %v1703, 16
    %v2046 = vpop.permute.xlu0 %2045
    %2047 = vrot.lane.b32.xlu0 %v1704, 16
    %v2048 = vpop.permute.xlu0 %2047
    %2049 = vrot.lane.b32.xlu0 %v1705, 16
    %v2050 = vpop.permute.xlu0 %2049
    %2051 = vrot.lane.b32.xlu0 %v1706, 16
    %v2052 = vpop.permute.xlu0 %2051
    %2053 = vrot.lane.b32.xlu0 %v1707, 16
    %v2054 = vpop.permute.xlu0 %2053
    %2055 = vrot.lane.b32.xlu0 %v1708, 16
    %v2056 = vpop.permute.xlu0 %2055
    %2057 = vrot.lane.b32.xlu0 %v1709, 16
    %v2058 = vpop.permute.xlu0 %2057
    %2059 = vrot.lane.b32.xlu0 %v1710, 16
    %v2060 = vpop.permute.xlu0 %2059
    %2061 = vrot.lane.b32.xlu0 %v1711, 16
    %v2062 = vpop.permute.xlu0 %2061
    %2063 = vrot.lane.b32.xlu0 %v1712, 16
    %v2064 = vpop.permute.xlu0 %2063
    %2065 = vrot.lane.b32.xlu0 %v1713, 16
    %v2066 = vpop.permute.xlu0 %2065
    %2067 = vrot.lane.b32.xlu0 %v1714, 16
    %v2068 = vpop.permute.xlu0 %2067
    %2069 = vrot.lane.b32.xlu0 %v1715, 16
    %v2070 = vpop.permute.xlu0 %2069
    %2071 = vrot.lane.b32.xlu0 %v1716, 16
    %v2072 = vpop.permute.xlu0 %2071
    %2073 = vrot.lane.b32.xlu0 %v1717, 16
    %v2074 = vpop.permute.xlu0 %2073
    %2075 = vrot.lane.b32.xlu0 %v1718, 16
    %v2076 = vpop.permute.xlu0 %2075
    %2077 = vrot.lane.b32.xlu0 %v1719, 16
    %v2078 = vpop.permute.xlu0 %2077
    %2079 = vrot.lane.b32.xlu0 %v1720, 16
    %v2080 = vpop.permute.xlu0 %2079
    %2081 = vrot.lane.b32.xlu0 %v1721, 16
    %v2082 = vpop.permute.xlu0 %2081
    %2083 = vrot.lane.b32.xlu0 %v1722, 16
    %v2084 = vpop.permute.xlu0 %2083
    %2085 = vrot.lane.b32.xlu0 %v1723, 16
    %v2086 = vpop.permute.xlu0 %2085
    %vm2135 = vcmask 195714
    %2136 = vst.msk [vmem:[#allocation2 - $0x2] sm:$0xfc] %vm2135, %v1992
    %vm2137 = vcmask 189568
    %2138 = vst.msk [vmem:[#allocation2 + $0x6] sm:$0x3] %vm2137, %v1994
    %2139 = vst.msk [vmem:[#allocation2 + $0x6] sm:$0xfc] %vm2135, %v1996
    %2140 = vst.msk [vmem:[#allocation2 + $0xe] sm:$0x3] %vm2137, %v1998
    %2141 = vst.msk [vmem:[#allocation2 + $0xe] sm:$0xfc] %vm2135, %v2000
    %2142 = vst.msk [vmem:[#allocation2 + $0x16] sm:$0x3] %vm2137, %v2002
    %2143 = vst.msk [vmem:[#allocation2 + $0x16] sm:$0xfc] %vm2135, %v2004
    %2144 = vst.msk [vmem:[#allocation2 + $0x1e] sm:$0x3] %vm2137, %v2006
    %2145 = vst.msk [vmem:[#allocation2 + $0x1e] sm:$0xfc] %vm2135, %v2008
    %2146 = vst.msk [vmem:[#allocation2 + $0x26] sm:$0x3] %vm2137, %v2010
    %2147 = vst.msk [vmem:[#allocation2 + $0x26] sm:$0xfc] %vm2135, %v2012
    %2148 = vst.msk [vmem:[#allocation2 + $0x2e] sm:$0x3] %vm2137, %v2014
    %2149 = vst.msk [vmem:[#allocation2 + $0x2e] sm:$0xfc] %vm2135, %v2016
    %2150 = vst.msk [vmem:[#allocation2 + $0x36] sm:$0x3] %vm2137, %v2018
    %2151 = vst.msk [vmem:[#allocation2 + $0x36] sm:$0xfc] %vm2135, %v2020
    %2152 = vst.msk [vmem:[#allocation2 + $0x3e] sm:$0x3] %vm2137, %v2022
    %2153 = vst.msk [vmem:[#allocation2 + $0x3e] sm:$0xfc] %vm2135, %v2024
    %2154 = vst.msk [vmem:[#allocation2 + $0x46] sm:$0x3] %vm2137, %v2026
    %2155 = vst.msk [vmem:[#allocation2 + $0x46] sm:$0xfc] %vm2135, %v2028
    %2156 = vst.msk [vmem:[#allocation2 + $0x4e] sm:$0x3] %vm2137, %v2030
    %2157 = vst.msk [vmem:[#allocation2 + $0x4e] sm:$0xfc] %vm2135, %v2032
    %2158 = vst.msk [vmem:[#allocation2 + $0x56] sm:$0x3] %vm2137, %v2034
    %2159 = vst.msk [vmem:[#allocation2 + $0x56] sm:$0xfc] %vm2135, %v2036
    %2160 = vst.msk [vmem:[#allocation2 + $0x5e] sm:$0x3] %vm2137, %v2038
    %2161 = vst.msk [vmem:[#allocation2 + $0x5e] sm:$0xfc] %vm2135, %v2040
    %2162 = vst.msk [vmem:[#allocation2 + $0x66] sm:$0x3] %vm2137, %v2042
    %2163 = vst.msk [vmem:[#allocation2 + $0x66] sm:$0xfc] %vm2135, %v2044
    %2164 = vst.msk [vmem:[#allocation2 + $0x6e] sm:$0x3] %vm2137, %v2046
    %2165 = vst.msk [vmem:[#allocation2 + $0x6e] sm:$0xfc] %vm2135, %v2048
    %2166 = vst.msk [vmem:[#allocation2 + $0x76] sm:$0x3] %vm2137, %v2050
    %2167 = vst.msk [vmem:[#allocation2 + $0x76] sm:$0xfc] %vm2135, %v2052
    %2168 = vst.msk [vmem:[#allocation2 + $0x7e] sm:$0x3] %vm2137, %v2054
    %2169 = vst.msk [vmem:[#allocation2 + $0x7e] sm:$0xfc] %vm2135, %v2056
    %2170 = vst.msk [vmem:[#allocation2 + $0x86] sm:$0x3] %vm2137, %v2058
    %2171 = vst.msk [vmem:[#allocation2 + $0x86] sm:$0xfc] %vm2135, %v2060
    %2172 = vst.msk [vmem:[#allocation2 + $0x8e] sm:$0x3] %vm2137, %v2062
    %2173 = vst.msk [vmem:[#allocation2 + $0x8e] sm:$0xfc] %vm2135, %v2064
    %2174 = vst.msk [vmem:[#allocation2 + $0x96] sm:$0x3] %vm2137, %v2066
    %2175 = vst.msk [vmem:[#allocation2 + $0x96] sm:$0xfc] %vm2135, %v2068
    %2176 = vst.msk [vmem:[#allocation2 + $0x9e] sm:$0x3] %vm2137, %v2070
    %2177 = vst.msk [vmem:[#allocation2 + $0x9e] sm:$0xfc] %vm2135, %v2072
    %2178 = vst.msk [vmem:[#allocation2 + $0xa6] sm:$0x3] %vm2137, %v2074
    %2179 = vst.msk [vmem:[#allocation2 + $0xa6] sm:$0xfc] %vm2135, %v2076
    %2180 = vst.msk [vmem:[#allocation2 + $0xae] sm:$0x3] %vm2137, %v2078
    %2181 = vst.msk [vmem:[#allocation2 + $0xae] sm:$0xfc] %vm2135, %v2080
    %2182 = vst.msk [vmem:[#allocation2 + $0xb6] sm:$0x3] %vm2137, %v2082
    %2183 = vst.msk [vmem:[#allocation2 + $0xb6] sm:$0xfc] %vm2135, %v2084
    %2184 = vst.msk [vmem:[#allocation2 + $0xbe] sm:$0x3] %vm2137, %v2086
    %2185 = vrot.lane.b32.xlu0 %v1676, 24
    %v2186 = vpop.permute.xlu0 %2185
    %2187 = vrot.lane.b32.xlu0 %v1677, 24
    %v2188 = vpop.permute.xlu0 %2187
    %2189 = vrot.lane.b32.xlu0 %v1678, 24
    %v2190 = vpop.permute.xlu0 %2189
    %2191 = vrot.lane.b32.xlu0 %v1679, 24
    %v2192 = vpop.permute.xlu0 %2191
    %2193 = vrot.lane.b32.xlu0 %v1680, 24
    %v2194 = vpop.permute.xlu0 %2193
    %2195 = vrot.lane.b32.xlu0 %v1681, 24
    %v2196 = vpop.permute.xlu0 %2195
    %2197 = vrot.lane.b32.xlu0 %v1682, 24
    %v2198 = vpop.permute.xlu0 %2197
    %2199 = vrot.lane.b32.xlu0 %v1683, 24
    %v2200 = vpop.permute.xlu0 %2199
    %2201 = vrot.lane.b32.xlu0 %v1684, 24
    %v2202 = vpop.permute.xlu0 %2201
    %2203 = vrot.lane.b32.xlu0 %v1685, 24
    %v2204 = vpop.permute.xlu0 %2203
    %2205 = vrot.lane.b32.xlu0 %v1686, 24
    %v2206 = vpop.permute.xlu0 %2205
    %2207 = vrot.lane.b32.xlu0 %v1687, 24
    %v2208 = vpop.permute.xlu0 %2207
    %2209 = vrot.lane.b32.xlu0 %v1688, 24
    %v2210 = vpop.permute.xlu0 %2209
    %2211 = vrot.lane.b32.xlu0 %v1689, 24
    %v2212 = vpop.permute.xlu0 %2211
    %2213 = vrot.lane.b32.xlu0 %v1690, 24
    %v2214 = vpop.permute.xlu0 %2213
    %2215 = vrot.lane.b32.xlu0 %v1691, 24
    %v2216 = vpop.permute.xlu0 %2215
    %2217 = vrot.lane.b32.xlu0 %v1692, 24
    %v2218 = vpop.permute.xlu0 %2217
    %2219 = vrot.lane.b32.xlu0 %v1693, 24
    %v2220 = vpop.permute.xlu0 %2219
    %2221 = vrot.lane.b32.xlu0 %v1694, 24
    %v2222 = vpop.permute.xlu0 %2221
    %2223 = vrot.lane.b32.xlu0 %v1695, 24
    %v2224 = vpop.permute.xlu0 %2223
    %2225 = vrot.lane.b32.xlu0 %v1696, 24
    %v2226 = vpop.permute.xlu0 %2225
    %2227 = vrot.lane.b32.xlu0 %v1697, 24
    %v2228 = vpop.permute.xlu0 %2227
    %2229 = vrot.lane.b32.xlu0 %v1698, 24
    %v2230 = vpop.permute.xlu0 %2229
    %2231 = vrot.lane.b32.xlu0 %v1699, 24
    %v2232 = vpop.permute.xlu0 %2231
    %2233 = vrot.lane.b32.xlu0 %v1700, 24
    %v2234 = vpop.permute.xlu0 %2233
    %2235 = vrot.lane.b32.xlu0 %v1701, 24
    %v2236 = vpop.permute.xlu0 %2235
    %2237 = vrot.lane.b32.xlu0 %v1702, 24
    %v2238 = vpop.permute.xlu0 %2237
    %2239 = vrot.lane.b32.xlu0 %v1703, 24
    %v2240 = vpop.permute.xlu0 %2239
    %2241 = vrot.lane.b32.xlu0 %v1704, 24
    %v2242 = vpop.permute.xlu0 %2241
    %2243 = vrot.lane.b32.xlu0 %v1705, 24
    %v2244 = vpop.permute.xlu0 %2243
    %2245 = vrot.lane.b32.xlu0 %v1706, 24
    %v2246 = vpop.permute.xlu0 %2245
    %2247 = vrot.lane.b32.xlu0 %v1707, 24
    %v2248 = vpop.permute.xlu0 %2247
    %2249 = vrot.lane.b32.xlu0 %v1708, 24
    %v2250 = vpop.permute.xlu0 %2249
    %2251 = vrot.lane.b32.xlu0 %v1709, 24
    %v2252 = vpop.permute.xlu0 %2251
    %2253 = vrot.lane.b32.xlu0 %v1710, 24
    %v2254 = vpop.permute.xlu0 %2253
    %2255 = vrot.lane.b32.xlu0 %v1711, 24
    %v2256 = vpop.permute.xlu0 %2255
    %2257 = vrot.lane.b32.xlu0 %v1712, 24
    %v2258 = vpop.permute.xlu0 %2257
    %2259 = vrot.lane.b32.xlu0 %v1713, 24
    %v2260 = vpop.permute.xlu0 %2259
    %2261 = vrot.lane.b32.xlu0 %v1714, 24
    %v2262 = vpop.permute.xlu0 %2261
    %2263 = vrot.lane.b32.xlu0 %v1715, 24
    %v2264 = vpop.permute.xlu0 %2263
    %2265 = vrot.lane.b32.xlu0 %v1716, 24
    %v2266 = vpop.permute.xlu0 %2265
    %2267 = vrot.lane.b32.xlu0 %v1717, 24
    %v2268 = vpop.permute.xlu0 %2267
    %2269 = vrot.lane.b32.xlu0 %v1718, 24
    %v2270 = vpop.permute.xlu0 %2269
    %2271 = vrot.lane.b32.xlu0 %v1719, 24
    %v2272 = vpop.permute.xlu0 %2271
    %2273 = vrot.lane.b32.xlu0 %v1720, 24
    %v2274 = vpop.permute.xlu0 %2273
    %2275 = vrot.lane.b32.xlu0 %v1721, 24
    %v2276 = vpop.permute.xlu0 %2275
    %2277 = vrot.lane.b32.xlu0 %v1722, 24
    %v2278 = vpop.permute.xlu0 %2277
    %2279 = vrot.lane.b32.xlu0 %v1723, 24
    %v2280 = vpop.permute.xlu0 %2279
    %vm2329 = vcmask 261315
    %2330 = vst.msk [vmem:[#allocation2 - $0x3] sm:$0xf8] %vm2329, %v2186
    %vm2331 = vcmask 256192
    %2332 = vst.msk [vmem:[#allocation2 + $0x5] sm:$0x7] %vm2331, %v2188
    %2333 = vst.msk [vmem:[#allocation2 + $0x5] sm:$0xf8] %vm2329, %v2190
    %2334 = vst.msk [vmem:[#allocation2 + $0xd] sm:$0x7] %vm2331, %v2192
    %2335 = vst.msk [vmem:[#allocation2 + $0xd] sm:$0xf8] %vm2329, %v2194
    %2336 = vst.msk [vmem:[#allocation2 + $0x15] sm:$0x7] %vm2331, %v2196
    %2337 = vst.msk [vmem:[#allocation2 + $0x15] sm:$0xf8] %vm2329, %v2198
    %2338 = vst.msk [vmem:[#allocation2 + $0x1d] sm:$0x7] %vm2331, %v2200
    %2339 = vst.msk [vmem:[#allocation2 + $0x1d] sm:$0xf8] %vm2329, %v2202
    %2340 = vst.msk [vmem:[#allocation2 + $0x25] sm:$0x7] %vm2331, %v2204
    %2341 = vst.msk [vmem:[#allocation2 + $0x25] sm:$0xf8] %vm2329, %v2206
    %2342 = vst.msk [vmem:[#allocation2 + $0x2d] sm:$0x7] %vm2331, %v2208
    %2343 = vst.msk [vmem:[#allocation2 + $0x2d] sm:$0xf8] %vm2329, %v2210
    %2344 = vst.msk [vmem:[#allocation2 + $0x35] sm:$0x7] %vm2331, %v2212
    %2345 = vst.msk [vmem:[#allocation2 + $0x35] sm:$0xf8] %vm2329, %v2214
    %2346 = vst.msk [vmem:[#allocation2 + $0x3d] sm:$0x7] %vm2331, %v2216
    %2347 = vst.msk [vmem:[#allocation2 + $0x3d] sm:$0xf8] %vm2329, %v2218
    %2348 = vst.msk [vmem:[#allocation2 + $0x45] sm:$0x7] %vm2331, %v2220
    %2349 = vst.msk [vmem:[#allocation2 + $0x45] sm:$0xf8] %vm2329, %v2222
    %2350 = vst.msk [vmem:[#allocation2 + $0x4d] sm:$0x7] %vm2331, %v2224
    %2351 = vst.msk [vmem:[#allocation2 + $0x4d] sm:$0xf8] %vm2329, %v2226
    %2352 = vst.msk [vmem:[#allocation2 + $0x55] sm:$0x7] %vm2331, %v2228
    %2353 = vst.msk [vmem:[#allocation2 + $0x55] sm:$0xf8] %vm2329, %v2230
    %2354 = vst.msk [vmem:[#allocation2 + $0x5d] sm:$0x7] %vm2331, %v2232
    %2355 = vst.msk [vmem:[#allocation2 + $0x5d] sm:$0xf8] %vm2329, %v2234
    %2356 = vst.msk [vmem:[#allocation2 + $0x65] sm:$0x7] %vm2331, %v2236
    %2357 = vst.msk [vmem:[#allocation2 + $0x65] sm:$0xf8] %vm2329, %v2238
    %2358 = vst.msk [vmem:[#allocation2 + $0x6d] sm:$0x7] %vm2331, %v2240
    %2359 = vst.msk [vmem:[#allocation2 + $0x6d] sm:$0xf8] %vm2329, %v2242
    %2360 = vst.msk [vmem:[#allocation2 + $0x75] sm:$0x7] %vm2331, %v2244
    %2361 = vst.msk [vmem:[#allocation2 + $0x75] sm:$0xf8] %vm2329, %v2246
    %2362 = vst.msk [vmem:[#allocation2 + $0x7d] sm:$0x7] %vm2331, %v2248
    %2363 = vst.msk [vmem:[#allocation2 + $0x7d] sm:$0xf8] %vm2329, %v2250
    %2364 = vst.msk [vmem:[#allocation2 + $0x85] sm:$0x7] %vm2331, %v2252
    %2365 = vst.msk [vmem:[#allocation2 + $0x85] sm:$0xf8] %vm2329, %v2254
    %2366 = vst.msk [vmem:[#allocation2 + $0x8d] sm:$0x7] %vm2331, %v2256
    %2367 = vst.msk [vmem:[#allocation2 + $0x8d] sm:$0xf8] %vm2329, %v2258
    %2368 = vst.msk [vmem:[#allocation2 + $0x95] sm:$0x7] %vm2331, %v2260
    %2369 = vst.msk [vmem:[#allocation2 + $0x95] sm:$0xf8] %vm2329, %v2262
    %2370 = vst.msk [vmem:[#allocation2 + $0x9d] sm:$0x7] %vm2331, %v2264
    %2371 = vst.msk [vmem:[#allocation2 + $0x9d] sm:$0xf8] %vm2329, %v2266
    %2372 = vst.msk [vmem:[#allocation2 + $0xa5] sm:$0x7] %vm2331, %v2268
    %2373 = vst.msk [vmem:[#allocation2 + $0xa5] sm:$0xf8] %vm2329, %v2270
    %2374 = vst.msk [vmem:[#allocation2 + $0xad] sm:$0x7] %vm2331, %v2272
    %2375 = vst.msk [vmem:[#allocation2 + $0xad] sm:$0xf8] %vm2329, %v2274
    %2376 = vst.msk [vmem:[#allocation2 + $0xb5] sm:$0x7] %vm2331, %v2276
    %2377 = vst.msk [vmem:[#allocation2 + $0xb5] sm:$0xf8] %vm2329, %v2278
    %2378 = vst.msk [vmem:[#allocation2 + $0xbd] sm:$0x7] %vm2331, %v2280
    %2379 = vrot.lane.b32.xlu0 %v1676, 32
    %v2380 = vpop.permute.xlu0 %2379
    %2381 = vrot.lane.b32.xlu0 %v1677, 32
    %v2382 = vpop.permute.xlu0 %2381
    %2383 = vrot.lane.b32.xlu0 %v1678, 32
    %v2384 = vpop.permute.xlu0 %2383
    %2385 = vrot.lane.b32.xlu0 %v1679, 32
    %v2386 = vpop.permute.xlu0 %2385
    %2387 = vrot.lane.b32.xlu0 %v1680, 32
    %v2388 = vpop.permute.xlu0 %2387
    %2389 = vrot.lane.b32.xlu0 %v1681, 32
    %v2390 = vpop.permute.xlu0 %2389
    %2391 = vrot.lane.b32.xlu0 %v1682, 32
    %v2392 = vpop.permute.xlu0 %2391
    %2393 = vrot.lane.b32.xlu0 %v1683, 32
    %v2394 = vpop.permute.xlu0 %2393
    %2395 = vrot.lane.b32.xlu0 %v1684, 32
    %v2396 = vpop.permute.xlu0 %2395
    %2397 = vrot.lane.b32.xlu0 %v1685, 32
    %v2398 = vpop.permute.xlu0 %2397
    %2399 = vrot.lane.b32.xlu0 %v1686, 32
    %v2400 = vpop.permute.xlu0 %2399
    %2401 = vrot.lane.b32.xlu0 %v1687, 32
    %v2402 = vpop.permute.xlu0 %2401
    %2403 = vrot.lane.b32.xlu0 %v1688, 32
    %v2404 = vpop.permute.xlu0 %2403
    %2405 = vrot.lane.b32.xlu0 %v1689, 32
    %v2406 = vpop.permute.xlu0 %2405
    %2407 = vrot.lane.b32.xlu0 %v1690, 32
    %v2408 = vpop.permute.xlu0 %2407
    %2409 = vrot.lane.b32.xlu0 %v1691, 32
    %v2410 = vpop.permute.xlu0 %2409
    %2411 = vrot.lane.b32.xlu0 %v1692, 32
    %v2412 = vpop.permute.xlu0 %2411
    %2413 = vrot.lane.b32.xlu0 %v1693, 32
    %v2414 = vpop.permute.xlu0 %2413
    %2415 = vrot.lane.b32.xlu0 %v1694, 32
    %v2416 = vpop.permute.xlu0 %2415
    %2417 = vrot.lane.b32.xlu0 %v1695, 32
    %v2418 = vpop.permute.xlu0 %2417
    %2419 = vrot.lane.b32.xlu0 %v1696, 32
    %v2420 = vpop.permute.xlu0 %2419
    %2421 = vrot.lane.b32.xlu0 %v1697, 32
    %v2422 = vpop.permute.xlu0 %2421
    %2423 = vrot.lane.b32.xlu0 %v1698, 32
    %v2424 = vpop.permute.xlu0 %2423
    %2425 = vrot.lane.b32.xlu0 %v1699, 32
    %v2426 = vpop.permute.xlu0 %2425
    %2427 = vrot.lane.b32.xlu0 %v1700, 32
    %v2428 = vpop.permute.xlu0 %2427
    %2429 = vrot.lane.b32.xlu0 %v1701, 32
    %v2430 = vpop.permute.xlu0 %2429
    %2431 = vrot.lane.b32.xlu0 %v1702, 32
    %v2432 = vpop.permute.xlu0 %2431
    %2433 = vrot.lane.b32.xlu0 %v1703, 32
    %v2434 = vpop.permute.xlu0 %2433
    %2435 = vrot.lane.b32.xlu0 %v1704, 32
    %v2436 = vpop.permute.xlu0 %2435
    %2437 = vrot.lane.b32.xlu0 %v1705, 32
    %v2438 = vpop.permute.xlu0 %2437
    %2439 = vrot.lane.b32.xlu0 %v1706, 32
    %v2440 = vpop.permute.xlu0 %2439
    %2441 = vrot.lane.b32.xlu0 %v1707, 32
    %v2442 = vpop.permute.xlu0 %2441
    %2443 = vrot.lane.b32.xlu0 %v1708, 32
    %v2444 = vpop.permute.xlu0 %2443
    %2445 = vrot.lane.b32.xlu0 %v1709, 32
    %v2446 = vpop.permute.xlu0 %2445
    %2447 = vrot.lane.b32.xlu0 %v1710, 32
    %v2448 = vpop.permute.xlu0 %2447
    %2449 = vrot.lane.b32.xlu0 %v1711, 32
    %v2450 = vpop.permute.xlu0 %2449
    %2451 = vrot.lane.b32.xlu0 %v1712, 32
    %v2452 = vpop.permute.xlu0 %2451
    %2453 = vrot.lane.b32.xlu0 %v1713, 32
    %v2454 = vpop.permute.xlu0 %2453
    %2455 = vrot.lane.b32.xlu0 %v1714, 32
    %v2456 = vpop.permute.xlu0 %2455
    %2457 = vrot.lane.b32.xlu0 %v1715, 32
    %v2458 = vpop.permute.xlu0 %2457
    %2459 = vrot.lane.b32.xlu0 %v1716, 32
    %v2460 = vpop.permute.xlu0 %2459
    %2461 = vrot.lane.b32.xlu0 %v1717, 32
    %v2462 = vpop.permute.xlu0 %2461
    %2463 = vrot.lane.b32.xlu0 %v1718, 32
    %v2464 = vpop.permute.xlu0 %2463
    %2465 = vrot.lane.b32.xlu0 %v1719, 32
    %v2466 = vpop.permute.xlu0 %2465
    %2467 = vrot.lane.b32.xlu0 %v1720, 32
    %v2468 = vpop.permute.xlu0 %2467
    %2469 = vrot.lane.b32.xlu0 %v1721, 32
    %v2470 = vpop.permute.xlu0 %2469
    %2471 = vrot.lane.b32.xlu0 %v1722, 32
    %v2472 = vpop.permute.xlu0 %2471
    %2473 = vrot.lane.b32.xlu0 %v1723, 32
    %v2474 = vpop.permute.xlu0 %2473
    %vm2523 = vcmask 326916
    %2524 = vst.msk [vmem:[#allocation2 - $0x4] sm:$0xf0] %vm2523, %v2380
    %vm2525 = vcmask 322816
    %2526 = vst.msk [vmem:[#allocation2 + $0x4] sm:$0xf] %vm2525, %v2382
    %2527 = vst.msk [vmem:[#allocation2 + $0x4] sm:$0xf0] %vm2523, %v2384
    %2528 = vst.msk [vmem:[#allocation2 + $0xc] sm:$0xf] %vm2525, %v2386
    %2529 = vst.msk [vmem:[#allocation2 + $0xc] sm:$0xf0] %vm2523, %v2388
    %2530 = vst.msk [vmem:[#allocation2 + $0x14] sm:$0xf] %vm2525, %v2390
    %2531 = vst.msk [vmem:[#allocation2 + $0x14] sm:$0xf0] %vm2523, %v2392
    %2532 = vst.msk [vmem:[#allocation2 + $0x1c] sm:$0xf] %vm2525, %v2394
    %2533 = vst.msk [vmem:[#allocation2 + $0x1c] sm:$0xf0] %vm2523, %v2396
    %2534 = vst.msk [vmem:[#allocation2 + $0x24] sm:$0xf] %vm2525, %v2398
    %2535 = vst.msk [vmem:[#allocation2 + $0x24] sm:$0xf0] %vm2523, %v2400
    %2536 = vst.msk [vmem:[#allocation2 + $0x2c] sm:$0xf] %vm2525, %v2402
    %2537 = vst.msk [vmem:[#allocation2 + $0x2c] sm:$0xf0] %vm2523, %v2404
    %2538 = vst.msk [vmem:[#allocation2 + $0x34] sm:$0xf] %vm2525, %v2406
    %2539 = vst.msk [vmem:[#allocation2 + $0x34] sm:$0xf0] %vm2523, %v2408
    %2540 = vst.msk [vmem:[#allocation2 + $0x3c] sm:$0xf] %vm2525, %v2410
    %2541 = vst.msk [vmem:[#allocation2 + $0x3c] sm:$0xf0] %vm2523, %v2412
    %2542 = vst.msk [vmem:[#allocation2 + $0x44] sm:$0xf] %vm2525, %v2414
    %2543 = vst.msk [vmem:[#allocation2 + $0x44] sm:$0xf0] %vm2523, %v2416
    %2544 = vst.msk [vmem:[#allocation2 + $0x4c] sm:$0xf] %vm2525, %v2418
    %2545 = vst.msk [vmem:[#allocation2 + $0x4c] sm:$0xf0] %vm2523, %v2420
    %2546 = vst.msk [vmem:[#allocation2 + $0x54] sm:$0xf] %vm2525, %v2422
    %2547 = vst.msk [vmem:[#allocation2 + $0x54] sm:$0xf0] %vm2523, %v2424
    %2548 = vst.msk [vmem:[#allocation2 + $0x5c] sm:$0xf] %vm2525, %v2426
    %2549 = vst.msk [vmem:[#allocation2 + $0x5c] sm:$0xf0] %vm2523, %v2428
    %2550 = vst.msk [vmem:[#allocation2 + $0x64] sm:$0xf] %vm2525, %v2430
    %2551 = vst.msk [vmem:[#allocation2 + $0x64] sm:$0xf0] %vm2523, %v2432
    %2552 = vst.msk [vmem:[#allocation2 + $0x6c] sm:$0xf] %vm2525, %v2434
    %2553 = vst.msk [vmem:[#allocation2 + $0x6c] sm:$0xf0] %vm2523, %v2436
    %2554 = vst.msk [vmem:[#allocation2 + $0x74] sm:$0xf] %vm2525, %v2438
    %2555 = vst.msk [vmem:[#allocation2 + $0x74] sm:$0xf0] %vm2523, %v2440
    %2556 = vst.msk [vmem:[#allocation2 + $0x7c] sm:$0xf] %vm2525, %v2442
    %2557 = vst.msk [vmem:[#allocation2 + $0x7c] sm:$0xf0] %vm2523, %v2444
    %2558 = vst.msk [vmem:[#allocation2 + $0x84] sm:$0xf] %vm2525, %v2446
    %2559 = vst.msk [vmem:[#allocation2 + $0x84] sm:$0xf0] %vm2523, %v2448
    %2560 = vst.msk [vmem:[#allocation2 + $0x8c] sm:$0xf] %vm2525, %v2450
    %2561 = vst.msk [vmem:[#allocation2 + $0x8c] sm:$0xf0] %vm2523, %v2452
    %2562 = vst.msk [vmem:[#allocation2 + $0x94] sm:$0xf] %vm2525, %v2454
    %2563 = vst.msk [vmem:[#allocation2 + $0x94] sm:$0xf0] %vm2523, %v2456
    %2564 = vst.msk [vmem:[#allocation2 + $0x9c] sm:$0xf] %vm2525, %v2458
    %2565 = vst.msk [vmem:[#allocation2 + $0x9c] sm:$0xf0] %vm2523, %v2460
    %2566 = vst.msk [vmem:[#allocation2 + $0xa4] sm:$0xf] %vm2525, %v2462
    %2567 = vst.msk [vmem:[#allocation2 + $0xa4] sm:$0xf0] %vm2523, %v2464
    %2568 = vst.msk [vmem:[#allocation2 + $0xac] sm:$0xf] %vm2525, %v2466
    %2569 = vst.msk [vmem:[#allocation2 + $0xac] sm:$0xf0] %vm2523, %v2468
    %2570 = vst.msk [vmem:[#allocation2 + $0xb4] sm:$0xf] %vm2525, %v2470
    %2571 = vst.msk [vmem:[#allocation2 + $0xb4] sm:$0xf0] %vm2523, %v2472
    %2572 = vst.msk [vmem:[#allocation2 + $0xbc] sm:$0xf] %vm2525, %v2474
    %v2573 = vld [vmem:[#allocation2] sm:$0xff]
    %v2574 = vld [vmem:[#allocation2 + $0x8] sm:$0xff]
    %v2575 = vld [vmem:[#allocation2 + $0x10] sm:$0xff]
    %v2576 = vld [vmem:[#allocation2 + $0x18] sm:$0xff]
    %v2577 = vld [vmem:[#allocation2 + $0x20] sm:$0xff]
    %v2578 = vld [vmem:[#allocation2 + $0x28] sm:$0xff]
    %v2579 = vld [vmem:[#allocation2 + $0x30] sm:$0xff]
    %v2580 = vld [vmem:[#allocation2 + $0x38] sm:$0xff]
    %v2581 = vld [vmem:[#allocation2 + $0x60] sm:$0xff]
    %v2582 = vld [vmem:[#allocation2 + $0x68] sm:$0xff]
    %v2583 = vld [vmem:[#allocation2 + $0x70] sm:$0xff]
    %v2584 = vld [vmem:[#allocation2 + $0x78] sm:$0xff]
    %v2585 = vld [vmem:[#allocation2 + $0x80] sm:$0xff]
    %v2586 = vld [vmem:[#allocation2 + $0x88] sm:$0xff]
    %v2587 = vld [vmem:[#allocation2 + $0x90] sm:$0xff]
    %v2588 = vld [vmem:[#allocation2 + $0x98] sm:$0xff]
    %v2589 = vpack.c.bf16 %v2574, %v2573
    %v2590 = vpack.c.bf16 %v2576, %v2575
    %v2591 = vpack.c.bf16 %v2578, %v2577
    %v2592 = vpack.c.bf16 %v2580, %v2579
    %v2593 = vpack.c.bf16 %v2582, %v2581
    %v2594 = vpack.c.bf16 %v2584, %v2583
    %v2595 = vpack.c.bf16 %v2586, %v2585
    %v2596 = vpack.c.bf16 %v2588, %v2587
    %v2597 = vld [vmem:[%s3] sm:$0xf]
    %v2598 = vld [vmem:[%s3 + $0x4] sm:$0xf]
    %v2599 = vld [vmem:[%s3 + $0x8] sm:$0xf]
    %v2600 = vld [vmem:[%s3 + $0xc] sm:$0xf]
    %v2601 = vld [vmem:[%s3 + $0x10] sm:$0xf]
    %s2602 = scalar_lea.vmem [#allocation2], 8
    %v2603 = vld [vmem:[%s2602] sm:$0xff]
    %v2604 = vld [vmem:[%s2602 + $0x8] sm:$0xff]
    %v2605 = vld [vmem:[%s2602 + $0x10] sm:$0xff]
    %v2606 = vld [vmem:[%s2602 + $0x18] sm:$0xff]
    %v2607 = vld [vmem:[%s2602 + $0x20] sm:$0xff]
    %v2608 = vld [vmem:[%s2602 + $0x28] sm:$0xff]
    %v2609 = vld [vmem:[%s2602 + $0x30] sm:$0xff]
    %v2610 = vld [vmem:[%s2602 + $0x38] sm:$0xff]
    %v2611 = vld [vmem:[%s2602 + $0x60] sm:$0xff]
    %v2612 = vld [vmem:[%s2602 + $0x68] sm:$0xff]
    %v2613 = vld [vmem:[%s2602 + $0x70] sm:$0xff]
    %v2614 = vld [vmem:[%s2602 + $0x78] sm:$0xff]
    %v2615 = vld [vmem:[%s2602 + $0x80] sm:$0xff]
    %v2616 = vld [vmem:[%s2602 + $0x88] sm:$0xff]
    %v2617 = vld [vmem:[%s2602 + $0x90] sm:$0xff]
    %v2618 = vld [vmem:[%s2602 + $0x98] sm:$0xff]
    %v2619 = vpack.c.bf16 %v2604, %v2603
    %v2620 = vpack.c.bf16 %v2606, %v2605
    %v2621 = vpack.c.bf16 %v2608, %v2607
    %v2622 = vpack.c.bf16 %v2610, %v2609
    %v2623 = vpack.c.bf16 %v2612, %v2611
    %v2624 = vpack.c.bf16 %v2614, %v2613
    %v2625 = vpack.c.bf16 %v2616, %v2615
    %v2626 = vpack.c.bf16 %v2618, %v2617
    %s2627 = scalar_lea.vmem %s3, 20
    %v2628 = vld [vmem:[%s2627] sm:$0xf]
    %v2629 = vld [vmem:[%s2627 + $0x4] sm:$0xf]
    %v2630 = vld [vmem:[%s2627 + $0x8] sm:$0xf]
    %v2631 = vld [vmem:[%s2627 + $0xc] sm:$0xf]
    %v2632 = vld [vmem:[%s2627 + $0x10] sm:$0xf]
    %v2638 = vunpack.c.l.b16 %v2628
    %v2639 = vunpack.c.l.b16 %v2629
    %v2640 = vunpack.c.l.b16 %v2630
    %v2641 = vunpack.c.l.b16 %v2631
    %v2642 = vunpack.c.l.b16 %v2632
    %v2643 = vpack.c.b16 %v2639, %v2638
    %v2644 = vpack.c.b16 %v2641, %v2640
    %v2645 = vpack.c.b16 %v2642, %v2642
    %vm2648 = vcmask 326656
    %v2650 = vsel %vm2648, %v2619, 0
    %v2653 = vsel %vm2648, %v2620, 0
    %v2656 = vsel %vm2648, %v2621, 0
    %v2659 = vsel %vm2648, %v2622, 0
    %v2662 = vsel %vm2648, %v2623, 0
    %v2665 = vsel %vm2648, %v2624, 0
    %v2668 = vsel %vm2648, %v2625, 0
    %v2671 = vsel %vm2648, %v2626, 0
    %v2674 = vsel %vm1507, %v2645, 0
    %2676 = vmatprep.subr.bf16.mxu0 0
    %2677 = vmatpush1.bf16.msra.mxu0 0
    %2678 = vmatprep.subr.bf16.mxu0 0
    %2679 = vmatpush1.bf16.msra.mxu0 0
    %2680 = vmatprep.subr.bf16.mxu0 0
    %2681 = vmatpush1.bf16.msra.mxu0 0
    %2682 = vmatprep.subr.bf16.mxu0 0
    %2683 = vmatpush1.bf16.msra.mxu0 0
    %2684 = vmatprep.subr.bf16.mxu0 0
    %2685 = vmatpush1.bf16.msra.mxu0 0
    %2686 = vmatprep.subr.bf16.mxu0 0
    %2687 = vmatpush1.bf16.msra.mxu0 %v2674
    %2688 = vmatprep.subr.bf16.mxu0 0
    %2689 = vmatpush1.bf16.msra.mxu0 %v2644
    %2690 = vmatprep.subr.bf16.mxu0 0
    %2691 = vmatpush1.bf16.msra.mxu0 %v2643
    %2692 = vmatprep.subr.bf16.mxu0 0
    %2693 = vmatpush2.bf16.msra.mxu0 0
    %2694 = vmatprep.subr.bf16.mxu0 0
    %2695 = vmatpush2.bf16.msra.mxu0 0
    %2696 = vmatprep.subr.bf16.mxu0 0
    %2697 = vmatpush2.bf16.msra.mxu0 0
    %2698 = vmatprep.subr.bf16.mxu0 0
    %2699 = vmatpush2.bf16.msra.mxu0 0
    %2700 = vmatprep.subr.bf16.mxu0 0
    %2701 = vmatpush2.bf16.msra.mxu0 0
    %2702 = vmatprep.subr.bf16.mxu0 0
    %2703 = vmatpush2.bf16.msra.mxu0 0
    %2704 = vmatprep.subr.bf16.mxu0 0
    %2705 = vmatpush2.bf16.msra.mxu0 0
    %2706 = vmatprep.subr.bf16.mxu0 0
    %2707 = vmatpush2.bf16.msra.mxu0 0
    %2708 = vmatprep.mubr.bf16.mxu0 0
    %2709 = vmatmul.mubr.bf16.gmra.mxu0 %v2650
    %v2710 = vpop.f32.mrf.mxu0
    %v2711 = vadd.f32 0.0, %v2710
    %v2712 = vpop.f32.mrf.mxu0
    %v2713 = vpop.f32.mrf.mxu0
    %v2714 = vadd.f32 0.0, %v2713
    %v2715 = vpop.f32.mrf.mxu0
    %2716 = vmatprep.mubr.bf16.mxu0 0
    %2717 = vmatmul.mubr.bf16.gmra.mxu0 %v2653
    %v2718 = vpop.f32.mrf.mxu0
    %v2719 = vadd.f32 0.0, %v2718
    %v2720 = vpop.f32.mrf.mxu0
    %v2721 = vpop.f32.mrf.mxu0
    %v2722 = vadd.f32 0.0, %v2721
    %v2723 = vpop.f32.mrf.mxu0
    %2724 = vmatprep.mubr.bf16.mxu0 0
    %2725 = vmatmul.mubr.bf16.gmra.mxu0 %v2656
    %v2726 = vpop.f32.mrf.mxu0
    %v2727 = vadd.f32 0.0, %v2726
    %v2728 = vpop.f32.mrf.mxu0
    %v2729 = vpop.f32.mrf.mxu0
    %v2730 = vadd.f32 0.0, %v2729
    %v2731 = vpop.f32.mrf.mxu0
    %2732 = vmatprep.mubr.bf16.mxu0 0
    %2733 = vmatmul.mubr.bf16.gmra.mxu0 %v2659
    %v2734 = vpop.f32.mrf.mxu0
    %v2735 = vadd.f32 0.0, %v2734
    %v2736 = vpop.f32.mrf.mxu0
    %v2737 = vpop.f32.mrf.mxu0
    %v2738 = vadd.f32 0.0, %v2737
    %v2739 = vpop.f32.mrf.mxu0
    %2740 = vmatprep.mubr.bf16.mxu0 0
    %2741 = vmatmul.mubr.bf16.gmra.mxu0 %v2662
    %v2742 = vpop.f32.mrf.mxu0
    %v2743 = vadd.f32 0.0, %v2742
    %v2744 = vpop.f32.mrf.mxu0
    %v2745 = vpop.f32.mrf.mxu0
    %v2746 = vadd.f32 0.0, %v2745
    %v2747 = vpop.f32.mrf.mxu0
    %2748 = vmatprep.mubr.bf16.mxu0 0
    %2749 = vmatmul.mubr.bf16.gmra.mxu0 %v2665
    %v2750 = vpop.f32.mrf.mxu0
    %v2751 = vadd.f32 0.0, %v2750
    %v2752 = vpop.f32.mrf.mxu0
    %v2753 = vpop.f32.mrf.mxu0
    %v2754 = vadd.f32 0.0, %v2753
    %v2755 = vpop.f32.mrf.mxu0
    %2756 = vmatprep.mubr.bf16.mxu0 0
    %2757 = vmatmul.mubr.bf16.gmra.mxu0 %v2668
    %v2758 = vpop.f32.mrf.mxu0
    %v2759 = vadd.f32 0.0, %v2758
    %v2760 = vpop.f32.mrf.mxu0
    %v2761 = vpop.f32.mrf.mxu0
    %v2762 = vadd.f32 0.0, %v2761
    %v2763 = vpop.f32.mrf.mxu0
    %2764 = vmatprep.mubr.bf16.mxu0 0
    %2765 = vmatmul.mubr.bf16.gmra.mxu0 %v2671
    %v2766 = vpop.f32.mrf.mxu0
    %v2767 = vadd.f32 0.0, %v2766
    %v2768 = vpop.f32.mrf.mxu0
    %v2769 = vpop.f32.mrf.mxu0
    %v2770 = vadd.f32 0.0, %v2769
    %v2771 = vpop.f32.mrf.mxu0
    %2772 = vdwg.mxu0
    %v2778 = vunpack.c.l.b16 %v2597
    %v2779 = vunpack.c.l.b16 %v2598
    %v2780 = vunpack.c.l.b16 %v2599
    %v2781 = vunpack.c.l.b16 %v2600
    %v2782 = vunpack.c.l.b16 %v2601
    %v2783 = vpack.c.b16 %v2779, %v2778
    %v2784 = vpack.c.b16 %v2781, %v2780
    %v2785 = vpack.c.b16 %v2782, %v2782
    %v2789 = vsel %vm2648, %v2589, 0
    %v2792 = vsel %vm2648, %v2590, 0
    %v2795 = vsel %vm2648, %v2591, 0
    %v2798 = vsel %vm2648, %v2592, 0
    %v2801 = vsel %vm2648, %v2593, 0
    %v2804 = vsel %vm2648, %v2594, 0
    %v2807 = vsel %vm2648, %v2595, 0
    %v2810 = vsel %vm2648, %v2596, 0
    %v2813 = vsel %vm1507, %v2785, 0
    %2815 = vmatprep.subr.bf16.mxu0 0
    %2816 = vmatpush1.bf16.msra.mxu0 0
    %2817 = vmatprep.subr.bf16.mxu0 0
    %2818 = vmatpush1.bf16.msra.mxu0 0
    %2819 = vmatprep.subr.bf16.mxu0 0
    %2820 = vmatpush1.bf16.msra.mxu0 0
    %2821 = vmatprep.subr.bf16.mxu0 0
    %2822 = vmatpush1.bf16.msra.mxu0 0
    %2823 = vmatprep.subr.bf16.mxu0 0
    %2824 = vmatpush1.bf16.msra.mxu0 0
    %2825 = vmatprep.subr.bf16.mxu0 0
    %2826 = vmatpush1.bf16.msra.mxu0 %v2813
    %2827 = vmatprep.subr.bf16.mxu0 0
    %2828 = vmatpush1.bf16.msra.mxu0 %v2784
    %2829 = vmatprep.subr.bf16.mxu0 0
    %2830 = vmatpush1.bf16.msra.mxu0 %v2783
    %2831 = vmatprep.subr.bf16.mxu0 0
    %2832 = vmatpush2.bf16.msra.mxu0 0
    %2833 = vmatprep.subr.bf16.mxu0 0
    %2834 = vmatpush2.bf16.msra.mxu0 0
    %2835 = vmatprep.subr.bf16.mxu0 0
    %2836 = vmatpush2.bf16.msra.mxu0 0
    %2837 = vmatprep.subr.bf16.mxu0 0
    %2838 = vmatpush2.bf16.msra.mxu0 0
    %2839 = vmatprep.subr.bf16.mxu0 0
    %2840 = vmatpush2.bf16.msra.mxu0 0
    %2841 = vmatprep.subr.bf16.mxu0 0
    %2842 = vmatpush2.bf16.msra.mxu0 0
    %2843 = vmatprep.subr.bf16.mxu0 0
    %2844 = vmatpush2.bf16.msra.mxu0 0
    %2845 = vmatprep.subr.bf16.mxu0 0
    %2846 = vmatpush2.bf16.msra.mxu0 0
    %2847 = vmatprep.mubr.bf16.mxu0 0
    %2848 = vmatmul.mubr.bf16.gmra.mxu0 %v2789
    %v2849 = vpop.f32.mrf.mxu0
    %v2850 = vadd.f32 %v2711, %v2849
    %v2851 = vpop.f32.mrf.mxu0
    %v2852 = vpop.f32.mrf.mxu0
    %v2853 = vadd.f32 %v2714, %v2852
    %v2854 = vpop.f32.mrf.mxu0
    %2855 = vmatprep.mubr.bf16.mxu0 0
    %2856 = vmatmul.mubr.bf16.gmra.mxu0 %v2792
    %v2857 = vpop.f32.mrf.mxu0
    %v2858 = vadd.f32 %v2719, %v2857
    %v2859 = vpop.f32.mrf.mxu0
    %v2860 = vpop.f32.mrf.mxu0
    %v2861 = vadd.f32 %v2722, %v2860
    %v2862 = vpop.f32.mrf.mxu0
    %2863 = vmatprep.mubr.bf16.mxu0 0
    %2864 = vmatmul.mubr.bf16.gmra.mxu0 %v2795
    %v2865 = vpop.f32.mrf.mxu0
    %v2866 = vadd.f32 %v2727, %v2865
    %v2867 = vpop.f32.mrf.mxu0
    %v2868 = vpop.f32.mrf.mxu0
    %v2869 = vadd.f32 %v2730, %v2868
    %v2870 = vpop.f32.mrf.mxu0
    %2871 = vmatprep.mubr.bf16.mxu0 0
    %2872 = vmatmul.mubr.bf16.gmra.mxu0 %v2798
    %v2873 = vpop.f32.mrf.mxu0
    %v2874 = vadd.f32 %v2735, %v2873
    %v2875 = vpop.f32.mrf.mxu0
    %v2876 = vpop.f32.mrf.mxu0
    %v2877 = vadd.f32 %v2738, %v2876
    %v2878 = vpop.f32.mrf.mxu0
    %2879 = vmatprep.mubr.bf16.mxu0 0
    %2880 = vmatmul.mubr.bf16.gmra.mxu0 %v2801
    %v2881 = vpop.f32.mrf.mxu0
    %v2882 = vadd.f32 %v2743, %v2881
    %v2883 = vpop.f32.mrf.mxu0
    %v2884 = vpop.f32.mrf.mxu0
    %v2885 = vadd.f32 %v2746, %v2884
    %v2886 = vpop.f32.mrf.mxu0
    %2887 = vmatprep.mubr.bf16.mxu0 0
    %2888 = vmatmul.mubr.bf16.gmra.mxu0 %v2804
    %v2889 = vpop.f32.mrf.mxu0
    %v2890 = vadd.f32 %v2751, %v2889
    %v2891 = vpop.f32.mrf.mxu0
    %v2892 = vpop.f32.mrf.mxu0
    %v2893 = vadd.f32 %v2754, %v2892
    %v2894 = vpop.f32.mrf.mxu0
    %2895 = vmatprep.mubr.bf16.mxu0 0
    %2896 = vmatmul.mubr.bf16.gmra.mxu0 %v2807
    %v2897 = vpop.f32.mrf.mxu0
    %v2898 = vadd.f32 %v2759, %v2897
    %v2899 = vpop.f32.mrf.mxu0
    %v2900 = vpop.f32.mrf.mxu0
    %v2901 = vadd.f32 %v2762, %v2900
    %v2902 = vpop.f32.mrf.mxu0
    %2903 = vmatprep.mubr.bf16.mxu0 0
    %2904 = vmatmul.mubr.bf16.gmra.mxu0 %v2810
    %v2905 = vpop.f32.mrf.mxu0
    %v2906 = vadd.f32 %v2767, %v2905
    %v2907 = vpop.f32.mrf.mxu0
    %v2908 = vpop.f32.mrf.mxu0
    %v2909 = vadd.f32 %v2770, %v2908
    %v2910 = vpop.f32.mrf.mxu0
    %2911 = vdwg.mxu0
    %s2912 = scalar_lea.vmem [#allocation2], 16
    %v2913 = vld [vmem:[%s2912] sm:$0xff]
    %v2914 = vld [vmem:[%s2912 + $0x8] sm:$0xff]
    %v2915 = vld [vmem:[%s2912 + $0x10] sm:$0xff]
    %v2916 = vld [vmem:[%s2912 + $0x18] sm:$0xff]
    %v2917 = vld [vmem:[%s2912 + $0x20] sm:$0xff]
    %v2918 = vld [vmem:[%s2912 + $0x28] sm:$0xff]
    %v2919 = vld [vmem:[%s2912 + $0x30] sm:$0xff]
    %v2920 = vld [vmem:[%s2912 + $0x38] sm:$0xff]
    %v2921 = vld [vmem:[%s2912 + $0x60] sm:$0xff]
    %v2922 = vld [vmem:[%s2912 + $0x68] sm:$0xff]
    %v2923 = vld [vmem:[%s2912 + $0x70] sm:$0xff]
    %v2924 = vld [vmem:[%s2912 + $0x78] sm:$0xff]
    %v2925 = vld [vmem:[%s2912 + $0x80] sm:$0xff]
    %v2926 = vld [vmem:[%s2912 + $0x88] sm:$0xff]
    %v2927 = vld [vmem:[%s2912 + $0x90] sm:$0xff]
    %v2928 = vld [vmem:[%s2912 + $0x98] sm:$0xff]
    %v2929 = vpack.c.bf16 %v2914, %v2913
    %v2930 = vpack.c.bf16 %v2916, %v2915
    %v2931 = vpack.c.bf16 %v2918, %v2917
    %v2932 = vpack.c.bf16 %v2920, %v2919
    %v2933 = vpack.c.bf16 %v2922, %v2921
    %v2934 = vpack.c.bf16 %v2924, %v2923
    %v2935 = vpack.c.bf16 %v2926, %v2925
    %v2936 = vpack.c.bf16 %v2928, %v2927
    %s2937 = scalar_lea.vmem %s3, 40
    %v2938 = vld [vmem:[%s2937] sm:$0xf]
    %v2939 = vld [vmem:[%s2937 + $0x4] sm:$0xf]
    %v2940 = vld [vmem:[%s2937 + $0x8] sm:$0xf]
    %v2941 = vld [vmem:[%s2937 + $0xc] sm:$0xf]
    %v2942 = vld [vmem:[%s2937 + $0x10] sm:$0xf]
    %v2948 = vunpack.c.l.b16 %v2938
    %v2949 = vunpack.c.l.b16 %v2939
    %v2950 = vunpack.c.l.b16 %v2940
    %v2951 = vunpack.c.l.b16 %v2941
    %v2952 = vunpack.c.l.b16 %v2942
    %v2953 = vpack.c.b16 %v2949, %v2948
    %v2954 = vpack.c.b16 %v2951, %v2950
    %v2955 = vpack.c.b16 %v2952, %v2952
    %v2959 = vsel %vm2648, %v2929, 0
    %v2962 = vsel %vm2648, %v2930, 0
    %v2965 = vsel %vm2648, %v2931, 0
    %v2968 = vsel %vm2648, %v2932, 0
    %v2971 = vsel %vm2648, %v2933, 0
    %v2974 = vsel %vm2648, %v2934, 0
    %v2977 = vsel %vm2648, %v2935, 0
    %v2980 = vsel %vm2648, %v2936, 0
    %v2983 = vsel %vm1507, %v2955, 0
    %2985 = vmatprep.subr.bf16.mxu0 0
    %2986 = vmatpush1.bf16.msra.mxu0 0
    %2987 = vmatprep.subr.bf16.mxu0 0
    %2988 = vmatpush1.bf16.msra.mxu0 0
    %2989 = vmatprep.subr.bf16.mxu0 0
    %2990 = vmatpush1.bf16.msra.mxu0 0
    %2991 = vmatprep.subr.bf16.mxu0 0
    %2992 = vmatpush1.bf16.msra.mxu0 0
    %2993 = vmatprep.subr.bf16.mxu0 0
    %2994 = vmatpush1.bf16.msra.mxu0 0
    %2995 = vmatprep.subr.bf16.mxu0 0
    %2996 = vmatpush1.bf16.msra.mxu0 %v2983
    %2997 = vmatprep.subr.bf16.mxu0 0
    %2998 = vmatpush1.bf16.msra.mxu0 %v2954
    %2999 = vmatprep.subr.bf16.mxu0 0
    %3000 = vmatpush1.bf16.msra.mxu0 %v2953
    %3001 = vmatprep.subr.bf16.mxu0 0
    %3002 = vmatpush2.bf16.msra.mxu0 0
    %3003 = vmatprep.subr.bf16.mxu0 0
    %3004 = vmatpush2.bf16.msra.mxu0 0
    %3005 = vmatprep.subr.bf16.mxu0 0
    %3006 = vmatpush2.bf16.msra.mxu0 0
    %3007 = vmatprep.subr.bf16.mxu0 0
    %3008 = vmatpush2.bf16.msra.mxu0 0
    %3009 = vmatprep.subr.bf16.mxu0 0
    %3010 = vmatpush2.bf16.msra.mxu0 0
    %3011 = vmatprep.subr.bf16.mxu0 0
    %3012 = vmatpush2.bf16.msra.mxu0 0
    %3013 = vmatprep.subr.bf16.mxu0 0
    %3014 = vmatpush2.bf16.msra.mxu0 0
    %3015 = vmatprep.subr.bf16.mxu0 0
    %3016 = vmatpush2.bf16.msra.mxu0 0
    %3017 = vmatprep.mubr.bf16.mxu0 0
    %3018 = vmatmul.mubr.bf16.gmra.mxu0 %v2959
    %v3019 = vpop.f32.mrf.mxu0
    %v3020 = vadd.f32 0.0, %v3019
    %v3021 = vpop.f32.mrf.mxu0
    %v3022 = vpop.f32.mrf.mxu0
    %v3023 = vadd.f32 0.0, %v3022
    %v3024 = vpop.f32.mrf.mxu0
    %3025 = vmatprep.mubr.bf16.mxu0 0
    %3026 = vmatmul.mubr.bf16.gmra.mxu0 %v2962
    %v3027 = vpop.f32.mrf.mxu0
    %v3028 = vadd.f32 0.0, %v3027
    %v3029 = vpop.f32.mrf.mxu0
    %v3030 = vpop.f32.mrf.mxu0
    %v3031 = vadd.f32 0.0, %v3030
    %v3032 = vpop.f32.mrf.mxu0
    %3033 = vmatprep.mubr.bf16.mxu0 0
    %3034 = vmatmul.mubr.bf16.gmra.mxu0 %v2965
    %v3035 = vpop.f32.mrf.mxu0
    %v3036 = vadd.f32 0.0, %v3035
    %v3037 = vpop.f32.mrf.mxu0
    %v3038 = vpop.f32.mrf.mxu0
    %v3039 = vadd.f32 0.0, %v3038
    %v3040 = vpop.f32.mrf.mxu0
    %3041 = vmatprep.mubr.bf16.mxu0 0
    %3042 = vmatmul.mubr.bf16.gmra.mxu0 %v2968
    %v3043 = vpop.f32.mrf.mxu0
    %v3044 = vadd.f32 0.0, %v3043
    %v3045 = vpop.f32.mrf.mxu0
    %v3046 = vpop.f32.mrf.mxu0
    %v3047 = vadd.f32 0.0, %v3046
    %v3048 = vpop.f32.mrf.mxu0
    %3049 = vmatprep.mubr.bf16.mxu0 0
    %3050 = vmatmul.mubr.bf16.gmra.mxu0 %v2971
    %v3051 = vpop.f32.mrf.mxu0
    %v3052 = vadd.f32 0.0, %v3051
    %v3053 = vpop.f32.mrf.mxu0
    %v3054 = vpop.f32.mrf.mxu0
    %v3055 = vadd.f32 0.0, %v3054
    %v3056 = vpop.f32.mrf.mxu0
    %3057 = vmatprep.mubr.bf16.mxu0 0
    %3058 = vmatmul.mubr.bf16.gmra.mxu0 %v2974
    %v3059 = vpop.f32.mrf.mxu0
    %v3060 = vadd.f32 0.0, %v3059
    %v3061 = vpop.f32.mrf.mxu0
    %v3062 = vpop.f32.mrf.mxu0
    %v3063 = vadd.f32 0.0, %v3062
    %v3064 = vpop.f32.mrf.mxu0
    %3065 = vmatprep.mubr.bf16.mxu0 0
    %3066 = vmatmul.mubr.bf16.gmra.mxu0 %v2977
    %v3067 = vpop.f32.mrf.mxu0
    %v3068 = vadd.f32 0.0, %v3067
    %v3069 = vpop.f32.mrf.mxu0
    %v3070 = vpop.f32.mrf.mxu0
    %v3071 = vadd.f32 0.0, %v3070
    %v3072 = vpop.f32.mrf.mxu0
    %3073 = vmatprep.mubr.bf16.mxu0 0
    %3074 = vmatmul.mubr.bf16.gmra.mxu0 %v2980
    %v3075 = vpop.f32.mrf.mxu0
    %v3076 = vadd.f32 0.0, %v3075
    %v3077 = vpop.f32.mrf.mxu0
    %v3078 = vpop.f32.mrf.mxu0
    %v3079 = vadd.f32 0.0, %v3078
    %v3080 = vpop.f32.mrf.mxu0
    %3081 = vdwg.mxu0
    %v3082 = vadd.f32 %v2850, %v3020
    %v3083 = vadd.f32 %v2853, %v3023
    %v3084 = vadd.f32 %v2858, %v3028
    %v3085 = vadd.f32 %v2861, %v3031
    %v3086 = vadd.f32 %v2866, %v3036
    %v3087 = vadd.f32 %v2869, %v3039
    %v3088 = vadd.f32 %v2874, %v3044
    %v3089 = vadd.f32 %v2877, %v3047
    %v3090 = vadd.f32 %v2882, %v3052
    %v3091 = vadd.f32 %v2885, %v3055
    %v3092 = vadd.f32 %v2890, %v3060
    %v3093 = vadd.f32 %v2893, %v3063
    %v3094 = vadd.f32 %v2898, %v3068
    %v3095 = vadd.f32 %v2901, %v3071
    %v3096 = vadd.f32 %v2906, %v3076
    %v3097 = vadd.f32 %v2909, %v3079
    %s3098 = scalar_lea.vmem [#allocation2], 24
    %v3099 = vld [vmem:[%s3098] sm:$0xff]
    %v3100 = vld [vmem:[%s3098 + $0x8] sm:$0xff]
    %v3101 = vld [vmem:[%s3098 + $0x10] sm:$0xff]
    %v3102 = vld [vmem:[%s3098 + $0x18] sm:$0xff]
    %v3103 = vld [vmem:[%s3098 + $0x20] sm:$0xff]
    %v3104 = vld [vmem:[%s3098 + $0x28] sm:$0xff]
    %v3105 = vld [vmem:[%s3098 + $0x30] sm:$0xff]
    %v3106 = vld [vmem:[%s3098 + $0x38] sm:$0xff]
    %v3107 = vld [vmem:[%s3098 + $0x60] sm:$0xff]
    %v3108 = vld [vmem:[%s3098 + $0x68] sm:$0xff]
    %v3109 = vld [vmem:[%s3098 + $0x70] sm:$0xff]
    %v3110 = vld [vmem:[%s3098 + $0x78] sm:$0xff]
    %v3111 = vld [vmem:[%s3098 + $0x80] sm:$0xff]
    %v3112 = vld [vmem:[%s3098 + $0x88] sm:$0xff]
    %v3113 = vld [vmem:[%s3098 + $0x90] sm:$0xff]
    %v3114 = vld [vmem:[%s3098 + $0x98] sm:$0xff]
    %v3115 = vpack.c.bf16 %v3100, %v3099
    %v3116 = vpack.c.bf16 %v3102, %v3101
    %v3117 = vpack.c.bf16 %v3104, %v3103
    %v3118 = vpack.c.bf16 %v3106, %v3105
    %v3119 = vpack.c.bf16 %v3108, %v3107
    %v3120 = vpack.c.bf16 %v3110, %v3109
    %v3121 = vpack.c.bf16 %v3112, %v3111
    %v3122 = vpack.c.bf16 %v3114, %v3113
    %s3123 = scalar_lea.vmem %s3, 60
    %v3124 = vld [vmem:[%s3123] sm:$0xf]
    %v3125 = vld [vmem:[%s3123 + $0x4] sm:$0xf]
    %v3126 = vld [vmem:[%s3123 + $0x8] sm:$0xf]
    %v3127 = vld [vmem:[%s3123 + $0xc] sm:$0xf]
    %v3128 = vld [vmem:[%s3123 + $0x10] sm:$0xf]
    %v3134 = vunpack.c.l.b16 %v3124
    %v3135 = vunpack.c.l.b16 %v3125
    %v3136 = vunpack.c.l.b16 %v3126
    %v3137 = vunpack.c.l.b16 %v3127
    %v3138 = vunpack.c.l.b16 %v3128
    %v3139 = vpack.c.b16 %v3135, %v3134
    %v3140 = vpack.c.b16 %v3137, %v3136
    %v3141 = vpack.c.b16 %v3138, %v3138
    %v3145 = vsel %vm2648, %v3115, 0
    %v3148 = vsel %vm2648, %v3116, 0
    %v3151 = vsel %vm2648, %v3117, 0
    %v3154 = vsel %vm2648, %v3118, 0
    %v3157 = vsel %vm2648, %v3119, 0
    %v3160 = vsel %vm2648, %v3120, 0
    %v3163 = vsel %vm2648, %v3121, 0
    %v3166 = vsel %vm2648, %v3122, 0
    %v3169 = vsel %vm1507, %v3141, 0
    %3171 = vmatprep.subr.bf16.mxu0 0
    %3172 = vmatpush1.bf16.msra.mxu0 0
    %3173 = vmatprep.subr.bf16.mxu0 0
    %3174 = vmatpush1.bf16.msra.mxu0 0
    %3175 = vmatprep.subr.bf16.mxu0 0
    %3176 = vmatpush1.bf16.msra.mxu0 0
    %3177 = vmatprep.subr.bf16.mxu0 0
    %3178 = vmatpush1.bf16.msra.mxu0 0
    %3179 = vmatprep.subr.bf16.mxu0 0
    %3180 = vmatpush1.bf16.msra.mxu0 0
    %3181 = vmatprep.subr.bf16.mxu0 0
    %3182 = vmatpush1.bf16.msra.mxu0 %v3169
    %3183 = vmatprep.subr.bf16.mxu0 0
    %3184 = vmatpush1.bf16.msra.mxu0 %v3140
    %3185 = vmatprep.subr.bf16.mxu0 0
    %3186 = vmatpush1.bf16.msra.mxu0 %v3139
    %3187 = vmatprep.subr.bf16.mxu0 0
    %3188 = vmatpush2.bf16.msra.mxu0 0
    %3189 = vmatprep.subr.bf16.mxu0 0
    %3190 = vmatpush2.bf16.msra.mxu0 0
    %3191 = vmatprep.subr.bf16.mxu0 0
    %3192 = vmatpush2.bf16.msra.mxu0 0
    %3193 = vmatprep.subr.bf16.mxu0 0
    %3194 = vmatpush2.bf16.msra.mxu0 0
    %3195 = vmatprep.subr.bf16.mxu0 0
    %3196 = vmatpush2.bf16.msra.mxu0 0
    %3197 = vmatprep.subr.bf16.mxu0 0
    %3198 = vmatpush2.bf16.msra.mxu0 0
    %3199 = vmatprep.subr.bf16.mxu0 0
    %3200 = vmatpush2.bf16.msra.mxu0 0
    %3201 = vmatprep.subr.bf16.mxu0 0
    %3202 = vmatpush2.bf16.msra.mxu0 0
    %3203 = vmatprep.mubr.bf16.mxu0 0
    %3204 = vmatmul.mubr.bf16.gmra.mxu0 %v3145
    %v3205 = vpop.f32.mrf.mxu0
    %v3206 = vadd.f32 0.0, %v3205
    %v3207 = vpop.f32.mrf.mxu0
    %v3208 = vpop.f32.mrf.mxu0
    %v3209 = vadd.f32 0.0, %v3208
    %v3210 = vpop.f32.mrf.mxu0
    %3211 = vmatprep.mubr.bf16.mxu0 0
    %3212 = vmatmul.mubr.bf16.gmra.mxu0 %v3148
    %v3213 = vpop.f32.mrf.mxu0
    %v3214 = vadd.f32 0.0, %v3213
    %v3215 = vpop.f32.mrf.mxu0
    %v3216 = vpop.f32.mrf.mxu0
    %v3217 = vadd.f32 0.0, %v3216
    %v3218 = vpop.f32.mrf.mxu0
    %3219 = vmatprep.mubr.bf16.mxu0 0
    %3220 = vmatmul.mubr.bf16.gmra.mxu0 %v3151
    %v3221 = vpop.f32.mrf.mxu0
    %v3222 = vadd.f32 0.0, %v3221
    %v3223 = vpop.f32.mrf.mxu0
    %v3224 = vpop.f32.mrf.mxu0
    %v3225 = vadd.f32 0.0, %v3224
    %v3226 = vpop.f32.mrf.mxu0
    %3227 = vmatprep.mubr.bf16.mxu0 0
    %3228 = vmatmul.mubr.bf16.gmra.mxu0 %v3154
    %v3229 = vpop.f32.mrf.mxu0
    %v3230 = vadd.f32 0.0, %v3229
    %v3231 = vpop.f32.mrf.mxu0
    %v3232 = vpop.f32.mrf.mxu0
    %v3233 = vadd.f32 0.0, %v3232
    %v3234 = vpop.f32.mrf.mxu0
    %3235 = vmatprep.mubr.bf16.mxu0 0
    %3236 = vmatmul.mubr.bf16.gmra.mxu0 %v3157
    %v3237 = vpop.f32.mrf.mxu0
    %v3238 = vadd.f32 0.0, %v3237
    %v3239 = vpop.f32.mrf.mxu0
    %v3240 = vpop.f32.mrf.mxu0
    %v3241 = vadd.f32 0.0, %v3240
    %v3242 = vpop.f32.mrf.mxu0
    %3243 = vmatprep.mubr.bf16.mxu0 0
    %3244 = vmatmul.mubr.bf16.gmra.mxu0 %v3160
    %v3245 = vpop.f32.mrf.mxu0
    %v3246 = vadd.f32 0.0, %v3245
    %v3247 = vpop.f32.mrf.mxu0
    %v3248 = vpop.f32.mrf.mxu0
    %v3249 = vadd.f32 0.0, %v3248
    %v3250 = vpop.f32.mrf.mxu0
    %3251 = vmatprep.mubr.bf16.mxu0 0
    %3252 = vmatmul.mubr.bf16.gmra.mxu0 %v3163
    %v3253 = vpop.f32.mrf.mxu0
    %v3254 = vadd.f32 0.0, %v3253
    %v3255 = vpop.f32.mrf.mxu0
    %v3256 = vpop.f32.mrf.mxu0
    %v3257 = vadd.f32 0.0, %v3256
    %v3258 = vpop.f32.mrf.mxu0
    %3259 = vmatprep.mubr.bf16.mxu0 0
    %3260 = vmatmul.mubr.bf16.gmra.mxu0 %v3166
    %v3261 = vpop.f32.mrf.mxu0
    %v3262 = vadd.f32 0.0, %v3261
    %v3263 = vpop.f32.mrf.mxu0
    %v3264 = vpop.f32.mrf.mxu0
    %v3265 = vadd.f32 0.0, %v3264
    %v3266 = vpop.f32.mrf.mxu0
    %3267 = vdwg.mxu0
    %v3268 = vadd.f32 %v3082, %v3206
    %v3269 = vadd.f32 %v3083, %v3209
    %v3270 = vadd.f32 %v3084, %v3214
    %v3271 = vadd.f32 %v3085, %v3217
    %v3272 = vadd.f32 %v3086, %v3222
    %v3273 = vadd.f32 %v3087, %v3225
    %v3274 = vadd.f32 %v3088, %v3230
    %v3275 = vadd.f32 %v3089, %v3233
    %v3276 = vadd.f32 %v3090, %v3238
    %v3277 = vadd.f32 %v3091, %v3241
    %v3278 = vadd.f32 %v3092, %v3246
    %v3279 = vadd.f32 %v3093, %v3249
    %v3280 = vadd.f32 %v3094, %v3254
    %v3281 = vadd.f32 %v3095, %v3257
    %v3282 = vadd.f32 %v3096, %v3262
    %v3283 = vadd.f32 %v3097, %v3265
    %s3284 = scalar_lea.vmem [#allocation2], 32
    %v3285 = vld [vmem:[%s3284] sm:$0xff]
    %v3286 = vld [vmem:[%s3284 + $0x8] sm:$0xff]
    %v3287 = vld [vmem:[%s3284 + $0x10] sm:$0xff]
    %v3288 = vld [vmem:[%s3284 + $0x18] sm:$0xff]
    %v3289 = vld [vmem:[%s3284 + $0x20] sm:$0xff]
    %v3290 = vld [vmem:[%s3284 + $0x28] sm:$0xff]
    %v3291 = vld [vmem:[%s3284 + $0x30] sm:$0xff]
    %v3292 = vld [vmem:[%s3284 + $0x38] sm:$0xff]
    %v3293 = vld [vmem:[%s3284 + $0x60] sm:$0xff]
    %v3294 = vld [vmem:[%s3284 + $0x68] sm:$0xff]
    %v3295 = vld [vmem:[%s3284 + $0x70] sm:$0xff]
    %v3296 = vld [vmem:[%s3284 + $0x78] sm:$0xff]
    %v3297 = vld [vmem:[%s3284 + $0x80] sm:$0xff]
    %v3298 = vld [vmem:[%s3284 + $0x88] sm:$0xff]
    %v3299 = vld [vmem:[%s3284 + $0x90] sm:$0xff]
    %v3300 = vld [vmem:[%s3284 + $0x98] sm:$0xff]
    %v3301 = vpack.c.bf16 %v3286, %v3285
    %v3302 = vpack.c.bf16 %v3288, %v3287
    %v3303 = vpack.c.bf16 %v3290, %v3289
    %v3304 = vpack.c.bf16 %v3292, %v3291
    %v3305 = vpack.c.bf16 %v3294, %v3293
    %v3306 = vpack.c.bf16 %v3296, %v3295
    %v3307 = vpack.c.bf16 %v3298, %v3297
    %v3308 = vpack.c.bf16 %v3300, %v3299
    %s3309 = scalar_lea.vmem %s3, 80
    %v3310 = vld [vmem:[%s3309] sm:$0xf]
    %v3311 = vld [vmem:[%s3309 + $0x4] sm:$0xf]
    %v3312 = vld [vmem:[%s3309 + $0x8] sm:$0xf]
    %v3313 = vld [vmem:[%s3309 + $0xc] sm:$0xf]
    %v3314 = vld [vmem:[%s3309 + $0x10] sm:$0xf]
    %v3320 = vunpack.c.l.b16 %v3310
    %v3321 = vunpack.c.l.b16 %v3311
    %v3322 = vunpack.c.l.b16 %v3312
    %v3323 = vunpack.c.l.b16 %v3313
    %v3324 = vunpack.c.l.b16 %v3314
    %v3325 = vpack.c.b16 %v3321, %v3320
    %v3326 = vpack.c.b16 %v3323, %v3322
    %v3327 = vpack.c.b16 %v3324, %v3324
    %v3331 = vsel %vm2648, %v3301, 0
    %v3334 = vsel %vm2648, %v3302, 0
    %v3337 = vsel %vm2648, %v3303, 0
    %v3340 = vsel %vm2648, %v3304, 0
    %v3343 = vsel %vm2648, %v3305, 0
    %v3346 = vsel %vm2648, %v3306, 0
    %v3349 = vsel %vm2648, %v3307, 0
    %v3352 = vsel %vm2648, %v3308, 0
    %v3355 = vsel %vm1507, %v3327, 0
    %3357 = vmatprep.subr.bf16.mxu0 0
    %3358 = vmatpush1.bf16.msra.mxu0 0
    %3359 = vmatprep.subr.bf16.mxu0 0
    %3360 = vmatpush1.bf16.msra.mxu0 0
    %3361 = vmatprep.subr.bf16.mxu0 0
    %3362 = vmatpush1.bf16.msra.mxu0 0
    %3363 = vmatprep.subr.bf16.mxu0 0
    %3364 = vmatpush1.bf16.msra.mxu0 0
    %3365 = vmatprep.subr.bf16.mxu0 0
    %3366 = vmatpush1.bf16.msra.mxu0 0
    %3367 = vmatprep.subr.bf16.mxu0 0
    %3368 = vmatpush1.bf16.msra.mxu0 %v3355
    %3369 = vmatprep.subr.bf16.mxu0 0
    %3370 = vmatpush1.bf16.msra.mxu0 %v3326
    %3371 = vmatprep.subr.bf16.mxu0 0
    %3372 = vmatpush1.bf16.msra.mxu0 %v3325
    %3373 = vmatprep.subr.bf16.mxu0 0
    %3374 = vmatpush2.bf16.msra.mxu0 0
    %3375 = vmatprep.subr.bf16.mxu0 0
    %3376 = vmatpush2.bf16.msra.mxu0 0
    %3377 = vmatprep.subr.bf16.mxu0 0
    %3378 = vmatpush2.bf16.msra.mxu0 0
    %3379 = vmatprep.subr.bf16.mxu0 0
    %3380 = vmatpush2.bf16.msra.mxu0 0
    %3381 = vmatprep.subr.bf16.mxu0 0
    %3382 = vmatpush2.bf16.msra.mxu0 0
    %3383 = vmatprep.subr.bf16.mxu0 0
    %3384 = vmatpush2.bf16.msra.mxu0 0
    %3385 = vmatprep.subr.bf16.mxu0 0
    %3386 = vmatpush2.bf16.msra.mxu0 0
    %3387 = vmatprep.subr.bf16.mxu0 0
    %3388 = vmatpush2.bf16.msra.mxu0 0
    %3389 = vmatprep.mubr.bf16.mxu0 0
    %3390 = vmatmul.mubr.bf16.gmra.mxu0 %v3331
    %v3391 = vpop.f32.mrf.mxu0
    %v3392 = vadd.f32 0.0, %v3391
    %v3393 = vpop.f32.mrf.mxu0
    %v3394 = vpop.f32.mrf.mxu0
    %v3395 = vadd.f32 0.0, %v3394
    %v3396 = vpop.f32.mrf.mxu0
    %3397 = vmatprep.mubr.bf16.mxu0 0
    %3398 = vmatmul.mubr.bf16.gmra.mxu0 %v3334
    %v3399 = vpop.f32.mrf.mxu0
    %v3400 = vadd.f32 0.0, %v3399
    %v3401 = vpop.f32.mrf.mxu0
    %v3402 = vpop.f32.mrf.mxu0
    %v3403 = vadd.f32 0.0, %v3402
    %v3404 = vpop.f32.mrf.mxu0
    %3405 = vmatprep.mubr.bf16.mxu0 0
    %3406 = vmatmul.mubr.bf16.gmra.mxu0 %v3337
    %v3407 = vpop.f32.mrf.mxu0
    %v3408 = vadd.f32 0.0, %v3407
    %v3409 = vpop.f32.mrf.mxu0
    %v3410 = vpop.f32.mrf.mxu0
    %v3411 = vadd.f32 0.0, %v3410
    %v3412 = vpop.f32.mrf.mxu0
    %3413 = vmatprep.mubr.bf16.mxu0 0
    %3414 = vmatmul.mubr.bf16.gmra.mxu0 %v3340
    %v3415 = vpop.f32.mrf.mxu0
    %v3416 = vadd.f32 0.0, %v3415
    %v3417 = vpop.f32.mrf.mxu0
    %v3418 = vpop.f32.mrf.mxu0
    %v3419 = vadd.f32 0.0, %v3418
    %v3420 = vpop.f32.mrf.mxu0
    %3421 = vmatprep.mubr.bf16.mxu0 0
    %3422 = vmatmul.mubr.bf16.gmra.mxu0 %v3343
    %v3423 = vpop.f32.mrf.mxu0
    %v3424 = vadd.f32 0.0, %v3423
    %v3425 = vpop.f32.mrf.mxu0
    %v3426 = vpop.f32.mrf.mxu0
    %v3427 = vadd.f32 0.0, %v3426
    %v3428 = vpop.f32.mrf.mxu0
    %3429 = vmatprep.mubr.bf16.mxu0 0
    %3430 = vmatmul.mubr.bf16.gmra.mxu0 %v3346
    %v3431 = vpop.f32.mrf.mxu0
    %v3432 = vadd.f32 0.0, %v3431
    %v3433 = vpop.f32.mrf.mxu0
    %v3434 = vpop.f32.mrf.mxu0
    %v3435 = vadd.f32 0.0, %v3434
    %v3436 = vpop.f32.mrf.mxu0
    %3437 = vmatprep.mubr.bf16.mxu0 0
    %3438 = vmatmul.mubr.bf16.gmra.mxu0 %v3349
    %v3439 = vpop.f32.mrf.mxu0
    %v3440 = vadd.f32 0.0, %v3439
    %v3441 = vpop.f32.mrf.mxu0
    %v3442 = vpop.f32.mrf.mxu0
    %v3443 = vadd.f32 0.0, %v3442
    %v3444 = vpop.f32.mrf.mxu0
    %3445 = vmatprep.mubr.bf16.mxu0 0
    %3446 = vmatmul.mubr.bf16.gmra.mxu0 %v3352
    %v3447 = vpop.f32.mrf.mxu0
    %v3448 = vadd.f32 0.0, %v3447
    %v3449 = vpop.f32.mrf.mxu0
    %v3450 = vpop.f32.mrf.mxu0
    %v3451 = vadd.f32 0.0, %v3450
    %v3452 = vpop.f32.mrf.mxu0
    %3453 = vdwg.mxu0
    %v3454 = vadd.f32 %v3268, %v3392
    %v3455 = vadd.f32 %v3269, %v3395
    %v3456 = vadd.f32 %v3270, %v3400
    %v3457 = vadd.f32 %v3271, %v3403
    %v3458 = vadd.f32 %v3272, %v3408
    %v3459 = vadd.f32 %v3273, %v3411
    %v3460 = vadd.f32 %v3274, %v3416
    %v3461 = vadd.f32 %v3275, %v3419
    %v3462 = vadd.f32 %v3276, %v3424
    %v3463 = vadd.f32 %v3277, %v3427
    %v3464 = vadd.f32 %v3278, %v3432
    %v3465 = vadd.f32 %v3279, %v3435
    %v3466 = vadd.f32 %v3280, %v3440
    %v3467 = vadd.f32 %v3281, %v3443
    %v3468 = vadd.f32 %v3282, %v3448
    %v3469 = vadd.f32 %v3283, %v3451
    %v3470 = vld [vmem:[%s4] sm:$0x1]
    %v3472 = vlaneseq
    %v3473 = vshrl.u32 %v3472, 7
    %v3474 = vsub.s32 0, %v3473
    %v3475 = vrot.slane %v3470, %v3474
    %v3477 = vadd.f32 %v3454, %v3475
    %v3478 = vadd.f32 %v3455, %v3475
    %v3479 = vadd.f32 %v3456, %v3475
    %v3480 = vadd.f32 %v3457, %v3475
    %v3481 = vadd.f32 %v3458, %v3475
    %v3482 = vadd.f32 %v3459, %v3475
    %v3483 = vadd.f32 %v3460, %v3475
    %v3484 = vadd.f32 %v3461, %v3475
    %v3485 = vadd.f32 %v3462, %v3475
    %v3486 = vadd.f32 %v3463, %v3475
    %v3487 = vadd.f32 %v3464, %v3475
    %v3488 = vadd.f32 %v3465, %v3475
    %v3489 = vadd.f32 %v3466, %v3475
    %v3490 = vadd.f32 %v3467, %v3475
    %v3491 = vadd.f32 %v3468, %v3475
    %v3492 = vadd.f32 %v3469, %v3475
    %v3493 = vmax.f32 %v3477, %v3478
    %v3494 = vmax.f32 %v3479, %v3480
    %v3495 = vmax.f32 %v3481, %v3482
    %v3496 = vmax.f32 %v3483, %v3484
    %v3497 = vmax.f32 %v3485, %v3486
    %v3498 = vmax.f32 %v3487, %v3488
    %v3499 = vmax.f32 %v3489, %v3490
    %v3500 = vmax.f32 %v3491, %v3492
    %v3503 = vrot.slane %v3493, 1
    %v3504 = vrot.slane %v3497, 1
    %v3507 = vmax.f32 %v3493, %v3503
    %v3508 = vmax.f32 %v3497, %v3504
    %v3511 = vrot.slane %v3494, 1
    %v3512 = vrot.slane %v3498, 1
    %v3515 = vmax.f32 %v3494, %v3511
    %v3516 = vmax.f32 %v3498, %v3512
    %v3519 = vrot.slane %v3495, 1
    %v3520 = vrot.slane %v3499, 1
    %v3523 = vmax.f32 %v3495, %v3519
    %v3524 = vmax.f32 %v3499, %v3520
    %v3527 = vrot.slane %v3496, 1
    %v3528 = vrot.slane %v3500, 1
    %v3531 = vmax.f32 %v3496, %v3527
    %v3532 = vmax.f32 %v3500, %v3528
    %v3535 = vrot.slane %v3508, 7
    %vm3536 = vcmask 1041409
    %v3537 = vsel %vm3536, %v3535, %v3507
    %v3539 = vrot.slane %v3507, 2
    %v3540 = vrot.slane %v3508, 1
    %v3541 = vsel %vm3536, %v3540, %v3539
    %v3543 = vrot.slane %v3507, 4
    %v3544 = vrot.slane %v3508, 3
    %v3545 = vsel %vm3536, %v3544, %v3543
    %v3547 = vrot.slane %v3507, 6
    %v3548 = vrot.slane %v3508, 5
    %v3549 = vsel %vm3536, %v3548, %v3547
    %v3553 = vrot.slane %v3516, 7
    %v3554 = vsel %vm3536, %v3553, %v3515
    %v3556 = vrot.slane %v3515, 2
    %v3557 = vrot.slane %v3516, 1
    %v3558 = vsel %vm3536, %v3557, %v3556
    %v3560 = vrot.slane %v3515, 4
    %v3561 = vrot.slane %v3516, 3
    %v3562 = vsel %vm3536, %v3561, %v3560
    %v3564 = vrot.slane %v3515, 6
    %v3565 = vrot.slane %v3516, 5
    %v3566 = vsel %vm3536, %v3565, %v3564
    %v3570 = vrot.slane %v3524, 7
    %v3571 = vsel %vm3536, %v3570, %v3523
    %v3573 = vrot.slane %v3523, 2
    %v3574 = vrot.slane %v3524, 1
    %v3575 = vsel %vm3536, %v3574, %v3573
    %v3577 = vrot.slane %v3523, 4
    %v3578 = vrot.slane %v3524, 3
    %v3579 = vsel %vm3536, %v3578, %v3577
    %v3581 = vrot.slane %v3523, 6
    %v3582 = vrot.slane %v3524, 5
    %v3583 = vsel %vm3536, %v3582, %v3581
    %v3587 = vrot.slane %v3532, 7
    %v3588 = vsel %vm3536, %v3587, %v3531
    %v3590 = vrot.slane %v3531, 2
    %v3591 = vrot.slane %v3532, 1
    %v3592 = vsel %vm3536, %v3591, %v3590
    %v3594 = vrot.slane %v3531, 4
    %v3595 = vrot.slane %v3532, 3
    %v3596 = vsel %vm3536, %v3595, %v3594
    %v3598 = vrot.slane %v3531, 6
    %v3599 = vrot.slane %v3532, 5
    %v3600 = vsel %vm3536, %v3599, %v3598
    %v3602 = vmax.f32 %v3537, 0.0
    %v3603 = vmax.f32 %v3541, 0.0
    %v3604 = vmax.f32 %v3545, 0.0
    %v3605 = vmax.f32 %v3549, 0.0
    %v3606 = vmax.f32 %v3554, 0.0
    %v3607 = vmax.f32 %v3558, 0.0
    %v3608 = vmax.f32 %v3562, 0.0
    %v3609 = vmax.f32 %v3566, 0.0
    %v3610 = vmax.f32 %v3571, 0.0
    %v3611 = vmax.f32 %v3575, 0.0
    %v3612 = vmax.f32 %v3579, 0.0
    %v3613 = vmax.f32 %v3583, 0.0
    %v3614 = vmax.f32 %v3588, 0.0
    %v3615 = vmax.f32 %v3592, 0.0
    %v3616 = vmax.f32 %v3596, 0.0
    %v3617 = vmax.f32 %v3600, 0.0
    %v3618 = vpack.c.bf16 %v3602, %v3602
    %v3619 = vpack.c.bf16 %v3603, %v3603
    %v3620 = vpack.c.bf16 %v3604, %v3604
    %v3621 = vpack.c.bf16 %v3605, %v3605
    %v3622 = vpack.c.bf16 %v3606, %v3606
    %v3623 = vpack.c.bf16 %v3607, %v3607
    %v3624 = vpack.c.bf16 %v3608, %v3608
    %v3625 = vpack.c.bf16 %v3609, %v3609
    %v3626 = vpack.c.bf16 %v3610, %v3610
    %v3627 = vpack.c.bf16 %v3611, %v3611
    %v3628 = vpack.c.bf16 %v3612, %v3612
    %v3629 = vpack.c.bf16 %v3613, %v3613
    %v3630 = vpack.c.bf16 %v3614, %v3614
    %v3631 = vpack.c.bf16 %v3615, %v3615
    %v3632 = vpack.c.bf16 %v3616, %v3616
    %v3633 = vpack.c.bf16 %v3617, %v3617
    %v3634 = vld [vmem:[%s5] sm:$0xf]
    %v3635 = vld [vmem:[%s5 + $0x4] sm:$0xf]
    %v3636 = vld [vmem:[%s5 + $0x8] sm:$0xf]
    %v3637 = vld [vmem:[%s5 + $0xc] sm:$0xf]
    %v3638 = vld [vmem:[%s5 + $0x10] sm:$0xf]
    %v3639 = vld [vmem:[%s5 + $0x14] sm:$0xf]
    %v3640 = vld [vmem:[%s5 + $0x18] sm:$0xf]
    %v3641 = vld [vmem:[%s5 + $0x1c] sm:$0xf]
    %v3642 = vld [vmem:[%s5 + $0x20] sm:$0xf]
    %v3643 = vld [vmem:[%s5 + $0x24] sm:$0xf]
    %v3644 = vld [vmem:[%s5 + $0x28] sm:$0xf]
    %v3645 = vld [vmem:[%s5 + $0x2c] sm:$0xf]
    %v3646 = vld [vmem:[%s5 + $0x30] sm:$0xf]
    %v3647 = vld [vmem:[%s5 + $0x34] sm:$0xf]
    %v3648 = vld [vmem:[%s5 + $0x38] sm:$0xf]
    %v3649 = vld [vmem:[%s5 + $0x3c] sm:$0xf]
    %v3650 = vld [vmem:[%s5 + $0x40] sm:$0xf]
    %v3651 = vld [vmem:[%s5 + $0x44] sm:$0xf]
    %v3652 = vld [vmem:[%s5 + $0x48] sm:$0xf]
    %v3653 = vld [vmem:[%s5 + $0x4c] sm:$0xf]
    %v3654 = vld [vmem:[%s5 + $0x50] sm:$0xf]
    %v3655 = vld [vmem:[%s5 + $0x54] sm:$0xf]
    %v3656 = vld [vmem:[%s5 + $0x58] sm:$0xf]
    %v3657 = vld [vmem:[%s5 + $0x5c] sm:$0xf]
    %v3658 = vld [vmem:[%s5 + $0x60] sm:$0xf]
    %v3659 = vld [vmem:[%s5 + $0x64] sm:$0xf]
    %v3660 = vld [vmem:[%s5 + $0x68] sm:$0xf]
    %v3661 = vld [vmem:[%s5 + $0x6c] sm:$0xf]
    %v3662 = vld [vmem:[%s5 + $0x70] sm:$0xf]
    %v3663 = vld [vmem:[%s5 + $0x74] sm:$0xf]
    %v3664 = vld [vmem:[%s5 + $0x78] sm:$0xf]
    %v3665 = vld [vmem:[%s5 + $0x7c] sm:$0xf]
    %v3666 = vld [vmem:[%s5 + $0x80] sm:$0xf]
    %v3667 = vld [vmem:[%s5 + $0x84] sm:$0xf]
    %v3668 = vld [vmem:[%s5 + $0x88] sm:$0xf]
    %v3669 = vld [vmem:[%s5 + $0x8c] sm:$0xf]
    %v3670 = vld [vmem:[%s5 + $0x90] sm:$0xf]
    %v3671 = vld [vmem:[%s5 + $0x94] sm:$0xf]
    %v3672 = vld [vmem:[%s5 + $0x98] sm:$0xf]
    %v3673 = vld [vmem:[%s5 + $0x9c] sm:$0xf]
    %v3674 = vld [vmem:[%s5 + $0xa0] sm:$0xf]
    %v3675 = vld [vmem:[%s5 + $0xa4] sm:$0xf]
    %v3676 = vld [vmem:[%s5 + $0xa8] sm:$0xf]
    %v3677 = vld [vmem:[%s5 + $0xac] sm:$0xf]
    %v3678 = vld [vmem:[%s5 + $0xb0] sm:$0xf]
    %v3679 = vld [vmem:[%s5 + $0xb4] sm:$0xf]
    %v3680 = vld [vmem:[%s5 + $0xb8] sm:$0xf]
    %v3681 = vld [vmem:[%s5 + $0xbc] sm:$0xf]
    %v3682 = vld [vmem:[%s5 + $0xc0] sm:$0xf]
    %v3683 = vld [vmem:[%s5 + $0xc4] sm:$0xf]
    %v3684 = vld [vmem:[%s5 + $0xc8] sm:$0xf]
    %v3685 = vld [vmem:[%s5 + $0xcc] sm:$0xf]
    %v3686 = vld [vmem:[%s5 + $0xd0] sm:$0xf]
    %v3687 = vld [vmem:[%s5 + $0xd4] sm:$0xf]
    %v3688 = vld [vmem:[%s5 + $0xd8] sm:$0xf]
    %v3689 = vld [vmem:[%s5 + $0xdc] sm:$0xf]
    %v3690 = vld [vmem:[%s5 + $0xe0] sm:$0xf]
    %v3691 = vld [vmem:[%s5 + $0xe4] sm:$0xf]
    %v3692 = vld [vmem:[%s5 + $0xe8] sm:$0xf]
    %v3693 = vld [vmem:[%s5 + $0xec] sm:$0xf]
    %v3694 = vld [vmem:[%s5 + $0xf0] sm:$0xf]
    %v3695 = vld [vmem:[%s5 + $0xf4] sm:$0xf]
    %v3696 = vld [vmem:[%s5 + $0xf8] sm:$0xf]
    %v3697 = vld [vmem:[%s5 + $0xfc] sm:$0xf]
    %v3698 = vld [vmem:[%s5 + $0x100] sm:$0xf]
    %v3699 = vld [vmem:[%s5 + $0x104] sm:$0xf]
    %v3700 = vld [vmem:[%s5 + $0x108] sm:$0xf]
    %v3701 = vld [vmem:[%s5 + $0x10c] sm:$0xf]
    %v3702 = vld [vmem:[%s5 + $0x110] sm:$0xf]
    %v3703 = vld [vmem:[%s5 + $0x114] sm:$0xf]
    %v3704 = vld [vmem:[%s5 + $0x118] sm:$0xf]
    %v3705 = vld [vmem:[%s5 + $0x11c] sm:$0xf]
    %v3706 = vld [vmem:[%s5 + $0x120] sm:$0xf]
    %v3707 = vld [vmem:[%s5 + $0x124] sm:$0xf]
    %v3708 = vld [vmem:[%s5 + $0x128] sm:$0xf]
    %v3709 = vld [vmem:[%s5 + $0x12c] sm:$0xf]
    %v3710 = vld [vmem:[%s5 + $0x130] sm:$0xf]
    %v3711 = vld [vmem:[%s5 + $0x134] sm:$0xf]
    %v3712 = vld [vmem:[%s5 + $0x138] sm:$0xf]
    %v3713 = vld [vmem:[%s5 + $0x13c] sm:$0xf]
    %v3714 = vld [vmem:[%s5 + $0x140] sm:$0xf]
    %v3715 = vld [vmem:[%s5 + $0x144] sm:$0xf]
    %v3716 = vld [vmem:[%s5 + $0x148] sm:$0xf]
    %v3717 = vld [vmem:[%s5 + $0x14c] sm:$0xf]
    %v3718 = vld [vmem:[%s5 + $0x150] sm:$0xf]
    %v3719 = vld [vmem:[%s5 + $0x154] sm:$0xf]
    %v3720 = vld [vmem:[%s5 + $0x158] sm:$0xf]
    %v3721 = vld [vmem:[%s5 + $0x15c] sm:$0xf]
    %v3722 = vld [vmem:[%s5 + $0x160] sm:$0xf]
    %v3723 = vld [vmem:[%s5 + $0x164] sm:$0xf]
    %v3724 = vld [vmem:[%s5 + $0x168] sm:$0xf]
    %v3725 = vld [vmem:[%s5 + $0x16c] sm:$0xf]
    %v3726 = vld [vmem:[%s5 + $0x170] sm:$0xf]
    %v3727 = vld [vmem:[%s5 + $0x174] sm:$0xf]
    %v3728 = vld [vmem:[%s5 + $0x178] sm:$0xf]
    %v3729 = vld [vmem:[%s5 + $0x17c] sm:$0xf]
    %v3730 = vld [vmem:[%s5 + $0x180] sm:$0xf]
    %v3731 = vld [vmem:[%s5 + $0x184] sm:$0xf]
    %v3732 = vld [vmem:[%s5 + $0x188] sm:$0xf]
    %v3733 = vld [vmem:[%s5 + $0x18c] sm:$0xf]
    %v3734 = vld [vmem:[%s5 + $0x190] sm:$0xf]
    %v3735 = vld [vmem:[%s5 + $0x194] sm:$0xf]
    %v3736 = vld [vmem:[%s5 + $0x198] sm:$0xf]
    %v3737 = vld [vmem:[%s5 + $0x19c] sm:$0xf]
    %v3738 = vld [vmem:[%s5 + $0x1a0] sm:$0xf]
    %v3739 = vld [vmem:[%s5 + $0x1a4] sm:$0xf]
    %v3740 = vld [vmem:[%s5 + $0x1a8] sm:$0xf]
    %v3741 = vld [vmem:[%s5 + $0x1ac] sm:$0xf]
    %v3742 = vld [vmem:[%s5 + $0x1b0] sm:$0xf]
    %v3743 = vld [vmem:[%s5 + $0x1b4] sm:$0xf]
    %v3744 = vld [vmem:[%s5 + $0x1b8] sm:$0xf]
    %v3745 = vld [vmem:[%s5 + $0x1bc] sm:$0xf]
    %v3746 = vld [vmem:[%s5 + $0x1c0] sm:$0xf]
    %v3747 = vld [vmem:[%s5 + $0x1c4] sm:$0xf]
    %v3748 = vld [vmem:[%s5 + $0x1c8] sm:$0xf]
    %v3749 = vld [vmem:[%s5 + $0x1cc] sm:$0xf]
    %v3750 = vld [vmem:[%s5 + $0x1d0] sm:$0xf]
    %v3751 = vld [vmem:[%s5 + $0x1d4] sm:$0xf]
    %v3752 = vld [vmem:[%s5 + $0x1d8] sm:$0xf]
    %v3753 = vld [vmem:[%s5 + $0x1dc] sm:$0xf]
    %v3754 = vld [vmem:[%s5 + $0x1e0] sm:$0xf]
    %v3755 = vld [vmem:[%s5 + $0x1e4] sm:$0xf]
    %v3756 = vld [vmem:[%s5 + $0x1e8] sm:$0xf]
    %v3757 = vld [vmem:[%s5 + $0x1ec] sm:$0xf]
    %v3758 = vld [vmem:[%s5 + $0x1f0] sm:$0xf]
    %v3759 = vld [vmem:[%s5 + $0x1f4] sm:$0xf]
    %v3760 = vld [vmem:[%s5 + $0x1f8] sm:$0xf]
    %v3761 = vld [vmem:[%s5 + $0x1fc] sm:$0xf]
    %v3762 = vld [vmem:[%s5 + $0x200] sm:$0xf]
    %v3763 = vld [vmem:[%s5 + $0x204] sm:$0xf]
    %v3764 = vld [vmem:[%s5 + $0x208] sm:$0xf]
    %v3765 = vld [vmem:[%s5 + $0x20c] sm:$0xf]
    %v3766 = vld [vmem:[%s5 + $0x210] sm:$0xf]
    %v3767 = vld [vmem:[%s5 + $0x214] sm:$0xf]
    %v3768 = vld [vmem:[%s5 + $0x218] sm:$0xf]
    %v3769 = vld [vmem:[%s5 + $0x21c] sm:$0xf]
    %v3770 = vld [vmem:[%s5 + $0x220] sm:$0xf]
    %v3771 = vld [vmem:[%s5 + $0x224] sm:$0xf]
    %v3772 = vld [vmem:[%s5 + $0x228] sm:$0xf]
    %v3773 = vld [vmem:[%s5 + $0x22c] sm:$0xf]
    %v3774 = vld [vmem:[%s5 + $0x230] sm:$0xf]
    %v3775 = vld [vmem:[%s5 + $0x234] sm:$0xf]
    %v3776 = vld [vmem:[%s5 + $0x238] sm:$0xf]
    %v3777 = vld [vmem:[%s5 + $0x23c] sm:$0xf]
    %v3778 = vld [vmem:[%s5 + $0x240] sm:$0xf]
    %v3779 = vld [vmem:[%s5 + $0x244] sm:$0xf]
    %v3780 = vld [vmem:[%s5 + $0x248] sm:$0xf]
    %v3781 = vld [vmem:[%s5 + $0x24c] sm:$0xf]
    %v3782 = vld [vmem:[%s5 + $0x250] sm:$0xf]
    %v3783 = vld [vmem:[%s5 + $0x254] sm:$0xf]
    %v3784 = vld [vmem:[%s5 + $0x258] sm:$0xf]
    %v3785 = vld [vmem:[%s5 + $0x25c] sm:$0xf]
    %v3786 = vld [vmem:[%s5 + $0x260] sm:$0xf]
    %v3787 = vld [vmem:[%s5 + $0x264] sm:$0xf]
    %v3788 = vld [vmem:[%s5 + $0x268] sm:$0xf]
    %v3789 = vld [vmem:[%s5 + $0x26c] sm:$0xf]
    %v3790 = vld [vmem:[%s5 + $0x270] sm:$0xf]
    %v3791 = vld [vmem:[%s5 + $0x274] sm:$0xf]
    %v3792 = vld [vmem:[%s5 + $0x278] sm:$0xf]
    %v3793 = vld [vmem:[%s5 + $0x27c] sm:$0xf]
    %v3794 = vld [vmem:[%s5 + $0x280] sm:$0xf]
    %v3795 = vld [vmem:[%s5 + $0x284] sm:$0xf]
    %v3796 = vld [vmem:[%s5 + $0x288] sm:$0xf]
    %v3797 = vld [vmem:[%s5 + $0x28c] sm:$0xf]
    %v3798 = vld [vmem:[%s5 + $0x290] sm:$0xf]
    %v3799 = vld [vmem:[%s5 + $0x294] sm:$0xf]
    %v3800 = vld [vmem:[%s5 + $0x298] sm:$0xf]
    %v3801 = vld [vmem:[%s5 + $0x29c] sm:$0xf]
    %v3802 = vld [vmem:[%s5 + $0x2a0] sm:$0xf]
    %v3803 = vld [vmem:[%s5 + $0x2a4] sm:$0xf]
    %v3804 = vld [vmem:[%s5 + $0x2a8] sm:$0xf]
    %v3805 = vld [vmem:[%s5 + $0x2ac] sm:$0xf]
    %v3806 = vld [vmem:[%s5 + $0x2b0] sm:$0xf]
    %v3807 = vld [vmem:[%s5 + $0x2b4] sm:$0xf]
    %v3808 = vld [vmem:[%s5 + $0x2b8] sm:$0xf]
    %v3809 = vld [vmem:[%s5 + $0x2bc] sm:$0xf]
    %v3810 = vld [vmem:[%s5 + $0x2c0] sm:$0xf]
    %v3811 = vld [vmem:[%s5 + $0x2c4] sm:$0xf]
    %v3812 = vld [vmem:[%s5 + $0x2c8] sm:$0xf]
    %v3813 = vld [vmem:[%s5 + $0x2cc] sm:$0xf]
    %v3814 = vld [vmem:[%s5 + $0x2d0] sm:$0xf]
    %v3815 = vld [vmem:[%s5 + $0x2d4] sm:$0xf]
    %v3816 = vld [vmem:[%s5 + $0x2d8] sm:$0xf]
    %v3817 = vld [vmem:[%s5 + $0x2dc] sm:$0xf]
    %v3818 = vld [vmem:[%s5 + $0x2e0] sm:$0xf]
    %v3819 = vld [vmem:[%s5 + $0x2e4] sm:$0xf]
    %v3820 = vld [vmem:[%s5 + $0x2e8] sm:$0xf]
    %v3821 = vld [vmem:[%s5 + $0x2ec] sm:$0xf]
    %v3822 = vld [vmem:[%s5 + $0x2f0] sm:$0xf]
    %v3823 = vld [vmem:[%s5 + $0x2f4] sm:$0xf]
    %v3824 = vld [vmem:[%s5 + $0x2f8] sm:$0xf]
    %v3825 = vld [vmem:[%s5 + $0x2fc] sm:$0xf]
    %v3826 = vld [vmem:[%s5 + $0x300] sm:$0xf]
    %v3827 = vld [vmem:[%s5 + $0x304] sm:$0xf]
    %v3828 = vld [vmem:[%s5 + $0x308] sm:$0xf]
    %v3829 = vld [vmem:[%s5 + $0x30c] sm:$0xf]
    %v3830 = vld [vmem:[%s5 + $0x310] sm:$0xf]
    %v3831 = vld [vmem:[%s5 + $0x314] sm:$0xf]
    %v3832 = vld [vmem:[%s5 + $0x318] sm:$0xf]
    %v3833 = vld [vmem:[%s5 + $0x31c] sm:$0xf]
    %v3834 = vld [vmem:[%s5 + $0x320] sm:$0xf]
    %v3835 = vld [vmem:[%s5 + $0x324] sm:$0xf]
    %v3836 = vld [vmem:[%s5 + $0x328] sm:$0xf]
    %v3837 = vld [vmem:[%s5 + $0x32c] sm:$0xf]
    %v3838 = vld [vmem:[%s5 + $0x330] sm:$0xf]
    %v3839 = vld [vmem:[%s5 + $0x334] sm:$0xf]
    %v3840 = vld [vmem:[%s5 + $0x338] sm:$0xf]
    %v3841 = vld [vmem:[%s5 + $0x33c] sm:$0xf]
    %v3842 = vld [vmem:[%s5 + $0x340] sm:$0xf]
    %v3843 = vld [vmem:[%s5 + $0x344] sm:$0xf]
    %v3844 = vld [vmem:[%s5 + $0x348] sm:$0xf]
    %v3845 = vld [vmem:[%s5 + $0x34c] sm:$0xf]
    %v3846 = vld [vmem:[%s5 + $0x350] sm:$0xf]
    %v3847 = vld [vmem:[%s5 + $0x354] sm:$0xf]
    %v3848 = vld [vmem:[%s5 + $0x358] sm:$0xf]
    %v3849 = vld [vmem:[%s5 + $0x35c] sm:$0xf]
    %v3850 = vld [vmem:[%s5 + $0x360] sm:$0xf]
    %v3851 = vld [vmem:[%s5 + $0x364] sm:$0xf]
    %v3852 = vld [vmem:[%s5 + $0x368] sm:$0xf]
    %v3853 = vld [vmem:[%s5 + $0x36c] sm:$0xf]
    %v3854 = vld [vmem:[%s5 + $0x370] sm:$0xf]
    %v3855 = vld [vmem:[%s5 + $0x374] sm:$0xf]
    %v3856 = vld [vmem:[%s5 + $0x378] sm:$0xf]
    %v3857 = vld [vmem:[%s5 + $0x37c] sm:$0xf]
    %v3858 = vld [vmem:[%s5 + $0x380] sm:$0xf]
    %v3859 = vld [vmem:[%s5 + $0x384] sm:$0xf]
    %v3860 = vld [vmem:[%s5 + $0x388] sm:$0xf]
    %v3861 = vld [vmem:[%s5 + $0x38c] sm:$0xf]
    %v3862 = vld [vmem:[%s5 + $0x390] sm:$0xf]
    %v3863 = vld [vmem:[%s5 + $0x394] sm:$0xf]
    %v3864 = vld [vmem:[%s5 + $0x398] sm:$0xf]
    %v3865 = vld [vmem:[%s5 + $0x39c] sm:$0xf]
    %v3866 = vld [vmem:[%s5 + $0x3a0] sm:$0xf]
    %v3867 = vld [vmem:[%s5 + $0x3a4] sm:$0xf]
    %v3868 = vld [vmem:[%s5 + $0x3a8] sm:$0xf]
    %v3869 = vld [vmem:[%s5 + $0x3ac] sm:$0xf]
    %v3870 = vld [vmem:[%s5 + $0x3b0] sm:$0xf]
    %v3871 = vld [vmem:[%s5 + $0x3b4] sm:$0xf]
    %v3872 = vld [vmem:[%s5 + $0x3b8] sm:$0xf]
    %v3873 = vld [vmem:[%s5 + $0x3bc] sm:$0xf]
    %v3874 = vld [vmem:[%s5 + $0x3c0] sm:$0xf]
    %v3875 = vld [vmem:[%s5 + $0x3c4] sm:$0xf]
    %v3876 = vld [vmem:[%s5 + $0x3c8] sm:$0xf]
    %v3877 = vld [vmem:[%s5 + $0x3cc] sm:$0xf]
    %v3878 = vld [vmem:[%s5 + $0x3d0] sm:$0xf]
    %v3879 = vld [vmem:[%s5 + $0x3d4] sm:$0xf]
    %v3880 = vld [vmem:[%s5 + $0x3d8] sm:$0xf]
    %v3881 = vld [vmem:[%s5 + $0x3dc] sm:$0xf]
    %v3882 = vld [vmem:[%s5 + $0x3e0] sm:$0xf]
    %v3883 = vld [vmem:[%s5 + $0x3e4] sm:$0xf]
    %v3884 = vld [vmem:[%s5 + $0x3e8] sm:$0xf]
    %v3885 = vld [vmem:[%s5 + $0x3ec] sm:$0xf]
    %v3886 = vld [vmem:[%s5 + $0x3f0] sm:$0xf]
    %v3887 = vld [vmem:[%s5 + $0x3f4] sm:$0xf]
    %v3888 = vld [vmem:[%s5 + $0x3f8] sm:$0xf]
    %v3889 = vld [vmem:[%s5 + $0x3fc] sm:$0xf]
    %v3890 = vld [vmem:[%s6] sm:$0x1]
    %v3892 = vlaneseq
    %v3893 = vshrl.u32 %v3892, 7
    %v3894 = vsub.s32 0, %v3893
    %v3895 = vrot.slane %v3890, %v3894
    %v4153 = vunpack.c.l.b16 %v3634
    %v4154 = vunpack.c.l.b16 %v3635
    %v4155 = vunpack.c.l.b16 %v3636
    %v4156 = vunpack.c.l.b16 %v3637
    %v4157 = vunpack.c.l.b16 %v3638
    %v4158 = vunpack.c.l.b16 %v3639
    %v4159 = vunpack.c.l.b16 %v3640
    %v4160 = vunpack.c.l.b16 %v3641
    %v4161 = vunpack.c.l.b16 %v3642
    %v4162 = vunpack.c.l.b16 %v3643
    %v4163 = vunpack.c.l.b16 %v3644
    %v4164 = vunpack.c.l.b16 %v3645
    %v4165 = vunpack.c.l.b16 %v3646
    %v4166 = vunpack.c.l.b16 %v3647
    %v4167 = vunpack.c.l.b16 %v3648
    %v4168 = vunpack.c.l.b16 %v3649
    %v4169 = vunpack.c.l.b16 %v3650
    %v4170 = vunpack.c.l.b16 %v3651
    %v4171 = vunpack.c.l.b16 %v3652
    %v4172 = vunpack.c.l.b16 %v3653
    %v4173 = vunpack.c.l.b16 %v3654
    %v4174 = vunpack.c.l.b16 %v3655
    %v4175 = vunpack.c.l.b16 %v3656
    %v4176 = vunpack.c.l.b16 %v3657
    %v4177 = vunpack.c.l.b16 %v3658
    %v4178 = vunpack.c.l.b16 %v3659
    %v4179 = vunpack.c.l.b16 %v3660
    %v4180 = vunpack.c.l.b16 %v3661
    %v4181 = vunpack.c.l.b16 %v3662
    %v4182 = vunpack.c.l.b16 %v3663
    %v4183 = vunpack.c.l.b16 %v3664
    %v4184 = vunpack.c.l.b16 %v3665
    %v4185 = vunpack.c.l.b16 %v3666
    %v4186 = vunpack.c.l.b16 %v3667
    %v4187 = vunpack.c.l.b16 %v3668
    %v4188 = vunpack.c.l.b16 %v3669
    %v4189 = vunpack.c.l.b16 %v3670
    %v4190 = vunpack.c.l.b16 %v3671
    %v4191 = vunpack.c.l.b16 %v3672
    %v4192 = vunpack.c.l.b16 %v3673
    %v4193 = vunpack.c.l.b16 %v3674
    %v4194 = vunpack.c.l.b16 %v3675
    %v4195 = vunpack.c.l.b16 %v3676
    %v4196 = vunpack.c.l.b16 %v3677
    %v4197 = vunpack.c.l.b16 %v3678
    %v4198 = vunpack.c.l.b16 %v3679
    %v4199 = vunpack.c.l.b16 %v3680
    %v4200 = vunpack.c.l.b16 %v3681
    %v4201 = vunpack.c.l.b16 %v3682
    %v4202 = vunpack.c.l.b16 %v3683
    %v4203 = vunpack.c.l.b16 %v3684
    %v4204 = vunpack.c.l.b16 %v3685
    %v4205 = vunpack.c.l.b16 %v3686
    %v4206 = vunpack.c.l.b16 %v3687
    %v4207 = vunpack.c.l.b16 %v3688
    %v4208 = vunpack.c.l.b16 %v3689
    %v4209 = vunpack.c.l.b16 %v3690
    %v4210 = vunpack.c.l.b16 %v3691
    %v4211 = vunpack.c.l.b16 %v3692
    %v4212 = vunpack.c.l.b16 %v3693
    %v4213 = vunpack.c.l.b16 %v3694
    %v4214 = vunpack.c.l.b16 %v3695
    %v4215 = vunpack.c.l.b16 %v3696
    %v4216 = vunpack.c.l.b16 %v3697
    %v4217 = vunpack.c.l.b16 %v3698
    %v4218 = vunpack.c.l.b16 %v3699
    %v4219 = vunpack.c.l.b16 %v3700
    %v4220 = vunpack.c.l.b16 %v3701
    %v4221 = vunpack.c.l.b16 %v3702
    %v4222 = vunpack.c.l.b16 %v3703
    %v4223 = vunpack.c.l.b16 %v3704
    %v4224 = vunpack.c.l.b16 %v3705
    %v4225 = vunpack.c.l.b16 %v3706
    %v4226 = vunpack.c.l.b16 %v3707
    %v4227 = vunpack.c.l.b16 %v3708
    %v4228 = vunpack.c.l.b16 %v3709
    %v4229 = vunpack.c.l.b16 %v3710
    %v4230 = vunpack.c.l.b16 %v3711
    %v4231 = vunpack.c.l.b16 %v3712
    %v4232 = vunpack.c.l.b16 %v3713
    %v4233 = vunpack.c.l.b16 %v3714
    %v4234 = vunpack.c.l.b16 %v3715
    %v4235 = vunpack.c.l.b16 %v3716
    %v4236 = vunpack.c.l.b16 %v3717
    %v4237 = vunpack.c.l.b16 %v3718
    %v4238 = vunpack.c.l.b16 %v3719
    %v4239 = vunpack.c.l.b16 %v3720
    %v4240 = vunpack.c.l.b16 %v3721
    %v4241 = vunpack.c.l.b16 %v3722
    %v4242 = vunpack.c.l.b16 %v3723
    %v4243 = vunpack.c.l.b16 %v3724
    %v4244 = vunpack.c.l.b16 %v3725
    %v4245 = vunpack.c.l.b16 %v3726
    %v4246 = vunpack.c.l.b16 %v3727
    %v4247 = vunpack.c.l.b16 %v3728
    %v4248 = vunpack.c.l.b16 %v3729
    %v4249 = vunpack.c.l.b16 %v3730
    %v4250 = vunpack.c.l.b16 %v3731
    %v4251 = vunpack.c.l.b16 %v3732
    %v4252 = vunpack.c.l.b16 %v3733
    %v4253 = vunpack.c.l.b16 %v3734
    %v4254 = vunpack.c.l.b16 %v3735
    %v4255 = vunpack.c.l.b16 %v3736
    %v4256 = vunpack.c.l.b16 %v3737
    %v4257 = vunpack.c.l.b16 %v3738
    %v4258 = vunpack.c.l.b16 %v3739
    %v4259 = vunpack.c.l.b16 %v3740
    %v4260 = vunpack.c.l.b16 %v3741
    %v4261 = vunpack.c.l.b16 %v3742
    %v4262 = vunpack.c.l.b16 %v3743
    %v4263 = vunpack.c.l.b16 %v3744
    %v4264 = vunpack.c.l.b16 %v3745
    %v4265 = vunpack.c.l.b16 %v3746
    %v4266 = vunpack.c.l.b16 %v3747
    %v4267 = vunpack.c.l.b16 %v3748
    %v4268 = vunpack.c.l.b16 %v3749
    %v4269 = vunpack.c.l.b16 %v3750
    %v4270 = vunpack.c.l.b16 %v3751
    %v4271 = vunpack.c.l.b16 %v3752
    %v4272 = vunpack.c.l.b16 %v3753
    %v4273 = vunpack.c.l.b16 %v3754
    %v4274 = vunpack.c.l.b16 %v3755
    %v4275 = vunpack.c.l.b16 %v3756
    %v4276 = vunpack.c.l.b16 %v3757
    %v4277 = vunpack.c.l.b16 %v3758
    %v4278 = vunpack.c.l.b16 %v3759
    %v4279 = vunpack.c.l.b16 %v3760
    %v4280 = vunpack.c.l.b16 %v3761
    %v4281 = vunpack.c.l.b16 %v3762
    %v4282 = vunpack.c.l.b16 %v3763
    %v4283 = vunpack.c.l.b16 %v3764
    %v4284 = vunpack.c.l.b16 %v3765
    %v4285 = vunpack.c.l.b16 %v3766
    %v4286 = vunpack.c.l.b16 %v3767
    %v4287 = vunpack.c.l.b16 %v3768
    %v4288 = vunpack.c.l.b16 %v3769
    %v4289 = vunpack.c.l.b16 %v3770
    %v4290 = vunpack.c.l.b16 %v3771
    %v4291 = vunpack.c.l.b16 %v3772
    %v4292 = vunpack.c.l.b16 %v3773
    %v4293 = vunpack.c.l.b16 %v3774
    %v4294 = vunpack.c.l.b16 %v3775
    %v4295 = vunpack.c.l.b16 %v3776
    %v4296 = vunpack.c.l.b16 %v3777
    %v4297 = vunpack.c.l.b16 %v3778
    %v4298 = vunpack.c.l.b16 %v3779
    %v4299 = vunpack.c.l.b16 %v3780
    %v4300 = vunpack.c.l.b16 %v3781
    %v4301 = vunpack.c.l.b16 %v3782
    %v4302 = vunpack.c.l.b16 %v3783
    %v4303 = vunpack.c.l.b16 %v3784
    %v4304 = vunpack.c.l.b16 %v3785
    %v4305 = vunpack.c.l.b16 %v3786
    %v4306 = vunpack.c.l.b16 %v3787
    %v4307 = vunpack.c.l.b16 %v3788
    %v4308 = vunpack.c.l.b16 %v3789
    %v4309 = vunpack.c.l.b16 %v3790
    %v4310 = vunpack.c.l.b16 %v3791
    %v4311 = vunpack.c.l.b16 %v3792
    %v4312 = vunpack.c.l.b16 %v3793
    %v4313 = vunpack.c.l.b16 %v3794
    %v4314 = vunpack.c.l.b16 %v3795
    %v4315 = vunpack.c.l.b16 %v3796
    %v4316 = vunpack.c.l.b16 %v3797
    %v4317 = vunpack.c.l.b16 %v3798
    %v4318 = vunpack.c.l.b16 %v3799
    %v4319 = vunpack.c.l.b16 %v3800
    %v4320 = vunpack.c.l.b16 %v3801
    %v4321 = vunpack.c.l.b16 %v3802
    %v4322 = vunpack.c.l.b16 %v3803
    %v4323 = vunpack.c.l.b16 %v3804
    %v4324 = vunpack.c.l.b16 %v3805
    %v4325 = vunpack.c.l.b16 %v3806
    %v4326 = vunpack.c.l.b16 %v3807
    %v4327 = vunpack.c.l.b16 %v3808
    %v4328 = vunpack.c.l.b16 %v3809
    %v4329 = vunpack.c.l.b16 %v3810
    %v4330 = vunpack.c.l.b16 %v3811
    %v4331 = vunpack.c.l.b16 %v3812
    %v4332 = vunpack.c.l.b16 %v3813
    %v4333 = vunpack.c.l.b16 %v3814
    %v4334 = vunpack.c.l.b16 %v3815
    %v4335 = vunpack.c.l.b16 %v3816
    %v4336 = vunpack.c.l.b16 %v3817
    %v4337 = vunpack.c.l.b16 %v3818
    %v4338 = vunpack.c.l.b16 %v3819
    %v4339 = vunpack.c.l.b16 %v3820
    %v4340 = vunpack.c.l.b16 %v3821
    %v4341 = vunpack.c.l.b16 %v3822
    %v4342 = vunpack.c.l.b16 %v3823
    %v4343 = vunpack.c.l.b16 %v3824
    %v4344 = vunpack.c.l.b16 %v3825
    %v4345 = vunpack.c.l.b16 %v3826
    %v4346 = vunpack.c.l.b16 %v3827
    %v4347 = vunpack.c.l.b16 %v3828
    %v4348 = vunpack.c.l.b16 %v3829
    %v4349 = vunpack.c.l.b16 %v3830
    %v4350 = vunpack.c.l.b16 %v3831
    %v4351 = vunpack.c.l.b16 %v3832
    %v4352 = vunpack.c.l.b16 %v3833
    %v4353 = vunpack.c.l.b16 %v3834
    %v4354 = vunpack.c.l.b16 %v3835
    %v4355 = vunpack.c.l.b16 %v3836
    %v4356 = vunpack.c.l.b16 %v3837
    %v4357 = vunpack.c.l.b16 %v3838
    %v4358 = vunpack.c.l.b16 %v3839
    %v4359 = vunpack.c.l.b16 %v3840
    %v4360 = vunpack.c.l.b16 %v3841
    %v4361 = vunpack.c.l.b16 %v3842
    %v4362 = vunpack.c.l.b16 %v3843
    %v4363 = vunpack.c.l.b16 %v3844
    %v4364 = vunpack.c.l.b16 %v3845
    %v4365 = vunpack.c.l.b16 %v3846
    %v4366 = vunpack.c.l.b16 %v3847
    %v4367 = vunpack.c.l.b16 %v3848
    %v4368 = vunpack.c.l.b16 %v3849
    %v4369 = vunpack.c.l.b16 %v3850
    %v4370 = vunpack.c.l.b16 %v3851
    %v4371 = vunpack.c.l.b16 %v3852
    %v4372 = vunpack.c.l.b16 %v3853
    %v4373 = vunpack.c.l.b16 %v3854
    %v4374 = vunpack.c.l.b16 %v3855
    %v4375 = vunpack.c.l.b16 %v3856
    %v4376 = vunpack.c.l.b16 %v3857
    %v4377 = vunpack.c.l.b16 %v3858
    %v4378 = vunpack.c.l.b16 %v3859
    %v4379 = vunpack.c.l.b16 %v3860
    %v4380 = vunpack.c.l.b16 %v3861
    %v4381 = vunpack.c.l.b16 %v3862
    %v4382 = vunpack.c.l.b16 %v3863
    %v4383 = vunpack.c.l.b16 %v3864
    %v4384 = vunpack.c.l.b16 %v3865
    %v4385 = vunpack.c.l.b16 %v3866
    %v4386 = vunpack.c.l.b16 %v3867
    %v4387 = vunpack.c.l.b16 %v3868
    %v4388 = vunpack.c.l.b16 %v3869
    %v4389 = vunpack.c.l.b16 %v3870
    %v4390 = vunpack.c.l.b16 %v3871
    %v4391 = vunpack.c.l.b16 %v3872
    %v4392 = vunpack.c.l.b16 %v3873
    %v4393 = vunpack.c.l.b16 %v3874
    %v4394 = vunpack.c.l.b16 %v3875
    %v4395 = vunpack.c.l.b16 %v3876
    %v4396 = vunpack.c.l.b16 %v3877
    %v4397 = vunpack.c.l.b16 %v3878
    %v4398 = vunpack.c.l.b16 %v3879
    %v4399 = vunpack.c.l.b16 %v3880
    %v4400 = vunpack.c.l.b16 %v3881
    %v4401 = vunpack.c.l.b16 %v3882
    %v4402 = vunpack.c.l.b16 %v3883
    %v4403 = vunpack.c.l.b16 %v3884
    %v4404 = vunpack.c.l.b16 %v3885
    %v4405 = vunpack.c.l.b16 %v3886
    %v4406 = vunpack.c.l.b16 %v3887
    %v4407 = vunpack.c.l.b16 %v3888
    %v4408 = vunpack.c.l.b16 %v3889
    %v4409 = vpack.c.b16 %v4154, %v4153
    %v4410 = vpack.c.b16 %v4156, %v4155
    %v4411 = vpack.c.b16 %v4158, %v4157
    %v4412 = vpack.c.b16 %v4160, %v4159
    %v4413 = vpack.c.b16 %v4162, %v4161
    %v4414 = vpack.c.b16 %v4164, %v4163
    %v4415 = vpack.c.b16 %v4166, %v4165
    %v4416 = vpack.c.b16 %v4168, %v4167
    %v4417 = vpack.c.b16 %v4170, %v4169
    %v4418 = vpack.c.b16 %v4172, %v4171
    %v4419 = vpack.c.b16 %v4174, %v4173
    %v4420 = vpack.c.b16 %v4176, %v4175
    %v4421 = vpack.c.b16 %v4178, %v4177
    %v4422 = vpack.c.b16 %v4180, %v4179
    %v4423 = vpack.c.b16 %v4182, %v4181
    %v4424 = vpack.c.b16 %v4184, %v4183
    %v4425 = vpack.c.b16 %v4186, %v4185
    %v4426 = vpack.c.b16 %v4188, %v4187
    %v4427 = vpack.c.b16 %v4190, %v4189
    %v4428 = vpack.c.b16 %v4192, %v4191
    %v4429 = vpack.c.b16 %v4194, %v4193
    %v4430 = vpack.c.b16 %v4196, %v4195
    %v4431 = vpack.c.b16 %v4198, %v4197
    %v4432 = vpack.c.b16 %v4200, %v4199
    %v4433 = vpack.c.b16 %v4202, %v4201
    %v4434 = vpack.c.b16 %v4204, %v4203
    %v4435 = vpack.c.b16 %v4206, %v4205
    %v4436 = vpack.c.b16 %v4208, %v4207
    %v4437 = vpack.c.b16 %v4210, %v4209
    %v4438 = vpack.c.b16 %v4212, %v4211
    %v4439 = vpack.c.b16 %v4214, %v4213
    %v4440 = vpack.c.b16 %v4216, %v4215
    %v4441 = vpack.c.b16 %v4218, %v4217
    %v4442 = vpack.c.b16 %v4220, %v4219
    %v4443 = vpack.c.b16 %v4222, %v4221
    %v4444 = vpack.c.b16 %v4224, %v4223
    %v4445 = vpack.c.b16 %v4226, %v4225
    %v4446 = vpack.c.b16 %v4228, %v4227
    %v4447 = vpack.c.b16 %v4230, %v4229
    %v4448 = vpack.c.b16 %v4232, %v4231
    %v4449 = vpack.c.b16 %v4234, %v4233
    %v4450 = vpack.c.b16 %v4236, %v4235
    %v4451 = vpack.c.b16 %v4238, %v4237
    %v4452 = vpack.c.b16 %v4240, %v4239
    %v4453 = vpack.c.b16 %v4242, %v4241
    %v4454 = vpack.c.b16 %v4244, %v4243
    %v4455 = vpack.c.b16 %v4246, %v4245
    %v4456 = vpack.c.b16 %v4248, %v4247
    %v4457 = vpack.c.b16 %v4250, %v4249
    %v4458 = vpack.c.b16 %v4252, %v4251
    %v4459 = vpack.c.b16 %v4254, %v4253
    %v4460 = vpack.c.b16 %v4256, %v4255
    %v4461 = vpack.c.b16 %v4258, %v4257
    %v4462 = vpack.c.b16 %v4260, %v4259
    %v4463 = vpack.c.b16 %v4262, %v4261
    %v4464 = vpack.c.b16 %v4264, %v4263
    %v4465 = vpack.c.b16 %v4266, %v4265
    %v4466 = vpack.c.b16 %v4268, %v4267
    %v4467 = vpack.c.b16 %v4270, %v4269
    %v4468 = vpack.c.b16 %v4272, %v4271
    %v4469 = vpack.c.b16 %v4274, %v4273
    %v4470 = vpack.c.b16 %v4276, %v4275
    %v4471 = vpack.c.b16 %v4278, %v4277
    %v4472 = vpack.c.b16 %v4280, %v4279
    %v4473 = vpack.c.b16 %v4282, %v4281
    %v4474 = vpack.c.b16 %v4284, %v4283
    %v4475 = vpack.c.b16 %v4286, %v4285
    %v4476 = vpack.c.b16 %v4288, %v4287
    %v4477 = vpack.c.b16 %v4290, %v4289
    %v4478 = vpack.c.b16 %v4292, %v4291
    %v4479 = vpack.c.b16 %v4294, %v4293
    %v4480 = vpack.c.b16 %v4296, %v4295
    %v4481 = vpack.c.b16 %v4298, %v4297
    %v4482 = vpack.c.b16 %v4300, %v4299
    %v4483 = vpack.c.b16 %v4302, %v4301
    %v4484 = vpack.c.b16 %v4304, %v4303
    %v4485 = vpack.c.b16 %v4306, %v4305
    %v4486 = vpack.c.b16 %v4308, %v4307
    %v4487 = vpack.c.b16 %v4310, %v4309
    %v4488 = vpack.c.b16 %v4312, %v4311
    %v4489 = vpack.c.b16 %v4314, %v4313
    %v4490 = vpack.c.b16 %v4316, %v4315
    %v4491 = vpack.c.b16 %v4318, %v4317
    %v4492 = vpack.c.b16 %v4320, %v4319
    %v4493 = vpack.c.b16 %v4322, %v4321
    %v4494 = vpack.c.b16 %v4324, %v4323
    %v4495 = vpack.c.b16 %v4326, %v4325
    %v4496 = vpack.c.b16 %v4328, %v4327
    %v4497 = vpack.c.b16 %v4330, %v4329
    %v4498 = vpack.c.b16 %v4332, %v4331
    %v4499 = vpack.c.b16 %v4334, %v4333
    %v4500 = vpack.c.b16 %v4336, %v4335
    %v4501 = vpack.c.b16 %v4338, %v4337
    %v4502 = vpack.c.b16 %v4340, %v4339
    %v4503 = vpack.c.b16 %v4342, %v4341
    %v4504 = vpack.c.b16 %v4344, %v4343
    %v4505 = vpack.c.b16 %v4346, %v4345
    %v4506 = vpack.c.b16 %v4348, %v4347
    %v4507 = vpack.c.b16 %v4350, %v4349
    %v4508 = vpack.c.b16 %v4352, %v4351
    %v4509 = vpack.c.b16 %v4354, %v4353
    %v4510 = vpack.c.b16 %v4356, %v4355
    %v4511 = vpack.c.b16 %v4358, %v4357
    %v4512 = vpack.c.b16 %v4360, %v4359
    %v4513 = vpack.c.b16 %v4362, %v4361
    %v4514 = vpack.c.b16 %v4364, %v4363
    %v4515 = vpack.c.b16 %v4366, %v4365
    %v4516 = vpack.c.b16 %v4368, %v4367
    %v4517 = vpack.c.b16 %v4370, %v4369
    %v4518 = vpack.c.b16 %v4372, %v4371
    %v4519 = vpack.c.b16 %v4374, %v4373
    %v4520 = vpack.c.b16 %v4376, %v4375
    %v4521 = vpack.c.b16 %v4378, %v4377
    %v4522 = vpack.c.b16 %v4380, %v4379
    %v4523 = vpack.c.b16 %v4382, %v4381
    %v4524 = vpack.c.b16 %v4384, %v4383
    %v4525 = vpack.c.b16 %v4386, %v4385
    %v4526 = vpack.c.b16 %v4388, %v4387
    %v4527 = vpack.c.b16 %v4390, %v4389
    %v4528 = vpack.c.b16 %v4392, %v4391
    %v4529 = vpack.c.b16 %v4394, %v4393
    %v4530 = vpack.c.b16 %v4396, %v4395
    %v4531 = vpack.c.b16 %v4398, %v4397
    %v4532 = vpack.c.b16 %v4400, %v4399
    %v4533 = vpack.c.b16 %v4402, %v4401
    %v4534 = vpack.c.b16 %v4404, %v4403
    %v4535 = vpack.c.b16 %v4406, %v4405
    %v4536 = vpack.c.b16 %v4408, %v4407
    %4665 = vmatprep.subr.bf16.mxu0 0
    %4666 = vmatpush1.bf16.msra.mxu0 %v4416
    %4667 = vmatprep.subr.bf16.mxu0 0
    %4668 = vmatpush1.bf16.msra.mxu0 %v4415
    %4669 = vmatprep.subr.bf16.mxu0 0
    %4670 = vmatpush1.bf16.msra.mxu0 %v4414
    %4671 = vmatprep.subr.bf16.mxu0 0
    %4672 = vmatpush1.bf16.msra.mxu0 %v4413
    %4673 = vmatprep.subr.bf16.mxu0 0
    %4674 = vmatpush1.bf16.msra.mxu0 %v4412
    %4675 = vmatprep.subr.bf16.mxu0 0
    %4676 = vmatpush1.bf16.msra.mxu0 %v4411
    %4677 = vmatprep.subr.bf16.mxu0 0
    %4678 = vmatpush1.bf16.msra.mxu0 %v4410
    %4679 = vmatprep.subr.bf16.mxu0 0
    %4680 = vmatpush1.bf16.msra.mxu0 %v4409
    %4681 = vmatprep.subr.bf16.mxu0 0
    %4682 = vmatpush2.bf16.msra.mxu0 %v4424
    %4683 = vmatprep.subr.bf16.mxu0 0
    %4684 = vmatpush2.bf16.msra.mxu0 %v4423
    %4685 = vmatprep.subr.bf16.mxu0 0
    %4686 = vmatpush2.bf16.msra.mxu0 %v4422
    %4687 = vmatprep.subr.bf16.mxu0 0
    %4688 = vmatpush2.bf16.msra.mxu0 %v4421
    %4689 = vmatprep.subr.bf16.mxu0 0
    %4690 = vmatpush2.bf16.msra.mxu0 %v4420
    %4691 = vmatprep.subr.bf16.mxu0 0
    %4692 = vmatpush2.bf16.msra.mxu0 %v4419
    %4693 = vmatprep.subr.bf16.mxu0 0
    %4694 = vmatpush2.bf16.msra.mxu0 %v4418
    %4695 = vmatprep.subr.bf16.mxu0 0
    %4696 = vmatpush2.bf16.msra.mxu0 %v4417
    %4697 = vmatprep.mubr.bf16.mxu0 %v3619
    %4698 = vmatmul.mubr.bf16.gmra.mxu0 %v3618
    %v4699 = vpop.f32.mrf.mxu0
    %v4700 = vadd.f32 %v3895, %v4699
    %v4701 = vpop.f32.mrf.mxu0
    %v4702 = vpop.f32.mrf.mxu0
    %v4703 = vpop.f32.mrf.mxu0
    %4704 = vdwg.mxu0
    %4705 = vmatprep.subr.bf16.mxu0 0
    %4706 = vmatpush1.bf16.msra.mxu0 %v4432
    %4707 = vmatprep.subr.bf16.mxu0 0
    %4708 = vmatpush1.bf16.msra.mxu0 %v4431
    %4709 = vmatprep.subr.bf16.mxu0 0
    %4710 = vmatpush1.bf16.msra.mxu0 %v4430
    %4711 = vmatprep.subr.bf16.mxu0 0
    %4712 = vmatpush1.bf16.msra.mxu0 %v4429
    %4713 = vmatprep.subr.bf16.mxu0 0
    %4714 = vmatpush1.bf16.msra.mxu0 %v4428
    %4715 = vmatprep.subr.bf16.mxu0 0
    %4716 = vmatpush1.bf16.msra.mxu0 %v4427
    %4717 = vmatprep.subr.bf16.mxu0 0
    %4718 = vmatpush1.bf16.msra.mxu0 %v4426
    %4719 = vmatprep.subr.bf16.mxu0 0
    %4720 = vmatpush1.bf16.msra.mxu0 %v4425
    %4721 = vmatprep.subr.bf16.mxu0 0
    %4722 = vmatpush2.bf16.msra.mxu0 %v4440
    %4723 = vmatprep.subr.bf16.mxu0 0
    %4724 = vmatpush2.bf16.msra.mxu0 %v4439
    %4725 = vmatprep.subr.bf16.mxu0 0
    %4726 = vmatpush2.bf16.msra.mxu0 %v4438
    %4727 = vmatprep.subr.bf16.mxu0 0
    %4728 = vmatpush2.bf16.msra.mxu0 %v4437
    %4729 = vmatprep.subr.bf16.mxu0 0
    %4730 = vmatpush2.bf16.msra.mxu0 %v4436
    %4731 = vmatprep.subr.bf16.mxu0 0
    %4732 = vmatpush2.bf16.msra.mxu0 %v4435
    %4733 = vmatprep.subr.bf16.mxu0 0
    %4734 = vmatpush2.bf16.msra.mxu0 %v4434
    %4735 = vmatprep.subr.bf16.mxu0 0
    %4736 = vmatpush2.bf16.msra.mxu0 %v4433
    %4737 = vmatprep.mubr.bf16.mxu0 %v3621
    %4738 = vmatmul.mubr.bf16.gmra.mxu0 %v3620
    %v4739 = vpop.f32.mrf.mxu0
    %v4740 = vadd.f32 %v4700, %v4739
    %v4741 = vpop.f32.mrf.mxu0
    %v4742 = vpop.f32.mrf.mxu0
    %v4743 = vpop.f32.mrf.mxu0
    %4744 = vdwg.mxu0
    %4745 = vmatprep.subr.bf16.mxu0 0
    %4746 = vmatpush1.bf16.msra.mxu0 %v4448
    %4747 = vmatprep.subr.bf16.mxu0 0
    %4748 = vmatpush1.bf16.msra.mxu0 %v4447
    %4749 = vmatprep.subr.bf16.mxu0 0
    %4750 = vmatpush1.bf16.msra.mxu0 %v4446
    %4751 = vmatprep.subr.bf16.mxu0 0
    %4752 = vmatpush1.bf16.msra.mxu0 %v4445
    %4753 = vmatprep.subr.bf16.mxu0 0
    %4754 = vmatpush1.bf16.msra.mxu0 %v4444
    %4755 = vmatprep.subr.bf16.mxu0 0
    %4756 = vmatpush1.bf16.msra.mxu0 %v4443
    %4757 = vmatprep.subr.bf16.mxu0 0
    %4758 = vmatpush1.bf16.msra.mxu0 %v4442
    %4759 = vmatprep.subr.bf16.mxu0 0
    %4760 = vmatpush1.bf16.msra.mxu0 %v4441
    %4761 = vmatprep.subr.bf16.mxu0 0
    %4762 = vmatpush2.bf16.msra.mxu0 %v4456
    %4763 = vmatprep.subr.bf16.mxu0 0
    %4764 = vmatpush2.bf16.msra.mxu0 %v4455
    %4765 = vmatprep.subr.bf16.mxu0 0
    %4766 = vmatpush2.bf16.msra.mxu0 %v4454
    %4767 = vmatprep.subr.bf16.mxu0 0
    %4768 = vmatpush2.bf16.msra.mxu0 %v4453
    %4769 = vmatprep.subr.bf16.mxu0 0
    %4770 = vmatpush2.bf16.msra.mxu0 %v4452
    %4771 = vmatprep.subr.bf16.mxu0 0
    %4772 = vmatpush2.bf16.msra.mxu0 %v4451
    %4773 = vmatprep.subr.bf16.mxu0 0
    %4774 = vmatpush2.bf16.msra.mxu0 %v4450
    %4775 = vmatprep.subr.bf16.mxu0 0
    %4776 = vmatpush2.bf16.msra.mxu0 %v4449
    %4777 = vmatprep.mubr.bf16.mxu0 %v3623
    %4778 = vmatmul.mubr.bf16.gmra.mxu0 %v3622
    %v4779 = vpop.f32.mrf.mxu0
    %v4780 = vadd.f32 %v4740, %v4779
    %v4781 = vpop.f32.mrf.mxu0
    %v4782 = vpop.f32.mrf.mxu0
    %v4783 = vpop.f32.mrf.mxu0
    %4784 = vdwg.mxu0
    %4785 = vmatprep.subr.bf16.mxu0 0
    %4786 = vmatpush1.bf16.msra.mxu0 %v4464
    %4787 = vmatprep.subr.bf16.mxu0 0
    %4788 = vmatpush1.bf16.msra.mxu0 %v4463
    %4789 = vmatprep.subr.bf16.mxu0 0
    %4790 = vmatpush1.bf16.msra.mxu0 %v4462
    %4791 = vmatprep.subr.bf16.mxu0 0
    %4792 = vmatpush1.bf16.msra.mxu0 %v4461
    %4793 = vmatprep.subr.bf16.mxu0 0
    %4794 = vmatpush1.bf16.msra.mxu0 %v4460
    %4795 = vmatprep.subr.bf16.mxu0 0
    %4796 = vmatpush1.bf16.msra.mxu0 %v4459
    %4797 = vmatprep.subr.bf16.mxu0 0
    %4798 = vmatpush1.bf16.msra.mxu0 %v4458
    %4799 = vmatprep.subr.bf16.mxu0 0
    %4800 = vmatpush1.bf16.msra.mxu0 %v4457
    %4801 = vmatprep.subr.bf16.mxu0 0
    %4802 = vmatpush2.bf16.msra.mxu0 %v4472
    %4803 = vmatprep.subr.bf16.mxu0 0
    %4804 = vmatpush2.bf16.msra.mxu0 %v4471
    %4805 = vmatprep.subr.bf16.mxu0 0
    %4806 = vmatpush2.bf16.msra.mxu0 %v4470
    %4807 = vmatprep.subr.bf16.mxu0 0
    %4808 = vmatpush2.bf16.msra.mxu0 %v4469
    %4809 = vmatprep.subr.bf16.mxu0 0
    %4810 = vmatpush2.bf16.msra.mxu0 %v4468
    %4811 = vmatprep.subr.bf16.mxu0 0
    %4812 = vmatpush2.bf16.msra.mxu0 %v4467
    %4813 = vmatprep.subr.bf16.mxu0 0
    %4814 = vmatpush2.bf16.msra.mxu0 %v4466
    %4815 = vmatprep.subr.bf16.mxu0 0
    %4816 = vmatpush2.bf16.msra.mxu0 %v4465
    %4817 = vmatprep.mubr.bf16.mxu0 %v3625
    %4818 = vmatmul.mubr.bf16.gmra.mxu0 %v3624
    %v4819 = vpop.f32.mrf.mxu0
    %v4820 = vadd.f32 %v4780, %v4819
    %v4821 = vpop.f32.mrf.mxu0
    %v4822 = vpop.f32.mrf.mxu0
    %v4823 = vpop.f32.mrf.mxu0
    %4824 = vdwg.mxu0
    %4825 = vmatprep.subr.bf16.mxu0 0
    %4826 = vmatpush1.bf16.msra.mxu0 %v4480
    %4827 = vmatprep.subr.bf16.mxu0 0
    %4828 = vmatpush1.bf16.msra.mxu0 %v4479
    %4829 = vmatprep.subr.bf16.mxu0 0
    %4830 = vmatpush1.bf16.msra.mxu0 %v4478
    %4831 = vmatprep.subr.bf16.mxu0 0
    %4832 = vmatpush1.bf16.msra.mxu0 %v4477
    %4833 = vmatprep.subr.bf16.mxu0 0
    %4834 = vmatpush1.bf16.msra.mxu0 %v4476
    %4835 = vmatprep.subr.bf16.mxu0 0
    %4836 = vmatpush1.bf16.msra.mxu0 %v4475
    %4837 = vmatprep.subr.bf16.mxu0 0
    %4838 = vmatpush1.bf16.msra.mxu0 %v4474
    %4839 = vmatprep.subr.bf16.mxu0 0
    %4840 = vmatpush1.bf16.msra.mxu0 %v4473
    %4841 = vmatprep.subr.bf16.mxu0 0
    %4842 = vmatpush2.bf16.msra.mxu0 %v4488
    %4843 = vmatprep.subr.bf16.mxu0 0
    %4844 = vmatpush2.bf16.msra.mxu0 %v4487
    %4845 = vmatprep.subr.bf16.mxu0 0
    %4846 = vmatpush2.bf16.msra.mxu0 %v4486
    %4847 = vmatprep.subr.bf16.mxu0 0
    %4848 = vmatpush2.bf16.msra.mxu0 %v4485
    %4849 = vmatprep.subr.bf16.mxu0 0
    %4850 = vmatpush2.bf16.msra.mxu0 %v4484
    %4851 = vmatprep.subr.bf16.mxu0 0
    %4852 = vmatpush2.bf16.msra.mxu0 %v4483
    %4853 = vmatprep.subr.bf16.mxu0 0
    %4854 = vmatpush2.bf16.msra.mxu0 %v4482
    %4855 = vmatprep.subr.bf16.mxu0 0
    %4856 = vmatpush2.bf16.msra.mxu0 %v4481
    %4857 = vmatprep.mubr.bf16.mxu0 %v3627
    %4858 = vmatmul.mubr.bf16.gmra.mxu0 %v3626
    %v4859 = vpop.f32.mrf.mxu0
    %v4860 = vadd.f32 %v4820, %v4859
    %v4861 = vpop.f32.mrf.mxu0
    %v4862 = vpop.f32.mrf.mxu0
    %v4863 = vpop.f32.mrf.mxu0
    %4864 = vdwg.mxu0
    %4865 = vmatprep.subr.bf16.mxu0 0
    %4866 = vmatpush1.bf16.msra.mxu0 %v4496
    %4867 = vmatprep.subr.bf16.mxu0 0
    %4868 = vmatpush1.bf16.msra.mxu0 %v4495
    %4869 = vmatprep.subr.bf16.mxu0 0
    %4870 = vmatpush1.bf16.msra.mxu0 %v4494
    %4871 = vmatprep.subr.bf16.mxu0 0
    %4872 = vmatpush1.bf16.msra.mxu0 %v4493
    %4873 = vmatprep.subr.bf16.mxu0 0
    %4874 = vmatpush1.bf16.msra.mxu0 %v4492
    %4875 = vmatprep.subr.bf16.mxu0 0
    %4876 = vmatpush1.bf16.msra.mxu0 %v4491
    %4877 = vmatprep.subr.bf16.mxu0 0
    %4878 = vmatpush1.bf16.msra.mxu0 %v4490
    %4879 = vmatprep.subr.bf16.mxu0 0
    %4880 = vmatpush1.bf16.msra.mxu0 %v4489
    %4881 = vmatprep.subr.bf16.mxu0 0
    %4882 = vmatpush2.bf16.msra.mxu0 %v4504
    %4883 = vmatprep.subr.bf16.mxu0 0
    %4884 = vmatpush2.bf16.msra.mxu0 %v4503
    %4885 = vmatprep.subr.bf16.mxu0 0
    %4886 = vmatpush2.bf16.msra.mxu0 %v4502
    %4887 = vmatprep.subr.bf16.mxu0 0
    %4888 = vmatpush2.bf16.msra.mxu0 %v4501
    %4889 = vmatprep.subr.bf16.mxu0 0
    %4890 = vmatpush2.bf16.msra.mxu0 %v4500
    %4891 = vmatprep.subr.bf16.mxu0 0
    %4892 = vmatpush2.bf16.msra.mxu0 %v4499
    %4893 = vmatprep.subr.bf16.mxu0 0
    %4894 = vmatpush2.bf16.msra.mxu0 %v4498
    %4895 = vmatprep.subr.bf16.mxu0 0
    %4896 = vmatpush2.bf16.msra.mxu0 %v4497
    %4897 = vmatprep.mubr.bf16.mxu0 %v3629
    %4898 = vmatmul.mubr.bf16.gmra.mxu0 %v3628
    %v4899 = vpop.f32.mrf.mxu0
    %v4900 = vadd.f32 %v4860, %v4899
    %v4901 = vpop.f32.mrf.mxu0
    %v4902 = vpop.f32.mrf.mxu0
    %v4903 = vpop.f32.mrf.mxu0
    %4904 = vdwg.mxu0
    %4905 = vmatprep.subr.bf16.mxu0 0
    %4906 = vmatpush1.bf16.msra.mxu0 %v4512
    %4907 = vmatprep.subr.bf16.mxu0 0
    %4908 = vmatpush1.bf16.msra.mxu0 %v4511
    %4909 = vmatprep.subr.bf16.mxu0 0
    %4910 = vmatpush1.bf16.msra.mxu0 %v4510
    %4911 = vmatprep.subr.bf16.mxu0 0
    %4912 = vmatpush1.bf16.msra.mxu0 %v4509
    %4913 = vmatprep.subr.bf16.mxu0 0
    %4914 = vmatpush1.bf16.msra.mxu0 %v4508
    %4915 = vmatprep.subr.bf16.mxu0 0
    %4916 = vmatpush1.bf16.msra.mxu0 %v4507
    %4917 = vmatprep.subr.bf16.mxu0 0
    %4918 = vmatpush1.bf16.msra.mxu0 %v4506
    %4919 = vmatprep.subr.bf16.mxu0 0
    %4920 = vmatpush1.bf16.msra.mxu0 %v4505
    %4921 = vmatprep.subr.bf16.mxu0 0
    %4922 = vmatpush2.bf16.msra.mxu0 %v4520
    %4923 = vmatprep.subr.bf16.mxu0 0
    %4924 = vmatpush2.bf16.msra.mxu0 %v4519
    %4925 = vmatprep.subr.bf16.mxu0 0
    %4926 = vmatpush2.bf16.msra.mxu0 %v4518
    %4927 = vmatprep.subr.bf16.mxu0 0
    %4928 = vmatpush2.bf16.msra.mxu0 %v4517
    %4929 = vmatprep.subr.bf16.mxu0 0
    %4930 = vmatpush2.bf16.msra.mxu0 %v4516
    %4931 = vmatprep.subr.bf16.mxu0 0
    %4932 = vmatpush2.bf16.msra.mxu0 %v4515
    %4933 = vmatprep.subr.bf16.mxu0 0
    %4934 = vmatpush2.bf16.msra.mxu0 %v4514
    %4935 = vmatprep.subr.bf16.mxu0 0
    %4936 = vmatpush2.bf16.msra.mxu0 %v4513
    %4937 = vmatprep.mubr.bf16.mxu0 %v3631
    %4938 = vmatmul.mubr.bf16.gmra.mxu0 %v3630
    %v4939 = vpop.f32.mrf.mxu0
    %v4940 = vadd.f32 %v4900, %v4939
    %v4941 = vpop.f32.mrf.mxu0
    %v4942 = vpop.f32.mrf.mxu0
    %v4943 = vpop.f32.mrf.mxu0
    %4944 = vdwg.mxu0
    %4945 = vmatprep.subr.bf16.mxu0 0
    %4946 = vmatpush1.bf16.msra.mxu0 %v4528
    %4947 = vmatprep.subr.bf16.mxu0 0
    %4948 = vmatpush1.bf16.msra.mxu0 %v4527
    %4949 = vmatprep.subr.bf16.mxu0 0
    %4950 = vmatpush1.bf16.msra.mxu0 %v4526
    %4951 = vmatprep.subr.bf16.mxu0 0
    %4952 = vmatpush1.bf16.msra.mxu0 %v4525
    %4953 = vmatprep.subr.bf16.mxu0 0
    %4954 = vmatpush1.bf16.msra.mxu0 %v4524
    %4955 = vmatprep.subr.bf16.mxu0 0
    %4956 = vmatpush1.bf16.msra.mxu0 %v4523
    %4957 = vmatprep.subr.bf16.mxu0 0
    %4958 = vmatpush1.bf16.msra.mxu0 %v4522
    %4959 = vmatprep.subr.bf16.mxu0 0
    %4960 = vmatpush1.bf16.msra.mxu0 %v4521
    %4961 = vmatprep.subr.bf16.mxu0 0
    %4962 = vmatpush2.bf16.msra.mxu0 %v4536
    %4963 = vmatprep.subr.bf16.mxu0 0
    %4964 = vmatpush2.bf16.msra.mxu0 %v4535
    %4965 = vmatprep.subr.bf16.mxu0 0
    %4966 = vmatpush2.bf16.msra.mxu0 %v4534
    %4967 = vmatprep.subr.bf16.mxu0 0
    %4968 = vmatpush2.bf16.msra.mxu0 %v4533
    %4969 = vmatprep.subr.bf16.mxu0 0
    %4970 = vmatpush2.bf16.msra.mxu0 %v4532
    %4971 = vmatprep.subr.bf16.mxu0 0
    %4972 = vmatpush2.bf16.msra.mxu0 %v4531
    %4973 = vmatprep.subr.bf16.mxu0 0
    %4974 = vmatpush2.bf16.msra.mxu0 %v4530
    %4975 = vmatprep.subr.bf16.mxu0 0
    %4976 = vmatpush2.bf16.msra.mxu0 %v4529
    %4977 = vmatprep.mubr.bf16.mxu0 %v3633
    %4978 = vmatmul.mubr.bf16.gmra.mxu0 %v3632
    %v4979 = vpop.f32.mrf.mxu0
    %v4980 = vadd.f32 %v4940, %v4979
    %v4981 = vpop.f32.mrf.mxu0
    %v4982 = vpop.f32.mrf.mxu0
    %v4983 = vpop.f32.mrf.mxu0
    %4984 = vdwg.mxu0
    %v4985 = vmax.f32 %v4980, 0.0
    %v4986 = vpack.c.bf16 %v4985, %v4985
    %v4987 = vld [vmem:[%s7] sm:$0xf]
    %v4988 = vld [vmem:[%s7 + $0x4] sm:$0xf]
    %v4989 = vld [vmem:[%s7 + $0x8] sm:$0xf]
    %v4990 = vld [vmem:[%s7 + $0xc] sm:$0xf]
    %v4991 = vld [vmem:[%s7 + $0x10] sm:$0xf]
    %v4992 = vld [vmem:[%s7 + $0x14] sm:$0xf]
    %v4993 = vld [vmem:[%s7 + $0x18] sm:$0xf]
    %v4994 = vld [vmem:[%s7 + $0x1c] sm:$0xf]
    %v4995 = vld [vmem:[%s7 + $0x20] sm:$0xf]
    %v4996 = vld [vmem:[%s7 + $0x24] sm:$0xf]
    %v4997 = vld [vmem:[%s7 + $0x28] sm:$0xf]
    %v4998 = vld [vmem:[%s7 + $0x2c] sm:$0xf]
    %v4999 = vld [vmem:[%s7 + $0x30] sm:$0xf]
    %v5000 = vld [vmem:[%s7 + $0x34] sm:$0xf]
    %v5001 = vld [vmem:[%s7 + $0x38] sm:$0xf]
    %v5002 = vld [vmem:[%s7 + $0x3c] sm:$0xf]
    %v5003 = vld [vmem:[%s8] sm:$0x1]
    %v5005 = vlaneseq
    %v5006 = vshrl.u32 %v5005, 7
    %v5007 = vsub.s32 0, %v5006
    %v5008 = vrot.slane %v5003, %v5007
    %v5026 = vunpack.c.l.b16 %v4987
    %v5027 = vunpack.c.l.b16 %v4988
    %v5028 = vunpack.c.l.b16 %v4989
    %v5029 = vunpack.c.l.b16 %v4990
    %v5030 = vunpack.c.l.b16 %v4991
    %v5031 = vunpack.c.l.b16 %v4992
    %v5032 = vunpack.c.l.b16 %v4993
    %v5033 = vunpack.c.l.b16 %v4994
    %v5034 = vunpack.c.l.b16 %v4995
    %v5035 = vunpack.c.l.b16 %v4996
    %v5036 = vunpack.c.l.b16 %v4997
    %v5037 = vunpack.c.l.b16 %v4998
    %v5038 = vunpack.c.l.b16 %v4999
    %v5039 = vunpack.c.l.b16 %v5000
    %v5040 = vunpack.c.l.b16 %v5001
    %v5041 = vunpack.c.l.b16 %v5002
    %v5042 = vpack.c.b16 %v5027, %v5026
    %v5043 = vpack.c.b16 %v5029, %v5028
    %v5044 = vpack.c.b16 %v5031, %v5030
    %v5045 = vpack.c.b16 %v5033, %v5032
    %v5046 = vpack.c.b16 %v5035, %v5034
    %v5047 = vpack.c.b16 %v5037, %v5036
    %v5048 = vpack.c.b16 %v5039, %v5038
    %v5049 = vpack.c.b16 %v5041, %v5040
    %5058 = vmatprep.subr.bf16.mxu0 0
    %5059 = vmatpush1.bf16.msra.mxu0 %v5049
    %5060 = vmatprep.subr.bf16.mxu0 0
    %5061 = vmatpush1.bf16.msra.mxu0 %v5048
    %5062 = vmatprep.subr.bf16.mxu0 0
    %5063 = vmatpush1.bf16.msra.mxu0 %v5047
    %5064 = vmatprep.subr.bf16.mxu0 0
    %5065 = vmatpush1.bf16.msra.mxu0 %v5046
    %5066 = vmatprep.subr.bf16.mxu0 0
    %5067 = vmatpush1.bf16.msra.mxu0 %v5045
    %5068 = vmatprep.subr.bf16.mxu0 0
    %5069 = vmatpush1.bf16.msra.mxu0 %v5044
    %5070 = vmatprep.subr.bf16.mxu0 0
    %5071 = vmatpush1.bf16.msra.mxu0 %v5043
    %5072 = vmatprep.subr.bf16.mxu0 0
    %5073 = vmatpush1.bf16.msra.mxu0 %v5042
    %5074 = vmatprep.subr.bf16.mxu0 0
    %5075 = vmatpush2.bf16.msra.mxu0 0
    %5076 = vmatprep.subr.bf16.mxu0 0
    %5077 = vmatpush2.bf16.msra.mxu0 0
    %5078 = vmatprep.subr.bf16.mxu0 0
    %5079 = vmatpush2.bf16.msra.mxu0 0
    %5080 = vmatprep.subr.bf16.mxu0 0
    %5081 = vmatpush2.bf16.msra.mxu0 0
    %5082 = vmatprep.subr.bf16.mxu0 0
    %5083 = vmatpush2.bf16.msra.mxu0 0
    %5084 = vmatprep.subr.bf16.mxu0 0
    %5085 = vmatpush2.bf16.msra.mxu0 0
    %5086 = vmatprep.subr.bf16.mxu0 0
    %5087 = vmatpush2.bf16.msra.mxu0 0
    %5088 = vmatprep.subr.bf16.mxu0 0
    %5089 = vmatpush2.bf16.msra.mxu0 0
    %5090 = vmatprep.mubr.bf16.mxu0 0
    %5091 = vmatmul.mubr.bf16.gmra.mxu0 %v4986
    %v5092 = vpop.f32.mrf.mxu0
    %v5093 = vadd.f32 %v5008, %v5092
    %v5094 = vpop.f32.mrf.mxu0
    %v5095 = vpop.f32.mrf.mxu0
    %v5096 = vpop.f32.mrf.mxu0
    %5097 = vdwg.mxu0
    %5098 = vst [vmem:[#allocation3] sm:$0x3] %v5093
    // Predicated region
    $region38: #{_lambda_.1} parent=1 // pred_check
      _
    $region39: #{_lambda_.1} parent=1 // pred_check_branch
      %5100 = sbr.rel (0) target = $region41
    $region40: #{_lambda_.1} parent=1 // pred_region
      %s5102 = ssub.s32 32, 32
      %5103 = vsyncadd [#allocation4], %s5102
      %s5105 = sshll.u32 [#allocation3], 4
      %s5106 = int_to_ptr.vmem [resolvable:$true] %s5105
      %5108 = dma.vmem_to_hbm [thread:$0]  %s5106, 32, %s9, [#allocation4]
    $region41: #{_lambda_.1} parent=1 // pred_fallthru
      _
    // Predicated region
    $region42: #{_lambda_.1} parent=1 // pred_check
      _
    $region43: #{_lambda_.1} parent=1 // pred_check_branch
      %5110 = sbr.rel (0) target = $region45
    $region44: #{_lambda_.1} parent=1 // pred_region
      %5111 = dma.done [#allocation4], 32
    $region45: #{_lambda_.1} parent=1 // pred_fallthru
      _
    %5112 = vsyncpa [#allocation4], 1

</llo_original>
